<compile_context>
chip_gen: v6e
topology: v6e:2x2x1
jax: 0.10.0
libtpu: 0.0.40
codegen_flags: <defaults>
</compile_context>

<pallas_src>
import functools

import jax
import jax.numpy as jnp
import numpy as np
from jax.experimental import pallas as pl
from jax.experimental.pallas import tpu as pltpu


# Module's conv stack: Conv2d(Cin,32,k=8,s=4) -> Conv2d(32,64,k=4,s=2) -> Conv2d(64,64,k=3,s=1)
_CONV_CFG = ((8, 4, 32), (4, 2, 64), (3, 1, 64))   # (kernel, stride, out_channels)
_HIDDEN = 256                                      # fc hidden size hard-coded in the module


def _out_size(s, k, st):
    return (s - k) // st + 1


# ----------------------------------------------------------------------------
# Fused head kernel: conv2 + conv3 + fc1 + fc2 + softmax for one batch block.
# Every layer is a single dense MXU matmul (batch in M).
# ----------------------------------------------------------------------------
def _head_kernel(h1_ref, w2_ref, b2_ref, w3_ref, b3_ref,
                 f1w_ref, f1b_ref, f2w_ref, f2b_ref, out_ref):
    f32, bf16 = jnp.float32, jnp.bfloat16

    # conv2: Kronecker-folded dense matmul  (Bt, 2048) @ (2048, 576)
    h2 = jnp.dot(h1_ref[...], w2_ref[...], preferred_element_type=f32) + b2_ref[...]
    h2 = jnp.maximum(h2, 0.0).astype(bf16)

    # conv3: (Bt, 576) @ (576, 64)
    h3 = jnp.dot(h2, w3_ref[...], preferred_element_type=f32) + b3_ref[...]
    h3 = jnp.maximum(h3, 0.0).astype(bf16)

    # fc1 (NCHW flatten folded into the weight): (Bt, 64) @ (64, 256)
    h4 = jnp.dot(h3, f1w_ref[...], preferred_element_type=f32) + f1b_ref[...]
    h4 = jnp.maximum(h4, 0.0)                      # keep f32 into fc2 (logit precision)

    # fc2 (f32, lane-padded to 128) + numerically-stable softmax.
    # Padded lanes carry bias -1e30 -> exp() == 0, so they do not affect probs.
    logits = jnp.dot(h4, f2w_ref[...], preferred_element_type=f32) + f2b_ref[...]
    m = jnp.max(logits, axis=-1, keepdims=True)
    e = jnp.exp(logits - m)
    out_ref[...] = e / jnp.sum(e, axis=-1, keepdims=True)   # exact reciprocal (sums to 1)


def _fused_head_call(h1, prep):
    """h1: (B, P1*C1) bf16 conv1 activations.  Returns (B, A_pad) f32 probabilities."""
    B, F = h1.shape
    a_pad = prep["f2w"].shape[1]

    bt = B if B <= 128 else 128
    pad_b = pl.cdiv(B, bt) * bt
    if pad_b != B:
        h1 = jnp.pad(h1, ((0, pad_b - B), (0, 0)))

    weights = (prep["w2big"], prep["b2big"], prep["w3big"], prep["b3big"],
               prep["f1w"], prep["f1b"], prep["f2w"], prep["f2b"])

    def full2d(a):
        return pl.BlockSpec(a.shape, lambda i: (0, 0))

    in_specs = [pl.BlockSpec((bt, F), lambda i: (i, 0))] + [full2d(a) for a in weights]

    flops = 2 * pad_b * (prep["w2big"].shape[0] * prep["w2big"].shape[1]
                         + prep["w3big"].shape[0] * prep["w3big"].shape[1]
                         + prep["f1w"].shape[0] * prep["f1w"].shape[1]
                         + prep["f2w"].shape[0] * prep["f2w"].shape[1])
    bytes_accessed = (h1.size * 2
                      + sum(int(a.size) * a.dtype.itemsize for a in weights)
                      + pad_b * a_pad * 4)

    out = pl.pallas_call(
        _head_kernel,
        out_shape=jax.ShapeDtypeStruct((pad_b, a_pad), jnp.float32),
        grid=(pad_b // bt,),
        in_specs=in_specs,
        out_specs=pl.BlockSpec((bt, a_pad), lambda i: (i, 0)),
        compiler_params=pltpu.CompilerParams(
            dimension_semantics=("parallel",)),     # only splits when >1 full batch block
        cost_estimate=pl.CostEstimate(flops=int(flops),
                                      transcendentals=int(pad_b * a_pad),
                                      bytes_accessed=int(bytes_accessed)),
    )(h1, *weights)
    return out[:B]


# ----------------------------------------------------------------------------
# conv1 as ONE real XLA convolution (bf16 in, f32 accumulation), bias + ReLU,
# output flattened to (B, P1*C1) in (position, channel) order.
# ----------------------------------------------------------------------------
def _conv1_xla(x_nchw, w1_hwio, b1, stride):
    y = jax.lax.conv_general_dilated(
        x_nchw.astype(jnp.bfloat16), w1_hwio,
        window_strides=(stride, stride), padding="VALID",
        dimension_numbers=("NCHW", "HWIO", "NHWC"),
        preferred_element_type=jnp.float32)
    y = jnp.maximum(y + b1.reshape(1, 1, 1, -1), 0.0)
    b, oh, ow, c = y.shape
    return y.reshape(b, oh * ow * c).astype(jnp.bfloat16)


# ----------------------------------------------------------------------------
# One-time parameter preprocessing (outside the hot path).
# ----------------------------------------------------------------------------
def _kron_fold(w_oihw, h_in, w_in, k, stride, oh, ow):
    """Fold conv gather + weight into one dense matrix:
       big[in_pos*Cin + cin, out_pos*Cout + cout] = W[cout, cin, ki, kj]
    where in_pos is the receptive-field position of (ki, kj) for out_pos."""
    wnp = np.asarray(w_oihw, np.float32)
    co, ci, kh, kw = wnp.shape
    big = np.zeros((h_in * w_in * ci, oh * ow * co), np.float32)
    for oy in range(oh):
        for ox in range(ow):
            po = oy * ow + ox
            for ki in range(kh):
                for kj in range(kw):
                    pi = (oy * stride + ki) * w_in + (ox * stride + kj)
                    big[pi * ci:(pi + 1) * ci, po * co:(po + 1) * co] = wnp[:, :, ki, kj].T
    return big


def prepare_params(params, input_size):
    cin, h, w = input_size
    bf16, f32 = jnp.bfloat16, jnp.float32
    (k1, s1, c1), (k2, s2, c2), (k3, s3, c3) = _CONV_CFG

    oh1, ow1 = _out_size(h, k1, s1), _out_size(w, k1, s1)
    oh2, ow2 = _out_size(oh1, k2, s2), _out_size(ow1, k2, s2)
    oh3, ow3 = _out_size(oh2, k3, s3), _out_size(ow2, k3, s3)
    p2, p3 = oh2 * ow2, oh3 * ow3

    w2big = _kron_fold(params["c2_w"], oh1, ow1, k2, s2, oh2, ow2)   # (P1*32, P2*64)
    w3big = _kron_fold(params["c3_w"], oh2, ow2, k3, s3, oh3, ow3)   # (P2*64, P3*64)

    # fc1: PyTorch NCHW flatten index is c*P3 + pos; our activation layout is pos*C3 + c.
    fc1_w = params["fc1_w"]                                          # (256, C3*P3)
    n_hidden = fc1_w.shape[0]
    assert fc1_w.shape[1] == c3 * p3, (fc1_w.shape, c3, p3)
    f1w = jnp.transpose(fc1_w.reshape(n_hidden, c3, p3), (2, 1, 0)).reshape(p3 * c3, n_hidden)

    # fc2: pad output lanes to a multiple of 128 (lane-dense store); pad bias to -1e30
    # so padded lanes vanish under softmax.
    n_actions = params["fc2_w"].shape[0]
    a_pad = ((n_actions + 127) // 128) * 128
    f2w = jnp.zeros((n_hidden, a_pad), f32).at[:, :n_actions].set(params["fc2_w"].T)
    f2b = jnp.full((1, a_pad), -1e30, f32).at[0, :n_actions].set(params["fc2_b"])

    return {
        "w1_hwio": jnp.transpose(params["c1_w"], (2, 3, 1, 0)).astype(bf16),  # (8,8,Cin,32)
        "b1": params["c1_b"].astype(f32),
        "w2big": jnp.asarray(w2big, bf16),
        "b2big": jnp.tile(params["c2_b"], p2).reshape(1, -1).astype(f32),
        "w3big": jnp.asarray(w3big, bf16),
        "b3big": jnp.tile(params["c3_b"], p3).reshape(1, -1).astype(f32),
        "f1w": f1w.astype(bf16),
        "f1b": params["fc1_b"].reshape(1, -1).astype(f32),
        "f2w": f2w,                                                  # f32 (tiny matmul)
        "f2b": f2b,
    }


# ----------------------------------------------------------------------------
# Parameter construction (PyTorch-style uniform(-1/sqrt(fan_in)), torch layouts).
# ----------------------------------------------------------------------------
def init_params(key, input_size, output_size):
    cin, h, w = input_size
    sx, sy = h, w
    for (k, s, _) in _CONV_CFG:
        sx, sy = _out_size(sx, k, s), _out_size(sy, k, s)
    flat = sx * sy * _CONV_CFG[-1][2]

    def u(k, shape, fan_in):
        bound = 1.0 / np.sqrt(fan_in)
        return jax.random.uniform(k, shape, jnp.float32, -bound, bound)

    ks = jax.random.split(key, 10)
    return {
        "c1_w": u(ks[0], (32, cin, 8, 8), cin * 8 * 8),
        "c1_b": u(ks[1], (32,), cin * 8 * 8),
        "c2_w": u(ks[2], (64, 32, 4, 4), 32 * 4 * 4),
        "c2_b": u(ks[3], (64,), 32 * 4 * 4),
        "c3_w": u(ks[4], (64, 64, 3, 3), 64 * 3 * 3),
        "c3_b": u(ks[5], (64,), 64 * 3 * 3),
        "fc1_w": u(ks[6], (_HIDDEN, flat), flat),         # torch Linear layout (out, in)
        "fc1_b": u(ks[7], (_HIDDEN,), flat),
        "fc2_w": u(ks[8], (output_size, _HIDDEN), _HIDDEN),
        "fc2_b": u(ks[9], (output_size,), _HIDDEN),
    }


# ----------------------------------------------------------------------------
# Forward pass.
# ----------------------------------------------------------------------------
@functools.partial(jax.jit, static_argnames="num_actions")
def convolutional_actor_forward(prep, x_nchw, *, num_actions):
    (k1, s1, _), _, _ = _CONV_CFG
    batch = x_nchw.shape[0]
    h1 = _conv1_xla(x_nchw, prep["w1_hwio"], prep["b1"], s1)   # (B, P1*32) bf16
    probs = _fused_head_call(h1, prep)[:, :num_actions]        # drop softmax pad lanes
    if batch == 1:                                             # mirrors x.squeeze(0)
        probs = jnp.squeeze(probs, axis=0)
    # TODO(synk): torch.distributions.Categorical has no Pallas equivalent;
    # we return the softmax probabilities that parameterize it.
    return probs


# Pure-JAX f32 reference replicating the PyTorch module (validation only).
def reference_forward(params, x_nchw):
    def conv(x, w, b, s):
        y = jax.lax.conv_general_dilated(
            x, w, (s, s), "VALID", dimension_numbers=("NCHW", "OIHW", "NCHW"))
        return jax.nn.relu(y + b.reshape(1, -1, 1, 1))
    x = conv(x_nchw, params["c1_w"], params["c1_b"], 4)
    x = conv(x, params["c2_w"], params["c2_b"], 2)
    x = conv(x, params["c3_w"], params["c3_b"], 1)
    x = x.reshape(x.shape[0], -1)
    x = jax.nn.relu(x @ params["fc1_w"].T + params["fc1_b"])
    logits = x @ params["fc2_w"].T + params["fc2_b"]
    return jax.nn.softmax(logits, axis=-1)


if __name__ == "__main__":
    # input_size=(4,36,36): conv stack yields 8x8 -> 3x3 -> 1x1 spatial, flat=64.
    input_size = (4, 36, 36)
    output_size = 6
    batch = 2

    key = jax.random.PRNGKey(0)
    pkey, xkey = jax.random.split(key)
    params = init_params(pkey, input_size, output_size)
    prep = prepare_params(params, input_size)          # one-time weight preprocessing
    x = jax.random.normal(xkey, (batch,) + input_size, dtype=jnp.float32)

    probs = convolutional_actor_forward(prep, x, num_actions=output_size)
    probs = jax.block_until_ready(probs)

    assert probs.shape == (batch, output_size), probs.shape
    p = np.asarray(probs)
    assert np.all(p >= 0.0)
    assert np.allclose(p.sum(axis=-1), 1.0, atol=1e-4)
    ref = np.asarray(reference_forward(params, x))     # bf16 MXU path vs f32 reference
    assert np.allclose(p, ref, atol=2.5e-2), float(np.abs(p - ref).max())
    print("KERNEL_OK")
</pallas_src>

<mosaic_0001>
module attributes {stable_mosaic.version = 11 : i64} {
  func.func @_head_kernel(%arg0: i32, %arg1: memref<2x2048xbf16, #tpu.memory_space<vmem>>, %arg2: memref<2048x576xbf16, #tpu.memory_space<vmem>>, %arg3: memref<1x576xf32, #tpu.memory_space<vmem>>, %arg4: memref<576x64xbf16, #tpu.memory_space<vmem>>, %arg5: memref<1x64xf32, #tpu.memory_space<vmem>>, %arg6: memref<64x256xbf16, #tpu.memory_space<vmem>>, %arg7: memref<1x256xf32, #tpu.memory_space<vmem>>, %arg8: memref<256x128xf32, #tpu.memory_space<vmem>>, %arg9: memref<1x128xf32, #tpu.memory_space<vmem>>, %arg10: memref<2x128xf32, #tpu.memory_space<vmem>>) attributes {dimension_semantics = [#tpu.dimension_semantics<parallel>], iteration_bounds = array<i64: 1>, scalar_prefetch = 0 : i64, scratch_operands = 0 : i64, tpu.core_type = #tpu.core_type<tc>, window_params = [{transform_indices = @transform_0, window_bounds = array<i64: 2, 2048>}, {pipeline_mode = #tpu.pipeline_mode<synchronous>, transform_indices = @transform_1, window_bounds = array<i64: 2048, 576>}, {pipeline_mode = #tpu.pipeline_mode<synchronous>, transform_indices = @transform_2, window_bounds = array<i64: 1, 576>}, {pipeline_mode = #tpu.pipeline_mode<synchronous>, transform_indices = @transform_3, window_bounds = array<i64: 576, 64>}, {pipeline_mode = #tpu.pipeline_mode<synchronous>, transform_indices = @transform_4, window_bounds = array<i64: 1, 64>}, {pipeline_mode = #tpu.pipeline_mode<synchronous>, transform_indices = @transform_5, window_bounds = array<i64: 64, 256>}, {pipeline_mode = #tpu.pipeline_mode<synchronous>, transform_indices = @transform_6, window_bounds = array<i64: 1, 256>}, {pipeline_mode = #tpu.pipeline_mode<synchronous>, transform_indices = @transform_7, window_bounds = array<i64: 256, 128>}, {pipeline_mode = #tpu.pipeline_mode<synchronous>, transform_indices = @transform_8, window_bounds = array<i64: 1, 128>}, {transform_indices = @transform_9, window_bounds = array<i64: 2, 128>}]} {
    %c0 = arith.constant 0 : index
    %c0_0 = arith.constant 0 : index
    %0 = vector.load %arg1[%c0, %c0_0] : memref<2x2048xbf16, #tpu.memory_space<vmem>>, vector<2x2048xbf16>
    %c0_1 = arith.constant 0 : index
    %c0_2 = arith.constant 0 : index
    %1 = vector.load %arg2[%c0_1, %c0_2] : memref<2048x576xbf16, #tpu.memory_space<vmem>>, vector<2048x576xbf16>
    %cst = arith.constant dense<0.000000e+00> : vector<2x576xf32>
    %2 = tpu.matmul %0, %1, %cst {dimension_numbers = #tpu.dot_dimension_numbers<[1], [0], [0], [1], [0, 0, 1, 1], [], []>} : vector<2x2048xbf16>, vector<2048x576xbf16>, vector<2x576xf32> -> vector<2x576xf32>
    %c0_3 = arith.constant 0 : index
    %c0_4 = arith.constant 0 : index
    %3 = vector.load %arg3[%c0_3, %c0_4] : memref<1x576xf32, #tpu.memory_space<vmem>>, vector<1x576xf32>
    %4 = vector.broadcast %3 : vector<1x576xf32> to vector<2x576xf32>
    %5 = arith.addf %2, %4 : vector<2x576xf32>
    %cst_5 = arith.constant 0.000000e+00 : f32
    %6 = vector.broadcast %cst_5 : f32 to vector<2x576xf32>
    %7 = arith.maximumf %5, %6 : vector<2x576xf32>
    %8 = arith.truncf %7 : vector<2x576xf32> to vector<2x576xbf16>
    %c0_6 = arith.constant 0 : index
    %c0_7 = arith.constant 0 : index
    %9 = vector.load %arg4[%c0_6, %c0_7] : memref<576x64xbf16, #tpu.memory_space<vmem>>, vector<576x64xbf16>
    %cst_8 = arith.constant dense<0.000000e+00> : vector<2x64xf32>
    %10 = tpu.matmul %8, %9, %cst_8 {dimension_numbers = #tpu.dot_dimension_numbers<[1], [0], [0], [1], [0, 0, 1, 1], [], []>} : vector<2x576xbf16>, vector<576x64xbf16>, vector<2x64xf32> -> vector<2x64xf32>
    %c0_9 = arith.constant 0 : index
    %c0_10 = arith.constant 0 : index
    %11 = vector.load %arg5[%c0_9, %c0_10] : memref<1x64xf32, #tpu.memory_space<vmem>>, vector<1x64xf32>
    %12 = vector.broadcast %11 : vector<1x64xf32> to vector<2x64xf32>
    %13 = arith.addf %10, %12 : vector<2x64xf32>
    %cst_11 = arith.constant 0.000000e+00 : f32
    %14 = vector.broadcast %cst_11 : f32 to vector<2x64xf32>
    %15 = arith.maximumf %13, %14 : vector<2x64xf32>
    %16 = arith.truncf %15 : vector<2x64xf32> to vector<2x64xbf16>
    %c0_12 = arith.constant 0 : index
    %c0_13 = arith.constant 0 : index
    %17 = vector.load %arg6[%c0_12, %c0_13] : memref<64x256xbf16, #tpu.memory_space<vmem>>, vector<64x256xbf16>
    %cst_14 = arith.constant dense<0.000000e+00> : vector<2x256xf32>
    %18 = tpu.matmul %16, %17, %cst_14 {dimension_numbers = #tpu.dot_dimension_numbers<[1], [0], [0], [1], [0, 0, 1, 1], [], []>} : vector<2x64xbf16>, vector<64x256xbf16>, vector<2x256xf32> -> vector<2x256xf32>
    %c0_15 = arith.constant 0 : index
    %c0_16 = arith.constant 0 : index
    %19 = vector.load %arg7[%c0_15, %c0_16] : memref<1x256xf32, #tpu.memory_space<vmem>>, vector<1x256xf32>
    %20 = vector.broadcast %19 : vector<1x256xf32> to vector<2x256xf32>
    %21 = arith.addf %18, %20 : vector<2x256xf32>
    %cst_17 = arith.constant 0.000000e+00 : f32
    %22 = vector.broadcast %cst_17 : f32 to vector<2x256xf32>
    %23 = arith.maximumf %21, %22 : vector<2x256xf32>
    %c0_18 = arith.constant 0 : index
    %c0_19 = arith.constant 0 : index
    %24 = vector.load %arg8[%c0_18, %c0_19] : memref<256x128xf32, #tpu.memory_space<vmem>>, vector<256x128xf32>
    %cst_20 = arith.constant dense<0.000000e+00> : vector<2x128xf32>
    %25 = tpu.matmul %23, %24, %cst_20 {dimension_numbers = #tpu.dot_dimension_numbers<[1], [0], [0], [1], [0, 0, 1, 1], [], []>} : vector<2x256xf32>, vector<256x128xf32>, vector<2x128xf32> -> vector<2x128xf32>
    %c0_21 = arith.constant 0 : index
    %c0_22 = arith.constant 0 : index
    %26 = vector.load %arg9[%c0_21, %c0_22] : memref<1x128xf32, #tpu.memory_space<vmem>>, vector<1x128xf32>
    %27 = vector.broadcast %26 : vector<1x128xf32> to vector<2x128xf32>
    %28 = arith.addf %25, %27 : vector<2x128xf32>
    %cst_23 = arith.constant dense<0xFF800000> : vector<2xf32>
    %29 = vector.multi_reduction <maximumf>, %28, %cst_23 [1] : vector<2x128xf32> to vector<2xf32>
    %30 = vector.shape_cast %29 : vector<2xf32> to vector<2x1xf32>
    %31 = vector.broadcast %30 : vector<2x1xf32> to vector<2x128xf32>
    %32 = arith.subf %28, %31 : vector<2x128xf32>
    %33 = math.exp %32 : vector<2x128xf32>
    %cst_24 = arith.constant dense<0.000000e+00> : vector<2xf32>
    %34 = vector.multi_reduction <add>, %33, %cst_24 [1] : vector<2x128xf32> to vector<2xf32>
    %35 = vector.shape_cast %34 : vector<2xf32> to vector<2x1xf32>
    %36 = vector.broadcast %35 : vector<2x1xf32> to vector<2x128xf32>
    %37 = arith.divf %33, %36 : vector<2x128xf32>
    %c0_25 = arith.constant 0 : index
    %c0_26 = arith.constant 0 : index
    %38 = vector.load %arg10[%c0_25, %c0_26] : memref<2x128xf32, #tpu.memory_space<vmem>>, vector<2x128xf32>
    tpu.vector_store %arg10[%c0_25, %c0_26], %37 {strides = array<i32>} : memref<2x128xf32, #tpu.memory_space<vmem>>, vector<2x128xf32>,
    return
  }
  func.func @transform_0(%arg0: i32) -> (i32, i32) {
    %c0_i32 = arith.constant 0 : i32
    %c0_i32_0 = arith.constant 0 : i32
    return %arg0, %c0_i32 : i32, i32
  }
  func.func @transform_1(%arg0: i32) -> (i32, i32) {
    %c0_i32 = arith.constant 0 : i32
    %c0_i32_0 = arith.constant 0 : i32
    %c0_i32_1 = arith.constant 0 : i32
    return %c0_i32, %c0_i32_0 : i32, i32
  }
  func.func @transform_2(%arg0: i32) -> (i32, i32) {
    %c0_i32 = arith.constant 0 : i32
    %c0_i32_0 = arith.constant 0 : i32
    %c0_i32_1 = arith.constant 0 : i32
    return %c0_i32, %c0_i32_0 : i32, i32
  }
  func.func @transform_3(%arg0: i32) -> (i32, i32) {
    %c0_i32 = arith.constant 0 : i32
    %c0_i32_0 = arith.constant 0 : i32
    %c0_i32_1 = arith.constant 0 : i32
    return %c0_i32, %c0_i32_0 : i32, i32
  }
  func.func @transform_4(%arg0: i32) -> (i32, i32) {
    %c0_i32 = arith.constant 0 : i32
    %c0_i32_0 = arith.constant 0 : i32
    %c0_i32_1 = arith.constant 0 : i32
    return %c0_i32, %c0_i32_0 : i32, i32
  }
  func.func @transform_5(%arg0: i32) -> (i32, i32) {
    %c0_i32 = arith.constant 0 : i32
    %c0_i32_0 = arith.constant 0 : i32
    %c0_i32_1 = arith.constant 0 : i32
    return %c0_i32, %c0_i32_0 : i32, i32
  }
  func.func @transform_6(%arg0: i32) -> (i32, i32) {
    %c0_i32 = arith.constant 0 : i32
    %c0_i32_0 = arith.constant 0 : i32
    %c0_i32_1 = arith.constant 0 : i32
    return %c0_i32, %c0_i32_0 : i32, i32
  }
  func.func @transform_7(%arg0: i32) -> (i32, i32) {
    %c0_i32 = arith.constant 0 : i32
    %c0_i32_0 = arith.constant 0 : i32
    %c0_i32_1 = arith.constant 0 : i32
    return %c0_i32, %c0_i32_0 : i32, i32
  }
  func.func @transform_8(%arg0: i32) -> (i32, i32) {
    %c0_i32 = arith.constant 0 : i32
    %c0_i32_0 = arith.constant 0 : i32
    %c0_i32_1 = arith.constant 0 : i32
    return %c0_i32, %c0_i32_0 : i32, i32
  }
  func.func @transform_9(%arg0: i32) -> (i32, i32) {
    %c0_i32 = arith.constant 0 : i32
    %c0_i32_0 = arith.constant 0 : i32
    return %arg0, %c0_i32 : i32, i32
  }
}

</mosaic_0001>

<llo_original>
// kernel: convolutional_actor_forward.1
$region0: #{convolutional_actor_forward.1}
  #allocation0 [shape = 'u32[]', space=smem, size = 0x4, offset = 0x4, fixed_abs, tag = 'smem constant byte address 0x4 - core index']
  #allocation1 [shape = 'u32[144,128]{1,0:T(1,128)}', space=vmem, size = 0x12000, scoped, tag = 'internal scratch']
  %s0 = inlined_call_operand.vmem [shape: bf16[2,2048], index: 0, kind: input, shape index: {}]
  %s1 = inlined_call_operand.vmem [shape: bf16[2048,576], index: 1, kind: input, shape index: {}]
  %s2 = inlined_call_operand.vmem [shape: f32[1,576], index: 2, kind: input, shape index: {}]
  %s3 = inlined_call_operand.vmem [shape: bf16[576,64], index: 3, kind: input, shape index: {}]
  %s4 = inlined_call_operand.vmem [shape: f32[1,64], index: 4, kind: input, shape index: {}]
  %s5 = inlined_call_operand.vmem [shape: bf16[64,256], index: 5, kind: input, shape index: {}]
  %s6 = inlined_call_operand.vmem [shape: f32[1,256], index: 6, kind: input, shape index: {}]
  %s7 = inlined_call_operand.vmem [shape: f32[256,128], index: 7, kind: input, shape index: {}]
  %s8 = inlined_call_operand.vmem [shape: f32[1,128], index: 8, kind: input, shape index: {}]
  %s9 = inlined_call_operand.hbm [shape: f32[2,128], index: 9, kind: output, shape index: {}]
  %s10 = sld [smem:[#allocation0]]
  $region46: #{convolutional_actor_forward.1} parent=0
    _
  %s12 = ssub.s32 1, %s10
  %s13 = scalar_select 0, %s12, %s10
  $region1: #{convolutional_actor_forward.1} parent=0
    #allocation2 [shape = 'u8[1024]{0}', space=vmem, size = 0x400, scoped, tag = 'output window, operand 0, single buffered']
    #allocation3 [shape = 's32[1]{0}', space=sflag, size = 0x4, scoped, tag = 'scoped memory for convolutional_actor_forward.1']
    %14 = vsyncpa [#allocation3], 0
    // Predicated region
    $region2: #{convolutional_actor_forward.1} parent=1 // pred_check
      _
    $region3: #{convolutional_actor_forward.1} parent=1 // pred_check_branch
      %16 = sbr.rel (0) target = $region5
    $region4: #{convolutional_actor_forward.1} parent=1 // pred_region
      _
    $region5: #{convolutional_actor_forward.1} parent=1 // pred_fallthru
      _
    // Predicated region
    $region6: #{convolutional_actor_forward.1} parent=1 // pred_check
      _
    $region7: #{convolutional_actor_forward.1} parent=1 // pred_check_branch
      %18 = sbr.rel (0) target = $region9
    $region8: #{convolutional_actor_forward.1} parent=1 // pred_region
      _
    $region9: #{convolutional_actor_forward.1} parent=1 // pred_fallthru
      _
    // Predicated region
    $region10: #{convolutional_actor_forward.1} parent=1 // pred_check
      _
    $region11: #{convolutional_actor_forward.1} parent=1 // pred_check_branch
      %20 = sbr.rel (0) target = $region13
    $region12: #{convolutional_actor_forward.1} parent=1 // pred_region
      _
    $region13: #{convolutional_actor_forward.1} parent=1 // pred_fallthru
      _
    // Predicated region
    $region14: #{convolutional_actor_forward.1} parent=1 // pred_check
      _
    $region15: #{convolutional_actor_forward.1} parent=1 // pred_check_branch
      %22 = sbr.rel (0) target = $region17
    $region16: #{convolutional_actor_forward.1} parent=1 // pred_region
      _
    $region17: #{convolutional_actor_forward.1} parent=1 // pred_fallthru
      _
    // Predicated region
    $region18: #{convolutional_actor_forward.1} parent=1 // pred_check
      _
    $region19: #{convolutional_actor_forward.1} parent=1 // pred_check_branch
      %24 = sbr.rel (0) target = $region21
    $region20: #{convolutional_actor_forward.1} parent=1 // pred_region
      _
    $region21: #{convolutional_actor_forward.1} parent=1 // pred_fallthru
      _
    // Predicated region
    $region22: #{convolutional_actor_forward.1} parent=1 // pred_check
      _
    $region23: #{convolutional_actor_forward.1} parent=1 // pred_check_branch
      %26 = sbr.rel (0) target = $region25
    $region24: #{convolutional_actor_forward.1} parent=1 // pred_region
      _
    $region25: #{convolutional_actor_forward.1} parent=1 // pred_fallthru
      _
    // Predicated region
    $region26: #{convolutional_actor_forward.1} parent=1 // pred_check
      _
    $region27: #{convolutional_actor_forward.1} parent=1 // pred_check_branch
      %28 = sbr.rel (0) target = $region29
    $region28: #{convolutional_actor_forward.1} parent=1 // pred_region
      _
    $region29: #{convolutional_actor_forward.1} parent=1 // pred_fallthru
      _
    // Predicated region
    $region30: #{convolutional_actor_forward.1} parent=1 // pred_check
      _
    $region31: #{convolutional_actor_forward.1} parent=1 // pred_check_branch
      %30 = sbr.rel (0) target = $region33
    $region32: #{convolutional_actor_forward.1} parent=1 // pred_region
      _
    $region33: #{convolutional_actor_forward.1} parent=1 // pred_fallthru
      _
    // Predicated region
    $region34: #{convolutional_actor_forward.1} parent=1 // pred_check
      _
    $region35: #{convolutional_actor_forward.1} parent=1 // pred_check_branch
      %32 = sbr.rel (0) target = $region37
    $region36: #{convolutional_actor_forward.1} parent=1 // pred_region
      _
    $region37: #{convolutional_actor_forward.1} parent=1 // pred_fallthru
      _
    %v34 = vld [vmem:[%s0] sm:$0xff]
    %v35 = vld [vmem:[%s0 + $0x8] sm:$0xff]
    %v36 = vld [vmem:[%s1] sm:$0xff]
    %v37 = vld [vmem:[%s1 + $0x8] sm:$0xff]
    %v38 = vld [vmem:[%s1 + $0x10] sm:$0xf]
    %v39 = vld [vmem:[%s1 + $0x14] sm:$0xff]
    %v40 = vld [vmem:[%s1 + $0x1c] sm:$0xff]
    %v41 = vld [vmem:[%s1 + $0x24] sm:$0xf]
    %v42 = vld [vmem:[%s1 + $0x28] sm:$0xff]
    %v43 = vld [vmem:[%s1 + $0x30] sm:$0xff]
    %v44 = vld [vmem:[%s1 + $0x38] sm:$0xf]
    %v45 = vld [vmem:[%s1 + $0x3c] sm:$0xff]
    %v46 = vld [vmem:[%s1 + $0x44] sm:$0xff]
    %v47 = vld [vmem:[%s1 + $0x4c] sm:$0xf]
    %v48 = vld [vmem:[%s1 + $0x50] sm:$0xff]
    %v49 = vld [vmem:[%s1 + $0x58] sm:$0xff]
    %v50 = vld [vmem:[%s1 + $0x60] sm:$0xf]
    %v51 = vld [vmem:[%s1 + $0x64] sm:$0xff]
    %v52 = vld [vmem:[%s1 + $0x6c] sm:$0xff]
    %v53 = vld [vmem:[%s1 + $0x74] sm:$0xf]
    %v54 = vld [vmem:[%s1 + $0x78] sm:$0xff]
    %v55 = vld [vmem:[%s1 + $0x80] sm:$0xff]
    %v56 = vld [vmem:[%s1 + $0x88] sm:$0xf]
    %v57 = vld [vmem:[%s1 + $0x8c] sm:$0xff]
    %v58 = vld [vmem:[%s1 + $0x94] sm:$0xff]
    %v59 = vld [vmem:[%s1 + $0x9c] sm:$0xf]
    %v60 = vld [vmem:[%s1 + $0xa0] sm:$0xff]
    %v61 = vld [vmem:[%s1 + $0xa8] sm:$0xff]
    %v62 = vld [vmem:[%s1 + $0xb0] sm:$0xf]
    %v63 = vld [vmem:[%s1 + $0xb4] sm:$0xff]
    %v64 = vld [vmem:[%s1 + $0xbc] sm:$0xff]
    %v65 = vld [vmem:[%s1 + $0xc4] sm:$0xf]
    %v66 = vld [vmem:[%s1 + $0xc8] sm:$0xff]
    %v67 = vld [vmem:[%s1 + $0xd0] sm:$0xff]
    %v68 = vld [vmem:[%s1 + $0xd8] sm:$0xf]
    %v69 = vld [vmem:[%s1 + $0xdc] sm:$0xff]
    %v70 = vld [vmem:[%s1 + $0xe4] sm:$0xff]
    %v71 = vld [vmem:[%s1 + $0xec] sm:$0xf]
    %v72 = vld [vmem:[%s1 + $0xf0] sm:$0xff]
    %v73 = vld [vmem:[%s1 + $0xf8] sm:$0xff]
    %v74 = vld [vmem:[%s1 + $0x100] sm:$0xf]
    %v75 = vld [vmem:[%s1 + $0x104] sm:$0xff]
    %v76 = vld [vmem:[%s1 + $0x10c] sm:$0xff]
    %v77 = vld [vmem:[%s1 + $0x114] sm:$0xf]
    %v78 = vld [vmem:[%s1 + $0x118] sm:$0xff]
    %v79 = vld [vmem:[%s1 + $0x120] sm:$0xff]
    %v80 = vld [vmem:[%s1 + $0x128] sm:$0xf]
    %v81 = vld [vmem:[%s1 + $0x12c] sm:$0xff]
    %v82 = vld [vmem:[%s1 + $0x134] sm:$0xff]
    %v83 = vld [vmem:[%s1 + $0x13c] sm:$0xf]
    %v84 = vld [vmem:[%s1 + $0x140] sm:$0xff]
    %v85 = vld [vmem:[%s1 + $0x148] sm:$0xff]
    %v86 = vld [vmem:[%s1 + $0x150] sm:$0xf]
    %v87 = vld [vmem:[%s1 + $0x154] sm:$0xff]
    %v88 = vld [vmem:[%s1 + $0x15c] sm:$0xff]
    %v89 = vld [vmem:[%s1 + $0x164] sm:$0xf]
    %v90 = vld [vmem:[%s1 + $0x168] sm:$0xff]
    %v91 = vld [vmem:[%s1 + $0x170] sm:$0xff]
    %v92 = vld [vmem:[%s1 + $0x178] sm:$0xf]
    %v93 = vld [vmem:[%s1 + $0x17c] sm:$0xff]
    %v94 = vld [vmem:[%s1 + $0x184] sm:$0xff]
    %v95 = vld [vmem:[%s1 + $0x18c] sm:$0xf]
    %v96 = vld [vmem:[%s1 + $0x190] sm:$0xff]
    %v97 = vld [vmem:[%s1 + $0x198] sm:$0xff]
    %v98 = vld [vmem:[%s1 + $0x1a0] sm:$0xf]
    %v99 = vld [vmem:[%s1 + $0x1a4] sm:$0xff]
    %v100 = vld [vmem:[%s1 + $0x1ac] sm:$0xff]
    %v101 = vld [vmem:[%s1 + $0x1b4] sm:$0xf]
    %v102 = vld [vmem:[%s1 + $0x1b8] sm:$0xff]
    %v103 = vld [vmem:[%s1 + $0x1c0] sm:$0xff]
    %v104 = vld [vmem:[%s1 + $0x1c8] sm:$0xf]
    %v105 = vld [vmem:[%s1 + $0x1cc] sm:$0xff]
    %v106 = vld [vmem:[%s1 + $0x1d4] sm:$0xff]
    %v107 = vld [vmem:[%s1 + $0x1dc] sm:$0xf]
    %v108 = vld [vmem:[%s1 + $0x1e0] sm:$0xff]
    %v109 = vld [vmem:[%s1 + $0x1e8] sm:$0xff]
    %v110 = vld [vmem:[%s1 + $0x1f0] sm:$0xf]
    %v111 = vld [vmem:[%s1 + $0x1f4] sm:$0xff]
    %v112 = vld [vmem:[%s1 + $0x1fc] sm:$0xff]
    %v113 = vld [vmem:[%s1 + $0x204] sm:$0xf]
    %v114 = vld [vmem:[%s1 + $0x208] sm:$0xff]
    %v115 = vld [vmem:[%s1 + $0x210] sm:$0xff]
    %v116 = vld [vmem:[%s1 + $0x218] sm:$0xf]
    %v117 = vld [vmem:[%s1 + $0x21c] sm:$0xff]
    %v118 = vld [vmem:[%s1 + $0x224] sm:$0xff]
    %v119 = vld [vmem:[%s1 + $0x22c] sm:$0xf]
    %v120 = vld [vmem:[%s1 + $0x230] sm:$0xff]
    %v121 = vld [vmem:[%s1 + $0x238] sm:$0xff]
    %v122 = vld [vmem:[%s1 + $0x240] sm:$0xf]
    %v123 = vld [vmem:[%s1 + $0x244] sm:$0xff]
    %v124 = vld [vmem:[%s1 + $0x24c] sm:$0xff]
    %v125 = vld [vmem:[%s1 + $0x254] sm:$0xf]
    %v126 = vld [vmem:[%s1 + $0x258] sm:$0xff]
    %v127 = vld [vmem:[%s1 + $0x260] sm:$0xff]
    %v128 = vld [vmem:[%s1 + $0x268] sm:$0xf]
    %v129 = vld [vmem:[%s1 + $0x26c] sm:$0xff]
    %v130 = vld [vmem:[%s1 + $0x274] sm:$0xff]
    %v131 = vld [vmem:[%s1 + $0x27c] sm:$0xf]
    %v132 = vld [vmem:[%s1 + $0x280] sm:$0xff]
    %v133 = vld [vmem:[%s1 + $0x288] sm:$0xff]
    %v134 = vld [vmem:[%s1 + $0x290] sm:$0xf]
    %v135 = vld [vmem:[%s1 + $0x294] sm:$0xff]
    %v136 = vld [vmem:[%s1 + $0x29c] sm:$0xff]
    %v137 = vld [vmem:[%s1 + $0x2a4] sm:$0xf]
    %v138 = vld [vmem:[%s1 + $0x2a8] sm:$0xff]
    %v139 = vld [vmem:[%s1 + $0x2b0] sm:$0xff]
    %v140 = vld [vmem:[%s1 + $0x2b8] sm:$0xf]
    %v141 = vld [vmem:[%s1 + $0x2bc] sm:$0xff]
    %v142 = vld [vmem:[%s1 + $0x2c4] sm:$0xff]
    %v143 = vld [vmem:[%s1 + $0x2cc] sm:$0xf]
    %v144 = vld [vmem:[%s1 + $0x2d0] sm:$0xff]
    %v145 = vld [vmem:[%s1 + $0x2d8] sm:$0xff]
    %v146 = vld [vmem:[%s1 + $0x2e0] sm:$0xf]
    %v147 = vld [vmem:[%s1 + $0x2e4] sm:$0xff]
    %v148 = vld [vmem:[%s1 + $0x2ec] sm:$0xff]
    %v149 = vld [vmem:[%s1 + $0x2f4] sm:$0xf]
    %v150 = vld [vmem:[%s1 + $0x2f8] sm:$0xff]
    %v151 = vld [vmem:[%s1 + $0x300] sm:$0xff]
    %v152 = vld [vmem:[%s1 + $0x308] sm:$0xf]
    %v153 = vld [vmem:[%s1 + $0x30c] sm:$0xff]
    %v154 = vld [vmem:[%s1 + $0x314] sm:$0xff]
    %v155 = vld [vmem:[%s1 + $0x31c] sm:$0xf]
    %v156 = vld [vmem:[%s1 + $0x320] sm:$0xff]
    %v157 = vld [vmem:[%s1 + $0x328] sm:$0xff]
    %v158 = vld [vmem:[%s1 + $0x330] sm:$0xf]
    %v159 = vld [vmem:[%s1 + $0x334] sm:$0xff]
    %v160 = vld [vmem:[%s1 + $0x33c] sm:$0xff]
    %v161 = vld [vmem:[%s1 + $0x344] sm:$0xf]
    %v162 = vld [vmem:[%s1 + $0x348] sm:$0xff]
    %v163 = vld [vmem:[%s1 + $0x350] sm:$0xff]
    %v164 = vld [vmem:[%s1 + $0x358] sm:$0xf]
    %v165 = vld [vmem:[%s1 + $0x35c] sm:$0xff]
    %v166 = vld [vmem:[%s1 + $0x364] sm:$0xff]
    %v167 = vld [vmem:[%s1 + $0x36c] sm:$0xf]
    %v168 = vld [vmem:[%s1 + $0x370] sm:$0xff]
    %v169 = vld [vmem:[%s1 + $0x378] sm:$0xff]
    %v170 = vld [vmem:[%s1 + $0x380] sm:$0xf]
    %v171 = vld [vmem:[%s1 + $0x384] sm:$0xff]
    %v172 = vld [vmem:[%s1 + $0x38c] sm:$0xff]
    %v173 = vld [vmem:[%s1 + $0x394] sm:$0xf]
    %v174 = vld [vmem:[%s1 + $0x398] sm:$0xff]
    %v175 = vld [vmem:[%s1 + $0x3a0] sm:$0xff]
    %v176 = vld [vmem:[%s1 + $0x3a8] sm:$0xf]
    %v177 = vld [vmem:[%s1 + $0x3ac] sm:$0xff]
    %v178 = vld [vmem:[%s1 + $0x3b4] sm:$0xff]
    %v179 = vld [vmem:[%s1 + $0x3bc] sm:$0xf]
    %v180 = vld [vmem:[%s1 + $0x3c0] sm:$0xff]
    %v181 = vld [vmem:[%s1 + $0x3c8] sm:$0xff]
    %v182 = vld [vmem:[%s1 + $0x3d0] sm:$0xf]
    %v183 = vld [vmem:[%s1 + $0x3d4] sm:$0xff]
    %v184 = vld [vmem:[%s1 + $0x3dc] sm:$0xff]
    %v185 = vld [vmem:[%s1 + $0x3e4] sm:$0xf]
    %v186 = vld [vmem:[%s1 + $0x3e8] sm:$0xff]
    %v187 = vld [vmem:[%s1 + $0x3f0] sm:$0xff]
    %v188 = vld [vmem:[%s1 + $0x3f8] sm:$0xf]
    %v189 = vld [vmem:[%s1 + $0x3fc] sm:$0xff]
    %v190 = vld [vmem:[%s1 + $0x404] sm:$0xff]
    %v191 = vld [vmem:[%s1 + $0x40c] sm:$0xf]
    %v192 = vld [vmem:[%s1 + $0x410] sm:$0xff]
    %v193 = vld [vmem:[%s1 + $0x418] sm:$0xff]
    %v194 = vld [vmem:[%s1 + $0x420] sm:$0xf]
    %v195 = vld [vmem:[%s1 + $0x424] sm:$0xff]
    %v196 = vld [vmem:[%s1 + $0x42c] sm:$0xff]
    %v197 = vld [vmem:[%s1 + $0x434] sm:$0xf]
    %v198 = vld [vmem:[%s1 + $0x438] sm:$0xff]
    %v199 = vld [vmem:[%s1 + $0x440] sm:$0xff]
    %v200 = vld [vmem:[%s1 + $0x448] sm:$0xf]
    %v201 = vld [vmem:[%s1 + $0x44c] sm:$0xff]
    %v202 = vld [vmem:[%s1 + $0x454] sm:$0xff]
    %v203 = vld [vmem:[%s1 + $0x45c] sm:$0xf]
    %v204 = vld [vmem:[%s1 + $0x460] sm:$0xff]
    %v205 = vld [vmem:[%s1 + $0x468] sm:$0xff]
    %v206 = vld [vmem:[%s1 + $0x470] sm:$0xf]
    %v207 = vld [vmem:[%s1 + $0x474] sm:$0xff]
    %v208 = vld [vmem:[%s1 + $0x47c] sm:$0xff]
    %v209 = vld [vmem:[%s1 + $0x484] sm:$0xf]
    %v210 = vld [vmem:[%s1 + $0x488] sm:$0xff]
    %v211 = vld [vmem:[%s1 + $0x490] sm:$0xff]
    %v212 = vld [vmem:[%s1 + $0x498] sm:$0xf]
    %v213 = vld [vmem:[%s1 + $0x49c] sm:$0xff]
    %v214 = vld [vmem:[%s1 + $0x4a4] sm:$0xff]
    %v215 = vld [vmem:[%s1 + $0x4ac] sm:$0xf]
    %v216 = vld [vmem:[%s1 + $0x4b0] sm:$0xff]
    %v217 = vld [vmem:[%s1 + $0x4b8] sm:$0xff]
    %v218 = vld [vmem:[%s1 + $0x4c0] sm:$0xf]
    %v219 = vld [vmem:[%s1 + $0x4c4] sm:$0xff]
    %v220 = vld [vmem:[%s1 + $0x4cc] sm:$0xff]
    %v221 = vld [vmem:[%s1 + $0x4d4] sm:$0xf]
    %v222 = vld [vmem:[%s1 + $0x4d8] sm:$0xff]
    %v223 = vld [vmem:[%s1 + $0x4e0] sm:$0xff]
    %v224 = vld [vmem:[%s1 + $0x4e8] sm:$0xf]
    %v225 = vld [vmem:[%s1 + $0x4ec] sm:$0xff]
    %v226 = vld [vmem:[%s1 + $0x4f4] sm:$0xff]
    %v227 = vld [vmem:[%s1 + $0x4fc] sm:$0xf]
    %v228 = vld [vmem:[%s1 + $0x500] sm:$0xff]
    %v229 = vld [vmem:[%s1 + $0x508] sm:$0xff]
    %v230 = vld [vmem:[%s1 + $0x510] sm:$0xf]
    %v231 = vld [vmem:[%s1 + $0x514] sm:$0xff]
    %v232 = vld [vmem:[%s1 + $0x51c] sm:$0xff]
    %v233 = vld [vmem:[%s1 + $0x524] sm:$0xf]
    %v234 = vld [vmem:[%s1 + $0x528] sm:$0xff]
    %v235 = vld [vmem:[%s1 + $0x530] sm:$0xff]
    %v236 = vld [vmem:[%s1 + $0x538] sm:$0xf]
    %v237 = vld [vmem:[%s1 + $0x53c] sm:$0xff]
    %v238 = vld [vmem:[%s1 + $0x544] sm:$0xff]
    %v239 = vld [vmem:[%s1 + $0x54c] sm:$0xf]
    %v240 = vld [vmem:[%s1 + $0x550] sm:$0xff]
    %v241 = vld [vmem:[%s1 + $0x558] sm:$0xff]
    %v242 = vld [vmem:[%s1 + $0x560] sm:$0xf]
    %v243 = vld [vmem:[%s1 + $0x564] sm:$0xff]
    %v244 = vld [vmem:[%s1 + $0x56c] sm:$0xff]
    %v245 = vld [vmem:[%s1 + $0x574] sm:$0xf]
    %v246 = vld [vmem:[%s1 + $0x578] sm:$0xff]
    %v247 = vld [vmem:[%s1 + $0x580] sm:$0xff]
    %v248 = vld [vmem:[%s1 + $0x588] sm:$0xf]
    %v249 = vld [vmem:[%s1 + $0x58c] sm:$0xff]
    %v250 = vld [vmem:[%s1 + $0x594] sm:$0xff]
    %v251 = vld [vmem:[%s1 + $0x59c] sm:$0xf]
    %v252 = vld [vmem:[%s1 + $0x5a0] sm:$0xff]
    %v253 = vld [vmem:[%s1 + $0x5a8] sm:$0xff]
    %v254 = vld [vmem:[%s1 + $0x5b0] sm:$0xf]
    %v255 = vld [vmem:[%s1 + $0x5b4] sm:$0xff]
    %v256 = vld [vmem:[%s1 + $0x5bc] sm:$0xff]
    %v257 = vld [vmem:[%s1 + $0x5c4] sm:$0xf]
    %v258 = vld [vmem:[%s1 + $0x5c8] sm:$0xff]
    %v259 = vld [vmem:[%s1 + $0x5d0] sm:$0xff]
    %v260 = vld [vmem:[%s1 + $0x5d8] sm:$0xf]
    %v261 = vld [vmem:[%s1 + $0x5dc] sm:$0xff]
    %v262 = vld [vmem:[%s1 + $0x5e4] sm:$0xff]
    %v263 = vld [vmem:[%s1 + $0x5ec] sm:$0xf]
    %v264 = vld [vmem:[%s1 + $0x5f0] sm:$0xff]
    %v265 = vld [vmem:[%s1 + $0x5f8] sm:$0xff]
    %v266 = vld [vmem:[%s1 + $0x600] sm:$0xf]
    %v267 = vld [vmem:[%s1 + $0x604] sm:$0xff]
    %v268 = vld [vmem:[%s1 + $0x60c] sm:$0xff]
    %v269 = vld [vmem:[%s1 + $0x614] sm:$0xf]
    %v270 = vld [vmem:[%s1 + $0x618] sm:$0xff]
    %v271 = vld [vmem:[%s1 + $0x620] sm:$0xff]
    %v272 = vld [vmem:[%s1 + $0x628] sm:$0xf]
    %v273 = vld [vmem:[%s1 + $0x62c] sm:$0xff]
    %v274 = vld [vmem:[%s1 + $0x634] sm:$0xff]
    %v275 = vld [vmem:[%s1 + $0x63c] sm:$0xf]
    %v276 = vld [vmem:[%s1 + $0x640] sm:$0xff]
    %v277 = vld [vmem:[%s1 + $0x648] sm:$0xff]
    %v278 = vld [vmem:[%s1 + $0x650] sm:$0xf]
    %v279 = vld [vmem:[%s1 + $0x654] sm:$0xff]
    %v280 = vld [vmem:[%s1 + $0x65c] sm:$0xff]
    %v281 = vld [vmem:[%s1 + $0x664] sm:$0xf]
    %v282 = vld [vmem:[%s1 + $0x668] sm:$0xff]
    %v283 = vld [vmem:[%s1 + $0x670] sm:$0xff]
    %v284 = vld [vmem:[%s1 + $0x678] sm:$0xf]
    %v285 = vld [vmem:[%s1 + $0x67c] sm:$0xff]
    %v286 = vld [vmem:[%s1 + $0x684] sm:$0xff]
    %v287 = vld [vmem:[%s1 + $0x68c] sm:$0xf]
    %v288 = vld [vmem:[%s1 + $0x690] sm:$0xff]
    %v289 = vld [vmem:[%s1 + $0x698] sm:$0xff]
    %v290 = vld [vmem:[%s1 + $0x6a0] sm:$0xf]
    %v291 = vld [vmem:[%s1 + $0x6a4] sm:$0xff]
    %v292 = vld [vmem:[%s1 + $0x6ac] sm:$0xff]
    %v293 = vld [vmem:[%s1 + $0x6b4] sm:$0xf]
    %v294 = vld [vmem:[%s1 + $0x6b8] sm:$0xff]
    %v295 = vld [vmem:[%s1 + $0x6c0] sm:$0xff]
    %v296 = vld [vmem:[%s1 + $0x6c8] sm:$0xf]
    %v297 = vld [vmem:[%s1 + $0x6cc] sm:$0xff]
    %v298 = vld [vmem:[%s1 + $0x6d4] sm:$0xff]
    %v299 = vld [vmem:[%s1 + $0x6dc] sm:$0xf]
    %v300 = vld [vmem:[%s1 + $0x6e0] sm:$0xff]
    %v301 = vld [vmem:[%s1 + $0x6e8] sm:$0xff]
    %v302 = vld [vmem:[%s1 + $0x6f0] sm:$0xf]
    %v303 = vld [vmem:[%s1 + $0x6f4] sm:$0xff]
    %v304 = vld [vmem:[%s1 + $0x6fc] sm:$0xff]
    %v305 = vld [vmem:[%s1 + $0x704] sm:$0xf]
    %v306 = vld [vmem:[%s1 + $0x708] sm:$0xff]
    %v307 = vld [vmem:[%s1 + $0x710] sm:$0xff]
    %v308 = vld [vmem:[%s1 + $0x718] sm:$0xf]
    %v309 = vld [vmem:[%s1 + $0x71c] sm:$0xff]
    %v310 = vld [vmem:[%s1 + $0x724] sm:$0xff]
    %v311 = vld [vmem:[%s1 + $0x72c] sm:$0xf]
    %v312 = vld [vmem:[%s1 + $0x730] sm:$0xff]
    %v313 = vld [vmem:[%s1 + $0x738] sm:$0xff]
    %v314 = vld [vmem:[%s1 + $0x740] sm:$0xf]
    %v315 = vld [vmem:[%s1 + $0x744] sm:$0xff]
    %v316 = vld [vmem:[%s1 + $0x74c] sm:$0xff]
    %v317 = vld [vmem:[%s1 + $0x754] sm:$0xf]
    %v318 = vld [vmem:[%s1 + $0x758] sm:$0xff]
    %v319 = vld [vmem:[%s1 + $0x760] sm:$0xff]
    %v320 = vld [vmem:[%s1 + $0x768] sm:$0xf]
    %v321 = vld [vmem:[%s1 + $0x76c] sm:$0xff]
    %v322 = vld [vmem:[%s1 + $0x774] sm:$0xff]
    %v323 = vld [vmem:[%s1 + $0x77c] sm:$0xf]
    %v324 = vld [vmem:[%s1 + $0x780] sm:$0xff]
    %v325 = vld [vmem:[%s1 + $0x788] sm:$0xff]
    %v326 = vld [vmem:[%s1 + $0x790] sm:$0xf]
    %v327 = vld [vmem:[%s1 + $0x794] sm:$0xff]
    %v328 = vld [vmem:[%s1 + $0x79c] sm:$0xff]
    %v329 = vld [vmem:[%s1 + $0x7a4] sm:$0xf]
    %v330 = vld [vmem:[%s1 + $0x7a8] sm:$0xff]
    %v331 = vld [vmem:[%s1 + $0x7b0] sm:$0xff]
    %v332 = vld [vmem:[%s1 + $0x7b8] sm:$0xf]
    %v333 = vld [vmem:[%s1 + $0x7bc] sm:$0xff]
    %v334 = vld [vmem:[%s1 + $0x7c4] sm:$0xff]
    %v335 = vld [vmem:[%s1 + $0x7cc] sm:$0xf]
    %v336 = vld [vmem:[%s1 + $0x7d0] sm:$0xff]
    %v337 = vld [vmem:[%s1 + $0x7d8] sm:$0xff]
    %v338 = vld [vmem:[%s1 + $0x7e0] sm:$0xf]
    %v339 = vld [vmem:[%s1 + $0x7e4] sm:$0xff]
    %v340 = vld [vmem:[%s1 + $0x7ec] sm:$0xff]
    %v341 = vld [vmem:[%s1 + $0x7f4] sm:$0xf]
    %v342 = vld [vmem:[%s1 + $0x7f8] sm:$0xff]
    %v343 = vld [vmem:[%s1 + $0x800] sm:$0xff]
    %v344 = vld [vmem:[%s1 + $0x808] sm:$0xf]
    %v345 = vld [vmem:[%s1 + $0x80c] sm:$0xff]
    %v346 = vld [vmem:[%s1 + $0x814] sm:$0xff]
    %v347 = vld [vmem:[%s1 + $0x81c] sm:$0xf]
    %v348 = vld [vmem:[%s1 + $0x820] sm:$0xff]
    %v349 = vld [vmem:[%s1 + $0x828] sm:$0xff]
    %v350 = vld [vmem:[%s1 + $0x830] sm:$0xf]
    %v351 = vld [vmem:[%s1 + $0x834] sm:$0xff]
    %v352 = vld [vmem:[%s1 + $0x83c] sm:$0xff]
    %v353 = vld [vmem:[%s1 + $0x844] sm:$0xf]
    %v354 = vld [vmem:[%s1 + $0x848] sm:$0xff]
    %v355 = vld [vmem:[%s1 + $0x850] sm:$0xff]
    %v356 = vld [vmem:[%s1 + $0x858] sm:$0xf]
    %v357 = vld [vmem:[%s1 + $0x85c] sm:$0xff]
    %v358 = vld [vmem:[%s1 + $0x864] sm:$0xff]
    %v359 = vld [vmem:[%s1 + $0x86c] sm:$0xf]
    %v360 = vld [vmem:[%s1 + $0x870] sm:$0xff]
    %v361 = vld [vmem:[%s1 + $0x878] sm:$0xff]
    %v362 = vld [vmem:[%s1 + $0x880] sm:$0xf]
    %v363 = vld [vmem:[%s1 + $0x884] sm:$0xff]
    %v364 = vld [vmem:[%s1 + $0x88c] sm:$0xff]
    %v365 = vld [vmem:[%s1 + $0x894] sm:$0xf]
    %v366 = vld [vmem:[%s1 + $0x898] sm:$0xff]
    %v367 = vld [vmem:[%s1 + $0x8a0] sm:$0xff]
    %v368 = vld [vmem:[%s1 + $0x8a8] sm:$0xf]
    %v369 = vld [vmem:[%s1 + $0x8ac] sm:$0xff]
    %v370 = vld [vmem:[%s1 + $0x8b4] sm:$0xff]
    %v371 = vld [vmem:[%s1 + $0x8bc] sm:$0xf]
    %v372 = vld [vmem:[%s1 + $0x8c0] sm:$0xff]
    %v373 = vld [vmem:[%s1 + $0x8c8] sm:$0xff]
    %v374 = vld [vmem:[%s1 + $0x8d0] sm:$0xf]
    %v375 = vld [vmem:[%s1 + $0x8d4] sm:$0xff]
    %v376 = vld [vmem:[%s1 + $0x8dc] sm:$0xff]
    %v377 = vld [vmem:[%s1 + $0x8e4] sm:$0xf]
    %v378 = vld [vmem:[%s1 + $0x8e8] sm:$0xff]
    %v379 = vld [vmem:[%s1 + $0x8f0] sm:$0xff]
    %v380 = vld [vmem:[%s1 + $0x8f8] sm:$0xf]
    %v381 = vld [vmem:[%s1 + $0x8fc] sm:$0xff]
    %v382 = vld [vmem:[%s1 + $0x904] sm:$0xff]
    %v383 = vld [vmem:[%s1 + $0x90c] sm:$0xf]
    %v384 = vld [vmem:[%s1 + $0x910] sm:$0xff]
    %v385 = vld [vmem:[%s1 + $0x918] sm:$0xff]
    %v386 = vld [vmem:[%s1 + $0x920] sm:$0xf]
    %v387 = vld [vmem:[%s1 + $0x924] sm:$0xff]
    %v388 = vld [vmem:[%s1 + $0x92c] sm:$0xff]
    %v389 = vld [vmem:[%s1 + $0x934] sm:$0xf]
    %v390 = vld [vmem:[%s1 + $0x938] sm:$0xff]
    %v391 = vld [vmem:[%s1 + $0x940] sm:$0xff]
    %v392 = vld [vmem:[%s1 + $0x948] sm:$0xf]
    %v393 = vld [vmem:[%s1 + $0x94c] sm:$0xff]
    %v394 = vld [vmem:[%s1 + $0x954] sm:$0xff]
    %v395 = vld [vmem:[%s1 + $0x95c] sm:$0xf]
    %v396 = vld [vmem:[%s1 + $0x960] sm:$0xff]
    %v397 = vld [vmem:[%s1 + $0x968] sm:$0xff]
    %v398 = vld [vmem:[%s1 + $0x970] sm:$0xf]
    %v399 = vld [vmem:[%s1 + $0x974] sm:$0xff]
    %v400 = vld [vmem:[%s1 + $0x97c] sm:$0xff]
    %v401 = vld [vmem:[%s1 + $0x984] sm:$0xf]
    %v402 = vld [vmem:[%s1 + $0x988] sm:$0xff]
    %v403 = vld [vmem:[%s1 + $0x990] sm:$0xff]
    %v404 = vld [vmem:[%s1 + $0x998] sm:$0xf]
    %v405 = vld [vmem:[%s1 + $0x99c] sm:$0xff]
    %v406 = vld [vmem:[%s1 + $0x9a4] sm:$0xff]
    %v407 = vld [vmem:[%s1 + $0x9ac] sm:$0xf]
    %v408 = vld [vmem:[%s1 + $0x9b0] sm:$0xff]
    %v409 = vld [vmem:[%s1 + $0x9b8] sm:$0xff]
    %v410 = vld [vmem:[%s1 + $0x9c0] sm:$0xf]
    %v411 = vld [vmem:[%s1 + $0x9c4] sm:$0xff]
    %v412 = vld [vmem:[%s1 + $0x9cc] sm:$0xff]
    %v413 = vld [vmem:[%s1 + $0x9d4] sm:$0xf]
    %v414 = vld [vmem:[%s1 + $0x9d8] sm:$0xff]
    %v415 = vld [vmem:[%s1 + $0x9e0] sm:$0xff]
    %v416 = vld [vmem:[%s1 + $0x9e8] sm:$0xf]
    %v417 = vld [vmem:[%s1 + $0x9ec] sm:$0xff]
    %v418 = vld [vmem:[%s1 + $0x9f4] sm:$0xff]
    %v419 = vld [vmem:[%s1 + $0x9fc] sm:$0xf]
    %v420 = vld [vmem:[%s1 + $0xa00] sm:$0xff]
    %v421 = vld [vmem:[%s1 + $0xa08] sm:$0xff]
    %v422 = vld [vmem:[%s1 + $0xa10] sm:$0xf]
    %v423 = vld [vmem:[%s1 + $0xa14] sm:$0xff]
    %v424 = vld [vmem:[%s1 + $0xa1c] sm:$0xff]
    %v425 = vld [vmem:[%s1 + $0xa24] sm:$0xf]
    %v426 = vld [vmem:[%s1 + $0xa28] sm:$0xff]
    %v427 = vld [vmem:[%s1 + $0xa30] sm:$0xff]
    %v428 = vld [vmem:[%s1 + $0xa38] sm:$0xf]
    %v429 = vld [vmem:[%s1 + $0xa3c] sm:$0xff]
    %v430 = vld [vmem:[%s1 + $0xa44] sm:$0xff]
    %v431 = vld [vmem:[%s1 + $0xa4c] sm:$0xf]
    %v432 = vld [vmem:[%s1 + $0xa50] sm:$0xff]
    %v433 = vld [vmem:[%s1 + $0xa58] sm:$0xff]
    %v434 = vld [vmem:[%s1 + $0xa60] sm:$0xf]
    %v435 = vld [vmem:[%s1 + $0xa64] sm:$0xff]
    %v436 = vld [vmem:[%s1 + $0xa6c] sm:$0xff]
    %v437 = vld [vmem:[%s1 + $0xa74] sm:$0xf]
    %v438 = vld [vmem:[%s1 + $0xa78] sm:$0xff]
    %v439 = vld [vmem:[%s1 + $0xa80] sm:$0xff]
    %v440 = vld [vmem:[%s1 + $0xa88] sm:$0xf]
    %v441 = vld [vmem:[%s1 + $0xa8c] sm:$0xff]
    %v442 = vld [vmem:[%s1 + $0xa94] sm:$0xff]
    %v443 = vld [vmem:[%s1 + $0xa9c] sm:$0xf]
    %v444 = vld [vmem:[%s1 + $0xaa0] sm:$0xff]
    %v445 = vld [vmem:[%s1 + $0xaa8] sm:$0xff]
    %v446 = vld [vmem:[%s1 + $0xab0] sm:$0xf]
    %v447 = vld [vmem:[%s1 + $0xab4] sm:$0xff]
    %v448 = vld [vmem:[%s1 + $0xabc] sm:$0xff]
    %v449 = vld [vmem:[%s1 + $0xac4] sm:$0xf]
    %v450 = vld [vmem:[%s1 + $0xac8] sm:$0xff]
    %v451 = vld [vmem:[%s1 + $0xad0] sm:$0xff]
    %v452 = vld [vmem:[%s1 + $0xad8] sm:$0xf]
    %v453 = vld [vmem:[%s1 + $0xadc] sm:$0xff]
    %v454 = vld [vmem:[%s1 + $0xae4] sm:$0xff]
    %v455 = vld [vmem:[%s1 + $0xaec] sm:$0xf]
    %v456 = vld [vmem:[%s1 + $0xaf0] sm:$0xff]
    %v457 = vld [vmem:[%s1 + $0xaf8] sm:$0xff]
    %v458 = vld [vmem:[%s1 + $0xb00] sm:$0xf]
    %v459 = vld [vmem:[%s1 + $0xb04] sm:$0xff]
    %v460 = vld [vmem:[%s1 + $0xb0c] sm:$0xff]
    %v461 = vld [vmem:[%s1 + $0xb14] sm:$0xf]
    %v462 = vld [vmem:[%s1 + $0xb18] sm:$0xff]
    %v463 = vld [vmem:[%s1 + $0xb20] sm:$0xff]
    %v464 = vld [vmem:[%s1 + $0xb28] sm:$0xf]
    %v465 = vld [vmem:[%s1 + $0xb2c] sm:$0xff]
    %v466 = vld [vmem:[%s1 + $0xb34] sm:$0xff]
    %v467 = vld [vmem:[%s1 + $0xb3c] sm:$0xf]
    %v468 = vld [vmem:[%s1 + $0xb40] sm:$0xff]
    %v469 = vld [vmem:[%s1 + $0xb48] sm:$0xff]
    %v470 = vld [vmem:[%s1 + $0xb50] sm:$0xf]
    %v471 = vld [vmem:[%s1 + $0xb54] sm:$0xff]
    %v472 = vld [vmem:[%s1 + $0xb5c] sm:$0xff]
    %v473 = vld [vmem:[%s1 + $0xb64] sm:$0xf]
    %v474 = vld [vmem:[%s1 + $0xb68] sm:$0xff]
    %v475 = vld [vmem:[%s1 + $0xb70] sm:$0xff]
    %v476 = vld [vmem:[%s1 + $0xb78] sm:$0xf]
    %v477 = vld [vmem:[%s1 + $0xb7c] sm:$0xff]
    %v478 = vld [vmem:[%s1 + $0xb84] sm:$0xff]
    %v479 = vld [vmem:[%s1 + $0xb8c] sm:$0xf]
    %v480 = vld [vmem:[%s1 + $0xb90] sm:$0xff]
    %v481 = vld [vmem:[%s1 + $0xb98] sm:$0xff]
    %v482 = vld [vmem:[%s1 + $0xba0] sm:$0xf]
    %v483 = vld [vmem:[%s1 + $0xba4] sm:$0xff]
    %v484 = vld [vmem:[%s1 + $0xbac] sm:$0xff]
    %v485 = vld [vmem:[%s1 + $0xbb4] sm:$0xf]
    %v486 = vld [vmem:[%s1 + $0xbb8] sm:$0xff]
    %v487 = vld [vmem:[%s1 + $0xbc0] sm:$0xff]
    %v488 = vld [vmem:[%s1 + $0xbc8] sm:$0xf]
    %v489 = vld [vmem:[%s1 + $0xbcc] sm:$0xff]
    %v490 = vld [vmem:[%s1 + $0xbd4] sm:$0xff]
    %v491 = vld [vmem:[%s1 + $0xbdc] sm:$0xf]
    %v492 = vld [vmem:[%s1 + $0xbe0] sm:$0xff]
    %v493 = vld [vmem:[%s1 + $0xbe8] sm:$0xff]
    %v494 = vld [vmem:[%s1 + $0xbf0] sm:$0xf]
    %v495 = vld [vmem:[%s1 + $0xbf4] sm:$0xff]
    %v496 = vld [vmem:[%s1 + $0xbfc] sm:$0xff]
    %v497 = vld [vmem:[%s1 + $0xc04] sm:$0xf]
    %v498 = vld [vmem:[%s1 + $0xc08] sm:$0xff]
    %v499 = vld [vmem:[%s1 + $0xc10] sm:$0xff]
    %v500 = vld [vmem:[%s1 + $0xc18] sm:$0xf]
    %v501 = vld [vmem:[%s1 + $0xc1c] sm:$0xff]
    %v502 = vld [vmem:[%s1 + $0xc24] sm:$0xff]
    %v503 = vld [vmem:[%s1 + $0xc2c] sm:$0xf]
    %v504 = vld [vmem:[%s1 + $0xc30] sm:$0xff]
    %v505 = vld [vmem:[%s1 + $0xc38] sm:$0xff]
    %v506 = vld [vmem:[%s1 + $0xc40] sm:$0xf]
    %v507 = vld [vmem:[%s1 + $0xc44] sm:$0xff]
    %v508 = vld [vmem:[%s1 + $0xc4c] sm:$0xff]
    %v509 = vld [vmem:[%s1 + $0xc54] sm:$0xf]
    %v510 = vld [vmem:[%s1 + $0xc58] sm:$0xff]
    %v511 = vld [vmem:[%s1 + $0xc60] sm:$0xff]
    %v512 = vld [vmem:[%s1 + $0xc68] sm:$0xf]
    %v513 = vld [vmem:[%s1 + $0xc6c] sm:$0xff]
    %v514 = vld [vmem:[%s1 + $0xc74] sm:$0xff]
    %v515 = vld [vmem:[%s1 + $0xc7c] sm:$0xf]
    %v516 = vld [vmem:[%s1 + $0xc80] sm:$0xff]
    %v517 = vld [vmem:[%s1 + $0xc88] sm:$0xff]
    %v518 = vld [vmem:[%s1 + $0xc90] sm:$0xf]
    %v519 = vld [vmem:[%s1 + $0xc94] sm:$0xff]
    %v520 = vld [vmem:[%s1 + $0xc9c] sm:$0xff]
    %v521 = vld [vmem:[%s1 + $0xca4] sm:$0xf]
    %v522 = vld [vmem:[%s1 + $0xca8] sm:$0xff]
    %v523 = vld [vmem:[%s1 + $0xcb0] sm:$0xff]
    %v524 = vld [vmem:[%s1 + $0xcb8] sm:$0xf]
    %v525 = vld [vmem:[%s1 + $0xcbc] sm:$0xff]
    %v526 = vld [vmem:[%s1 + $0xcc4] sm:$0xff]
    %v527 = vld [vmem:[%s1 + $0xccc] sm:$0xf]
    %v528 = vld [vmem:[%s1 + $0xcd0] sm:$0xff]
    %v529 = vld [vmem:[%s1 + $0xcd8] sm:$0xff]
    %v530 = vld [vmem:[%s1 + $0xce0] sm:$0xf]
    %v531 = vld [vmem:[%s1 + $0xce4] sm:$0xff]
    %v532 = vld [vmem:[%s1 + $0xcec] sm:$0xff]
    %v533 = vld [vmem:[%s1 + $0xcf4] sm:$0xf]
    %v534 = vld [vmem:[%s1 + $0xcf8] sm:$0xff]
    %v535 = vld [vmem:[%s1 + $0xd00] sm:$0xff]
    %v536 = vld [vmem:[%s1 + $0xd08] sm:$0xf]
    %v537 = vld [vmem:[%s1 + $0xd0c] sm:$0xff]
    %v538 = vld [vmem:[%s1 + $0xd14] sm:$0xff]
    %v539 = vld [vmem:[%s1 + $0xd1c] sm:$0xf]
    %v540 = vld [vmem:[%s1 + $0xd20] sm:$0xff]
    %v541 = vld [vmem:[%s1 + $0xd28] sm:$0xff]
    %v542 = vld [vmem:[%s1 + $0xd30] sm:$0xf]
    %v543 = vld [vmem:[%s1 + $0xd34] sm:$0xff]
    %v544 = vld [vmem:[%s1 + $0xd3c] sm:$0xff]
    %v545 = vld [vmem:[%s1 + $0xd44] sm:$0xf]
    %v546 = vld [vmem:[%s1 + $0xd48] sm:$0xff]
    %v547 = vld [vmem:[%s1 + $0xd50] sm:$0xff]
    %v548 = vld [vmem:[%s1 + $0xd58] sm:$0xf]
    %v549 = vld [vmem:[%s1 + $0xd5c] sm:$0xff]
    %v550 = vld [vmem:[%s1 + $0xd64] sm:$0xff]
    %v551 = vld [vmem:[%s1 + $0xd6c] sm:$0xf]
    %v552 = vld [vmem:[%s1 + $0xd70] sm:$0xff]
    %v553 = vld [vmem:[%s1 + $0xd78] sm:$0xff]
    %v554 = vld [vmem:[%s1 + $0xd80] sm:$0xf]
    %v555 = vld [vmem:[%s1 + $0xd84] sm:$0xff]
    %v556 = vld [vmem:[%s1 + $0xd8c] sm:$0xff]
    %v557 = vld [vmem:[%s1 + $0xd94] sm:$0xf]
    %v558 = vld [vmem:[%s1 + $0xd98] sm:$0xff]
    %v559 = vld [vmem:[%s1 + $0xda0] sm:$0xff]
    %v560 = vld [vmem:[%s1 + $0xda8] sm:$0xf]
    %v561 = vld [vmem:[%s1 + $0xdac] sm:$0xff]
    %v562 = vld [vmem:[%s1 + $0xdb4] sm:$0xff]
    %v563 = vld [vmem:[%s1 + $0xdbc] sm:$0xf]
    %v564 = vld [vmem:[%s1 + $0xdc0] sm:$0xff]
    %v565 = vld [vmem:[%s1 + $0xdc8] sm:$0xff]
    %v566 = vld [vmem:[%s1 + $0xdd0] sm:$0xf]
    %v567 = vld [vmem:[%s1 + $0xdd4] sm:$0xff]
    %v568 = vld [vmem:[%s1 + $0xddc] sm:$0xff]
    %v569 = vld [vmem:[%s1 + $0xde4] sm:$0xf]
    %v570 = vld [vmem:[%s1 + $0xde8] sm:$0xff]
    %v571 = vld [vmem:[%s1 + $0xdf0] sm:$0xff]
    %v572 = vld [vmem:[%s1 + $0xdf8] sm:$0xf]
    %v573 = vld [vmem:[%s1 + $0xdfc] sm:$0xff]
    %v574 = vld [vmem:[%s1 + $0xe04] sm:$0xff]
    %v575 = vld [vmem:[%s1 + $0xe0c] sm:$0xf]
    %v576 = vld [vmem:[%s1 + $0xe10] sm:$0xff]
    %v577 = vld [vmem:[%s1 + $0xe18] sm:$0xff]
    %v578 = vld [vmem:[%s1 + $0xe20] sm:$0xf]
    %v579 = vld [vmem:[%s1 + $0xe24] sm:$0xff]
    %v580 = vld [vmem:[%s1 + $0xe2c] sm:$0xff]
    %v581 = vld [vmem:[%s1 + $0xe34] sm:$0xf]
    %v582 = vld [vmem:[%s1 + $0xe38] sm:$0xff]
    %v583 = vld [vmem:[%s1 + $0xe40] sm:$0xff]
    %v584 = vld [vmem:[%s1 + $0xe48] sm:$0xf]
    %v585 = vld [vmem:[%s1 + $0xe4c] sm:$0xff]
    %v586 = vld [vmem:[%s1 + $0xe54] sm:$0xff]
    %v587 = vld [vmem:[%s1 + $0xe5c] sm:$0xf]
    %v588 = vld [vmem:[%s1 + $0xe60] sm:$0xff]
    %v589 = vld [vmem:[%s1 + $0xe68] sm:$0xff]
    %v590 = vld [vmem:[%s1 + $0xe70] sm:$0xf]
    %v591 = vld [vmem:[%s1 + $0xe74] sm:$0xff]
    %v592 = vld [vmem:[%s1 + $0xe7c] sm:$0xff]
    %v593 = vld [vmem:[%s1 + $0xe84] sm:$0xf]
    %v594 = vld [vmem:[%s1 + $0xe88] sm:$0xff]
    %v595 = vld [vmem:[%s1 + $0xe90] sm:$0xff]
    %v596 = vld [vmem:[%s1 + $0xe98] sm:$0xf]
    %v597 = vld [vmem:[%s1 + $0xe9c] sm:$0xff]
    %v598 = vld [vmem:[%s1 + $0xea4] sm:$0xff]
    %v599 = vld [vmem:[%s1 + $0xeac] sm:$0xf]
    %v600 = vld [vmem:[%s1 + $0xeb0] sm:$0xff]
    %v601 = vld [vmem:[%s1 + $0xeb8] sm:$0xff]
    %v602 = vld [vmem:[%s1 + $0xec0] sm:$0xf]
    %v603 = vld [vmem:[%s1 + $0xec4] sm:$0xff]
    %v604 = vld [vmem:[%s1 + $0xecc] sm:$0xff]
    %v605 = vld [vmem:[%s1 + $0xed4] sm:$0xf]
    %v606 = vld [vmem:[%s1 + $0xed8] sm:$0xff]
    %v607 = vld [vmem:[%s1 + $0xee0] sm:$0xff]
    %v608 = vld [vmem:[%s1 + $0xee8] sm:$0xf]
    %v609 = vld [vmem:[%s1 + $0xeec] sm:$0xff]
    %v610 = vld [vmem:[%s1 + $0xef4] sm:$0xff]
    %v611 = vld [vmem:[%s1 + $0xefc] sm:$0xf]
    %v612 = vld [vmem:[%s1 + $0xf00] sm:$0xff]
    %v613 = vld [vmem:[%s1 + $0xf08] sm:$0xff]
    %v614 = vld [vmem:[%s1 + $0xf10] sm:$0xf]
    %v615 = vld [vmem:[%s1 + $0xf14] sm:$0xff]
    %v616 = vld [vmem:[%s1 + $0xf1c] sm:$0xff]
    %v617 = vld [vmem:[%s1 + $0xf24] sm:$0xf]
    %v618 = vld [vmem:[%s1 + $0xf28] sm:$0xff]
    %v619 = vld [vmem:[%s1 + $0xf30] sm:$0xff]
    %v620 = vld [vmem:[%s1 + $0xf38] sm:$0xf]
    %v621 = vld [vmem:[%s1 + $0xf3c] sm:$0xff]
    %v622 = vld [vmem:[%s1 + $0xf44] sm:$0xff]
    %v623 = vld [vmem:[%s1 + $0xf4c] sm:$0xf]
    %v624 = vld [vmem:[%s1 + $0xf50] sm:$0xff]
    %v625 = vld [vmem:[%s1 + $0xf58] sm:$0xff]
    %v626 = vld [vmem:[%s1 + $0xf60] sm:$0xf]
    %v627 = vld [vmem:[%s1 + $0xf64] sm:$0xff]
    %v628 = vld [vmem:[%s1 + $0xf6c] sm:$0xff]
    %v629 = vld [vmem:[%s1 + $0xf74] sm:$0xf]
    %v630 = vld [vmem:[%s1 + $0xf78] sm:$0xff]
    %v631 = vld [vmem:[%s1 + $0xf80] sm:$0xff]
    %v632 = vld [vmem:[%s1 + $0xf88] sm:$0xf]
    %v633 = vld [vmem:[%s1 + $0xf8c] sm:$0xff]
    %v634 = vld [vmem:[%s1 + $0xf94] sm:$0xff]
    %v635 = vld [vmem:[%s1 + $0xf9c] sm:$0xf]
    %v636 = vld [vmem:[%s1 + $0xfa0] sm:$0xff]
    %v637 = vld [vmem:[%s1 + $0xfa8] sm:$0xff]
    %v638 = vld [vmem:[%s1 + $0xfb0] sm:$0xf]
    %v639 = vld [vmem:[%s1 + $0xfb4] sm:$0xff]
    %v640 = vld [vmem:[%s1 + $0xfbc] sm:$0xff]
    %v641 = vld [vmem:[%s1 + $0xfc4] sm:$0xf]
    %v642 = vld [vmem:[%s1 + $0xfc8] sm:$0xff]
    %v643 = vld [vmem:[%s1 + $0xfd0] sm:$0xff]
    %v644 = vld [vmem:[%s1 + $0xfd8] sm:$0xf]
    %v645 = vld [vmem:[%s1 + $0xfdc] sm:$0xff]
    %v646 = vld [vmem:[%s1 + $0xfe4] sm:$0xff]
    %v647 = vld [vmem:[%s1 + $0xfec] sm:$0xf]
    %v648 = vld [vmem:[%s1 + $0xff0] sm:$0xff]
    %v649 = vld [vmem:[%s1 + $0xff8] sm:$0xff]
    %v650 = vld [vmem:[%s1 + $0x1000] sm:$0xf]
    %v651 = vld [vmem:[%s1 + $0x1004] sm:$0xff]
    %v652 = vld [vmem:[%s1 + $0x100c] sm:$0xff]
    %v653 = vld [vmem:[%s1 + $0x1014] sm:$0xf]
    %v654 = vld [vmem:[%s1 + $0x1018] sm:$0xff]
    %v655 = vld [vmem:[%s1 + $0x1020] sm:$0xff]
    %v656 = vld [vmem:[%s1 + $0x1028] sm:$0xf]
    %v657 = vld [vmem:[%s1 + $0x102c] sm:$0xff]
    %v658 = vld [vmem:[%s1 + $0x1034] sm:$0xff]
    %v659 = vld [vmem:[%s1 + $0x103c] sm:$0xf]
    %v660 = vld [vmem:[%s1 + $0x1040] sm:$0xff]
    %v661 = vld [vmem:[%s1 + $0x1048] sm:$0xff]
    %v662 = vld [vmem:[%s1 + $0x1050] sm:$0xf]
    %v663 = vld [vmem:[%s1 + $0x1054] sm:$0xff]
    %v664 = vld [vmem:[%s1 + $0x105c] sm:$0xff]
    %v665 = vld [vmem:[%s1 + $0x1064] sm:$0xf]
    %v666 = vld [vmem:[%s1 + $0x1068] sm:$0xff]
    %v667 = vld [vmem:[%s1 + $0x1070] sm:$0xff]
    %v668 = vld [vmem:[%s1 + $0x1078] sm:$0xf]
    %v669 = vld [vmem:[%s1 + $0x107c] sm:$0xff]
    %v670 = vld [vmem:[%s1 + $0x1084] sm:$0xff]
    %v671 = vld [vmem:[%s1 + $0x108c] sm:$0xf]
    %v672 = vld [vmem:[%s1 + $0x1090] sm:$0xff]
    %v673 = vld [vmem:[%s1 + $0x1098] sm:$0xff]
    %v674 = vld [vmem:[%s1 + $0x10a0] sm:$0xf]
    %v675 = vld [vmem:[%s1 + $0x10a4] sm:$0xff]
    %v676 = vld [vmem:[%s1 + $0x10ac] sm:$0xff]
    %v677 = vld [vmem:[%s1 + $0x10b4] sm:$0xf]
    %v678 = vld [vmem:[%s1 + $0x10b8] sm:$0xff]
    %v679 = vld [vmem:[%s1 + $0x10c0] sm:$0xff]
    %v680 = vld [vmem:[%s1 + $0x10c8] sm:$0xf]
    %v681 = vld [vmem:[%s1 + $0x10cc] sm:$0xff]
    %v682 = vld [vmem:[%s1 + $0x10d4] sm:$0xff]
    %v683 = vld [vmem:[%s1 + $0x10dc] sm:$0xf]
    %v684 = vld [vmem:[%s1 + $0x10e0] sm:$0xff]
    %v685 = vld [vmem:[%s1 + $0x10e8] sm:$0xff]
    %v686 = vld [vmem:[%s1 + $0x10f0] sm:$0xf]
    %v687 = vld [vmem:[%s1 + $0x10f4] sm:$0xff]
    %v688 = vld [vmem:[%s1 + $0x10fc] sm:$0xff]
    %v689 = vld [vmem:[%s1 + $0x1104] sm:$0xf]
    %v690 = vld [vmem:[%s1 + $0x1108] sm:$0xff]
    %v691 = vld [vmem:[%s1 + $0x1110] sm:$0xff]
    %v692 = vld [vmem:[%s1 + $0x1118] sm:$0xf]
    %v693 = vld [vmem:[%s1 + $0x111c] sm:$0xff]
    %v694 = vld [vmem:[%s1 + $0x1124] sm:$0xff]
    %v695 = vld [vmem:[%s1 + $0x112c] sm:$0xf]
    %v696 = vld [vmem:[%s1 + $0x1130] sm:$0xff]
    %v697 = vld [vmem:[%s1 + $0x1138] sm:$0xff]
    %v698 = vld [vmem:[%s1 + $0x1140] sm:$0xf]
    %v699 = vld [vmem:[%s1 + $0x1144] sm:$0xff]
    %v700 = vld [vmem:[%s1 + $0x114c] sm:$0xff]
    %v701 = vld [vmem:[%s1 + $0x1154] sm:$0xf]
    %v702 = vld [vmem:[%s1 + $0x1158] sm:$0xff]
    %v703 = vld [vmem:[%s1 + $0x1160] sm:$0xff]
    %v704 = vld [vmem:[%s1 + $0x1168] sm:$0xf]
    %v705 = vld [vmem:[%s1 + $0x116c] sm:$0xff]
    %v706 = vld [vmem:[%s1 + $0x1174] sm:$0xff]
    %v707 = vld [vmem:[%s1 + $0x117c] sm:$0xf]
    %v708 = vld [vmem:[%s1 + $0x1180] sm:$0xff]
    %v709 = vld [vmem:[%s1 + $0x1188] sm:$0xff]
    %v710 = vld [vmem:[%s1 + $0x1190] sm:$0xf]
    %v711 = vld [vmem:[%s1 + $0x1194] sm:$0xff]
    %v712 = vld [vmem:[%s1 + $0x119c] sm:$0xff]
    %v713 = vld [vmem:[%s1 + $0x11a4] sm:$0xf]
    %v714 = vld [vmem:[%s1 + $0x11a8] sm:$0xff]
    %v715 = vld [vmem:[%s1 + $0x11b0] sm:$0xff]
    %v716 = vld [vmem:[%s1 + $0x11b8] sm:$0xf]
    %v717 = vld [vmem:[%s1 + $0x11bc] sm:$0xff]
    %v718 = vld [vmem:[%s1 + $0x11c4] sm:$0xff]
    %v719 = vld [vmem:[%s1 + $0x11cc] sm:$0xf]
    %v720 = vld [vmem:[%s1 + $0x11d0] sm:$0xff]
    %v721 = vld [vmem:[%s1 + $0x11d8] sm:$0xff]
    %v722 = vld [vmem:[%s1 + $0x11e0] sm:$0xf]
    %v723 = vld [vmem:[%s1 + $0x11e4] sm:$0xff]
    %v724 = vld [vmem:[%s1 + $0x11ec] sm:$0xff]
    %v725 = vld [vmem:[%s1 + $0x11f4] sm:$0xf]
    %v726 = vld [vmem:[%s1 + $0x11f8] sm:$0xff]
    %v727 = vld [vmem:[%s1 + $0x1200] sm:$0xff]
    %v728 = vld [vmem:[%s1 + $0x1208] sm:$0xf]
    %v729 = vld [vmem:[%s1 + $0x120c] sm:$0xff]
    %v730 = vld [vmem:[%s1 + $0x1214] sm:$0xff]
    %v731 = vld [vmem:[%s1 + $0x121c] sm:$0xf]
    %v732 = vld [vmem:[%s1 + $0x1220] sm:$0xff]
    %v733 = vld [vmem:[%s1 + $0x1228] sm:$0xff]
    %v734 = vld [vmem:[%s1 + $0x1230] sm:$0xf]
    %v735 = vld [vmem:[%s1 + $0x1234] sm:$0xff]
    %v736 = vld [vmem:[%s1 + $0x123c] sm:$0xff]
    %v737 = vld [vmem:[%s1 + $0x1244] sm:$0xf]
    %v738 = vld [vmem:[%s1 + $0x1248] sm:$0xff]
    %v739 = vld [vmem:[%s1 + $0x1250] sm:$0xff]
    %v740 = vld [vmem:[%s1 + $0x1258] sm:$0xf]
    %v741 = vld [vmem:[%s1 + $0x125c] sm:$0xff]
    %v742 = vld [vmem:[%s1 + $0x1264] sm:$0xff]
    %v743 = vld [vmem:[%s1 + $0x126c] sm:$0xf]
    %v744 = vld [vmem:[%s1 + $0x1270] sm:$0xff]
    %v745 = vld [vmem:[%s1 + $0x1278] sm:$0xff]
    %v746 = vld [vmem:[%s1 + $0x1280] sm:$0xf]
    %v747 = vld [vmem:[%s1 + $0x1284] sm:$0xff]
    %v748 = vld [vmem:[%s1 + $0x128c] sm:$0xff]
    %v749 = vld [vmem:[%s1 + $0x1294] sm:$0xf]
    %v750 = vld [vmem:[%s1 + $0x1298] sm:$0xff]
    %v751 = vld [vmem:[%s1 + $0x12a0] sm:$0xff]
    %v752 = vld [vmem:[%s1 + $0x12a8] sm:$0xf]
    %v753 = vld [vmem:[%s1 + $0x12ac] sm:$0xff]
    %v754 = vld [vmem:[%s1 + $0x12b4] sm:$0xff]
    %v755 = vld [vmem:[%s1 + $0x12bc] sm:$0xf]
    %v756 = vld [vmem:[%s1 + $0x12c0] sm:$0xff]
    %v757 = vld [vmem:[%s1 + $0x12c8] sm:$0xff]
    %v758 = vld [vmem:[%s1 + $0x12d0] sm:$0xf]
    %v759 = vld [vmem:[%s1 + $0x12d4] sm:$0xff]
    %v760 = vld [vmem:[%s1 + $0x12dc] sm:$0xff]
    %v761 = vld [vmem:[%s1 + $0x12e4] sm:$0xf]
    %v762 = vld [vmem:[%s1 + $0x12e8] sm:$0xff]
    %v763 = vld [vmem:[%s1 + $0x12f0] sm:$0xff]
    %v764 = vld [vmem:[%s1 + $0x12f8] sm:$0xf]
    %v765 = vld [vmem:[%s1 + $0x12fc] sm:$0xff]
    %v766 = vld [vmem:[%s1 + $0x1304] sm:$0xff]
    %v767 = vld [vmem:[%s1 + $0x130c] sm:$0xf]
    %v768 = vld [vmem:[%s1 + $0x1310] sm:$0xff]
    %v769 = vld [vmem:[%s1 + $0x1318] sm:$0xff]
    %v770 = vld [vmem:[%s1 + $0x1320] sm:$0xf]
    %v771 = vld [vmem:[%s1 + $0x1324] sm:$0xff]
    %v772 = vld [vmem:[%s1 + $0x132c] sm:$0xff]
    %v773 = vld [vmem:[%s1 + $0x1334] sm:$0xf]
    %v774 = vld [vmem:[%s1 + $0x1338] sm:$0xff]
    %v775 = vld [vmem:[%s1 + $0x1340] sm:$0xff]
    %v776 = vld [vmem:[%s1 + $0x1348] sm:$0xf]
    %v777 = vld [vmem:[%s1 + $0x134c] sm:$0xff]
    %v778 = vld [vmem:[%s1 + $0x1354] sm:$0xff]
    %v779 = vld [vmem:[%s1 + $0x135c] sm:$0xf]
    %v780 = vld [vmem:[%s1 + $0x1360] sm:$0xff]
    %v781 = vld [vmem:[%s1 + $0x1368] sm:$0xff]
    %v782 = vld [vmem:[%s1 + $0x1370] sm:$0xf]
    %v783 = vld [vmem:[%s1 + $0x1374] sm:$0xff]
    %v784 = vld [vmem:[%s1 + $0x137c] sm:$0xff]
    %v785 = vld [vmem:[%s1 + $0x1384] sm:$0xf]
    %v786 = vld [vmem:[%s1 + $0x1388] sm:$0xff]
    %v787 = vld [vmem:[%s1 + $0x1390] sm:$0xff]
    %v788 = vld [vmem:[%s1 + $0x1398] sm:$0xf]
    %v789 = vld [vmem:[%s1 + $0x139c] sm:$0xff]
    %v790 = vld [vmem:[%s1 + $0x13a4] sm:$0xff]
    %v791 = vld [vmem:[%s1 + $0x13ac] sm:$0xf]
    %v792 = vld [vmem:[%s1 + $0x13b0] sm:$0xff]
    %v793 = vld [vmem:[%s1 + $0x13b8] sm:$0xff]
    %v794 = vld [vmem:[%s1 + $0x13c0] sm:$0xf]
    %v795 = vld [vmem:[%s1 + $0x13c4] sm:$0xff]
    %v796 = vld [vmem:[%s1 + $0x13cc] sm:$0xff]
    %v797 = vld [vmem:[%s1 + $0x13d4] sm:$0xf]
    %v798 = vld [vmem:[%s1 + $0x13d8] sm:$0xff]
    %v799 = vld [vmem:[%s1 + $0x13e0] sm:$0xff]
    %v800 = vld [vmem:[%s1 + $0x13e8] sm:$0xf]
    %v801 = vld [vmem:[%s1 + $0x13ec] sm:$0xff]
    %v802 = vld [vmem:[%s1 + $0x13f4] sm:$0xff]
    %v803 = vld [vmem:[%s1 + $0x13fc] sm:$0xf]
    %v804 = vld [vmem:[%s2] sm:$0x1f]
    %v806 = vlaneseq
    %v807 = vshrl.u32 %v806, 7
    %v808 = vsub.s32 0, %v807
    %v809 = vrot.slane %v804, %v808
    %v810 = vlaneseq
    %v811 = vshrl.u32 %v810, 7
    %v812 = vsub.s32 1, %v811
    %v813 = vrot.slane %v804, %v812
    %v814 = vlaneseq
    %v815 = vshrl.u32 %v814, 7
    %v816 = vsub.s32 2, %v815
    %v817 = vrot.slane %v804, %v816
    %v818 = vlaneseq
    %v819 = vshrl.u32 %v818, 7
    %v820 = vsub.s32 3, %v819
    %v821 = vrot.slane %v804, %v820
    %v822 = vlaneseq
    %v823 = vshrl.u32 %v822, 7
    %v824 = vsub.s32 4, %v823
    %v825 = vrot.slane %v804, %v824
    %v833 = vcombine.high %v34, %v34
    %v835 = vunpack.c.l.s4 1966171168
    %v836 = vunpack.c.0.s8 %v835
    %v837 = vlaneseq
    %v838 = vshrl.u32 %v837, 7
    %v839 = vsub.s32 %v836, %v838
    %v840 = vrot.slane %v34, %v839
    %v842 = vunpack.c.l.s4 1966171168
    %v843 = vunpack.c.0.s8 %v842
    %v844 = vlaneseq
    %v845 = vshrl.u32 %v844, 7
    %v846 = vsub.s32 %v843, %v845
    %v847 = vrot.slane %v833, %v846
    %v848 = vcombine.high %v840, %v840
    %v849 = vcombine.high %v847, %v847
    %v851 = vunpack.c.l.s4 1966171168
    %v852 = vunpack.c.0.s8 %v851
    %v853 = vlaneseq
    %v854 = vshrl.u32 %v853, 7
    %v855 = vsub.s32 %v852, %v854
    %v856 = vrot.slane %v840, %v855
    %v858 = vunpack.c.l.s4 1966171168
    %v859 = vunpack.c.0.s8 %v858
    %v860 = vlaneseq
    %v861 = vshrl.u32 %v860, 7
    %v862 = vsub.s32 %v859, %v861
    %v863 = vrot.slane %v847, %v862
    %v865 = vunpack.c.l.s4 1966171168
    %v866 = vunpack.c.0.s8 %v865
    %v867 = vlaneseq
    %v868 = vshrl.u32 %v867, 7
    %v869 = vsub.s32 %v866, %v868
    %v870 = vrot.slane %v848, %v869
    %v872 = vunpack.c.l.s4 1966171168
    %v873 = vunpack.c.0.s8 %v872
    %v874 = vlaneseq
    %v875 = vshrl.u32 %v874, 7
    %v876 = vsub.s32 %v873, %v875
    %v877 = vrot.slane %v849, %v876
    %v878 = vcombine.high %v856, %v856
    %v879 = vcombine.high %v863, %v863
    %v880 = vcombine.high %v870, %v870
    %v881 = vcombine.high %v877, %v877
    %v882 = vcombine.high %v35, %v35
    %v884 = vunpack.c.l.s4 1966171168
    %v885 = vunpack.c.0.s8 %v884
    %v886 = vlaneseq
    %v887 = vshrl.u32 %v886, 7
    %v888 = vsub.s32 %v885, %v887
    %v889 = vrot.slane %v35, %v888
    %v891 = vunpack.c.l.s4 1966171168
    %v892 = vunpack.c.0.s8 %v891
    %v893 = vlaneseq
    %v894 = vshrl.u32 %v893, 7
    %v895 = vsub.s32 %v892, %v894
    %v896 = vrot.slane %v882, %v895
    %v897 = vcombine.high %v889, %v889
    %v898 = vcombine.high %v896, %v896
    %v900 = vunpack.c.l.s4 1966171168
    %v901 = vunpack.c.0.s8 %v900
    %v902 = vlaneseq
    %v903 = vshrl.u32 %v902, 7
    %v904 = vsub.s32 %v901, %v903
    %v905 = vrot.slane %v889, %v904
    %v907 = vunpack.c.l.s4 1966171168
    %v908 = vunpack.c.0.s8 %v907
    %v909 = vlaneseq
    %v910 = vshrl.u32 %v909, 7
    %v911 = vsub.s32 %v908, %v910
    %v912 = vrot.slane %v896, %v911
    %v914 = vunpack.c.l.s4 1966171168
    %v915 = vunpack.c.0.s8 %v914
    %v916 = vlaneseq
    %v917 = vshrl.u32 %v916, 7
    %v918 = vsub.s32 %v915, %v917
    %v919 = vrot.slane %v897, %v918
    %v921 = vunpack.c.l.s4 1966171168
    %v922 = vunpack.c.0.s8 %v921
    %v923 = vlaneseq
    %v924 = vshrl.u32 %v923, 7
    %v925 = vsub.s32 %v922, %v924
    %v926 = vrot.slane %v898, %v925
    %v927 = vcombine.high %v905, %v905
    %v928 = vcombine.high %v912, %v912
    %v929 = vcombine.high %v919, %v919
    %v930 = vcombine.high %v926, %v926
    %v1715 = vunpack.c.l.b16 %v36
    %v1716 = vunpack.c.h.b16 %v36
    %v1717 = vunpack.c.l.b16 %v37
    %v1718 = vunpack.c.h.b16 %v37
    %v1719 = vunpack.c.l.b16 %v38
    %v1720 = vunpack.c.l.b16 %v39
    %v1721 = vunpack.c.h.b16 %v39
    %v1722 = vunpack.c.l.b16 %v40
    %v1723 = vunpack.c.h.b16 %v40
    %v1724 = vunpack.c.l.b16 %v41
    %v1725 = vunpack.c.l.b16 %v42
    %v1726 = vunpack.c.h.b16 %v42
    %v1727 = vunpack.c.l.b16 %v43
    %v1728 = vunpack.c.h.b16 %v43
    %v1729 = vunpack.c.l.b16 %v44
    %v1730 = vunpack.c.l.b16 %v45
    %v1731 = vunpack.c.h.b16 %v45
    %v1732 = vunpack.c.l.b16 %v46
    %v1733 = vunpack.c.h.b16 %v46
    %v1734 = vunpack.c.l.b16 %v47
    %v1735 = vunpack.c.l.b16 %v48
    %v1736 = vunpack.c.h.b16 %v48
    %v1737 = vunpack.c.l.b16 %v49
    %v1738 = vunpack.c.h.b16 %v49
    %v1739 = vunpack.c.l.b16 %v50
    %v1740 = vunpack.c.l.b16 %v51
    %v1741 = vunpack.c.h.b16 %v51
    %v1742 = vunpack.c.l.b16 %v52
    %v1743 = vunpack.c.h.b16 %v52
    %v1744 = vunpack.c.l.b16 %v53
    %v1745 = vunpack.c.l.b16 %v54
    %v1746 = vunpack.c.h.b16 %v54
    %v1747 = vunpack.c.l.b16 %v55
    %v1748 = vunpack.c.h.b16 %v55
    %v1749 = vunpack.c.l.b16 %v56
    %v1750 = vunpack.c.l.b16 %v57
    %v1751 = vunpack.c.h.b16 %v57
    %v1752 = vunpack.c.l.b16 %v58
    %v1753 = vunpack.c.h.b16 %v58
    %v1754 = vunpack.c.l.b16 %v59
    %v1755 = vunpack.c.l.b16 %v60
    %v1756 = vunpack.c.h.b16 %v60
    %v1757 = vunpack.c.l.b16 %v61
    %v1758 = vunpack.c.h.b16 %v61
    %v1759 = vunpack.c.l.b16 %v62
    %v1760 = vunpack.c.l.b16 %v63
    %v1761 = vunpack.c.h.b16 %v63
    %v1762 = vunpack.c.l.b16 %v64
    %v1763 = vunpack.c.h.b16 %v64
    %v1764 = vunpack.c.l.b16 %v65
    %v1765 = vunpack.c.l.b16 %v66
    %v1766 = vunpack.c.h.b16 %v66
    %v1767 = vunpack.c.l.b16 %v67
    %v1768 = vunpack.c.h.b16 %v67
    %v1769 = vunpack.c.l.b16 %v68
    %v1770 = vunpack.c.l.b16 %v69
    %v1771 = vunpack.c.h.b16 %v69
    %v1772 = vunpack.c.l.b16 %v70
    %v1773 = vunpack.c.h.b16 %v70
    %v1774 = vunpack.c.l.b16 %v71
    %v1775 = vunpack.c.l.b16 %v72
    %v1776 = vunpack.c.h.b16 %v72
    %v1777 = vunpack.c.l.b16 %v73
    %v1778 = vunpack.c.h.b16 %v73
    %v1779 = vunpack.c.l.b16 %v74
    %v1780 = vunpack.c.l.b16 %v75
    %v1781 = vunpack.c.h.b16 %v75
    %v1782 = vunpack.c.l.b16 %v76
    %v1783 = vunpack.c.h.b16 %v76
    %v1784 = vunpack.c.l.b16 %v77
    %v1785 = vunpack.c.l.b16 %v78
    %v1786 = vunpack.c.h.b16 %v78
    %v1787 = vunpack.c.l.b16 %v79
    %v1788 = vunpack.c.h.b16 %v79
    %v1789 = vunpack.c.l.b16 %v80
    %v1790 = vunpack.c.l.b16 %v81
    %v1791 = vunpack.c.h.b16 %v81
    %v1792 = vunpack.c.l.b16 %v82
    %v1793 = vunpack.c.h.b16 %v82
    %v1794 = vunpack.c.l.b16 %v83
    %v1795 = vunpack.c.l.b16 %v84
    %v1796 = vunpack.c.h.b16 %v84
    %v1797 = vunpack.c.l.b16 %v85
    %v1798 = vunpack.c.h.b16 %v85
    %v1799 = vunpack.c.l.b16 %v86
    %v1800 = vunpack.c.l.b16 %v87
    %v1801 = vunpack.c.h.b16 %v87
    %v1802 = vunpack.c.l.b16 %v88
    %v1803 = vunpack.c.h.b16 %v88
    %v1804 = vunpack.c.l.b16 %v89
    %v1805 = vunpack.c.l.b16 %v90
    %v1806 = vunpack.c.h.b16 %v90
    %v1807 = vunpack.c.l.b16 %v91
    %v1808 = vunpack.c.h.b16 %v91
    %v1809 = vunpack.c.l.b16 %v92
    %v1810 = vunpack.c.l.b16 %v93
    %v1811 = vunpack.c.h.b16 %v93
    %v1812 = vunpack.c.l.b16 %v94
    %v1813 = vunpack.c.h.b16 %v94
    %v1814 = vunpack.c.l.b16 %v95
    %v1815 = vunpack.c.l.b16 %v96
    %v1816 = vunpack.c.h.b16 %v96
    %v1817 = vunpack.c.l.b16 %v97
    %v1818 = vunpack.c.h.b16 %v97
    %v1819 = vunpack.c.l.b16 %v98
    %v1820 = vunpack.c.l.b16 %v99
    %v1821 = vunpack.c.h.b16 %v99
    %v1822 = vunpack.c.l.b16 %v100
    %v1823 = vunpack.c.h.b16 %v100
    %v1824 = vunpack.c.l.b16 %v101
    %v1825 = vunpack.c.l.b16 %v102
    %v1826 = vunpack.c.h.b16 %v102
    %v1827 = vunpack.c.l.b16 %v103
    %v1828 = vunpack.c.h.b16 %v103
    %v1829 = vunpack.c.l.b16 %v104
    %v1830 = vunpack.c.l.b16 %v105
    %v1831 = vunpack.c.h.b16 %v105
    %v1832 = vunpack.c.l.b16 %v106
    %v1833 = vunpack.c.h.b16 %v106
    %v1834 = vunpack.c.l.b16 %v107
    %v1835 = vunpack.c.l.b16 %v108
    %v1836 = vunpack.c.h.b16 %v108
    %v1837 = vunpack.c.l.b16 %v109
    %v1838 = vunpack.c.h.b16 %v109
    %v1839 = vunpack.c.l.b16 %v110
    %v1840 = vunpack.c.l.b16 %v111
    %v1841 = vunpack.c.h.b16 %v111
    %v1842 = vunpack.c.l.b16 %v112
    %v1843 = vunpack.c.h.b16 %v112
    %v1844 = vunpack.c.l.b16 %v113
    %v1845 = vunpack.c.l.b16 %v114
    %v1846 = vunpack.c.h.b16 %v114
    %v1847 = vunpack.c.l.b16 %v115
    %v1848 = vunpack.c.h.b16 %v115
    %v1849 = vunpack.c.l.b16 %v116
    %v1850 = vunpack.c.l.b16 %v117
    %v1851 = vunpack.c.h.b16 %v117
    %v1852 = vunpack.c.l.b16 %v118
    %v1853 = vunpack.c.h.b16 %v118
    %v1854 = vunpack.c.l.b16 %v119
    %v1855 = vunpack.c.l.b16 %v120
    %v1856 = vunpack.c.h.b16 %v120
    %v1857 = vunpack.c.l.b16 %v121
    %v1858 = vunpack.c.h.b16 %v121
    %v1859 = vunpack.c.l.b16 %v122
    %v1860 = vunpack.c.l.b16 %v123
    %v1861 = vunpack.c.h.b16 %v123
    %v1862 = vunpack.c.l.b16 %v124
    %v1863 = vunpack.c.h.b16 %v124
    %v1864 = vunpack.c.l.b16 %v125
    %v1865 = vunpack.c.l.b16 %v126
    %v1866 = vunpack.c.h.b16 %v126
    %v1867 = vunpack.c.l.b16 %v127
    %v1868 = vunpack.c.h.b16 %v127
    %v1869 = vunpack.c.l.b16 %v128
    %v1870 = vunpack.c.l.b16 %v129
    %v1871 = vunpack.c.h.b16 %v129
    %v1872 = vunpack.c.l.b16 %v130
    %v1873 = vunpack.c.h.b16 %v130
    %v1874 = vunpack.c.l.b16 %v131
    %v1875 = vunpack.c.l.b16 %v132
    %v1876 = vunpack.c.h.b16 %v132
    %v1877 = vunpack.c.l.b16 %v133
    %v1878 = vunpack.c.h.b16 %v133
    %v1879 = vunpack.c.l.b16 %v134
    %v1880 = vunpack.c.l.b16 %v135
    %v1881 = vunpack.c.h.b16 %v135
    %v1882 = vunpack.c.l.b16 %v136
    %v1883 = vunpack.c.h.b16 %v136
    %v1884 = vunpack.c.l.b16 %v137
    %v1885 = vunpack.c.l.b16 %v138
    %v1886 = vunpack.c.h.b16 %v138
    %v1887 = vunpack.c.l.b16 %v139
    %v1888 = vunpack.c.h.b16 %v139
    %v1889 = vunpack.c.l.b16 %v140
    %v1890 = vunpack.c.l.b16 %v141
    %v1891 = vunpack.c.h.b16 %v141
    %v1892 = vunpack.c.l.b16 %v142
    %v1893 = vunpack.c.h.b16 %v142
    %v1894 = vunpack.c.l.b16 %v143
    %v1895 = vunpack.c.l.b16 %v144
    %v1896 = vunpack.c.h.b16 %v144
    %v1897 = vunpack.c.l.b16 %v145
    %v1898 = vunpack.c.h.b16 %v145
    %v1899 = vunpack.c.l.b16 %v146
    %v1900 = vunpack.c.l.b16 %v147
    %v1901 = vunpack.c.h.b16 %v147
    %v1902 = vunpack.c.l.b16 %v148
    %v1903 = vunpack.c.h.b16 %v148
    %v1904 = vunpack.c.l.b16 %v149
    %v1905 = vunpack.c.l.b16 %v150
    %v1906 = vunpack.c.h.b16 %v150
    %v1907 = vunpack.c.l.b16 %v151
    %v1908 = vunpack.c.h.b16 %v151
    %v1909 = vunpack.c.l.b16 %v152
    %v1910 = vunpack.c.l.b16 %v153
    %v1911 = vunpack.c.h.b16 %v153
    %v1912 = vunpack.c.l.b16 %v154
    %v1913 = vunpack.c.h.b16 %v154
    %v1914 = vunpack.c.l.b16 %v155
    %v1915 = vunpack.c.l.b16 %v156
    %v1916 = vunpack.c.h.b16 %v156
    %v1917 = vunpack.c.l.b16 %v157
    %v1918 = vunpack.c.h.b16 %v157
    %v1919 = vunpack.c.l.b16 %v158
    %v1920 = vunpack.c.l.b16 %v159
    %v1921 = vunpack.c.h.b16 %v159
    %v1922 = vunpack.c.l.b16 %v160
    %v1923 = vunpack.c.h.b16 %v160
    %v1924 = vunpack.c.l.b16 %v161
    %v1925 = vunpack.c.l.b16 %v162
    %v1926 = vunpack.c.h.b16 %v162
    %v1927 = vunpack.c.l.b16 %v163
    %v1928 = vunpack.c.h.b16 %v163
    %v1929 = vunpack.c.l.b16 %v164
    %v1930 = vunpack.c.l.b16 %v165
    %v1931 = vunpack.c.h.b16 %v165
    %v1932 = vunpack.c.l.b16 %v166
    %v1933 = vunpack.c.h.b16 %v166
    %v1934 = vunpack.c.l.b16 %v167
    %v1935 = vunpack.c.l.b16 %v168
    %v1936 = vunpack.c.h.b16 %v168
    %v1937 = vunpack.c.l.b16 %v169
    %v1938 = vunpack.c.h.b16 %v169
    %v1939 = vunpack.c.l.b16 %v170
    %v1940 = vunpack.c.l.b16 %v171
    %v1941 = vunpack.c.h.b16 %v171
    %v1942 = vunpack.c.l.b16 %v172
    %v1943 = vunpack.c.h.b16 %v172
    %v1944 = vunpack.c.l.b16 %v173
    %v1945 = vunpack.c.l.b16 %v174
    %v1946 = vunpack.c.h.b16 %v174
    %v1947 = vunpack.c.l.b16 %v175
    %v1948 = vunpack.c.h.b16 %v175
    %v1949 = vunpack.c.l.b16 %v176
    %v1950 = vunpack.c.l.b16 %v177
    %v1951 = vunpack.c.h.b16 %v177
    %v1952 = vunpack.c.l.b16 %v178
    %v1953 = vunpack.c.h.b16 %v178
    %v1954 = vunpack.c.l.b16 %v179
    %v1955 = vunpack.c.l.b16 %v180
    %v1956 = vunpack.c.h.b16 %v180
    %v1957 = vunpack.c.l.b16 %v181
    %v1958 = vunpack.c.h.b16 %v181
    %v1959 = vunpack.c.l.b16 %v182
    %v1960 = vunpack.c.l.b16 %v183
    %v1961 = vunpack.c.h.b16 %v183
    %v1962 = vunpack.c.l.b16 %v184
    %v1963 = vunpack.c.h.b16 %v184
    %v1964 = vunpack.c.l.b16 %v185
    %v1965 = vunpack.c.l.b16 %v186
    %v1966 = vunpack.c.h.b16 %v186
    %v1967 = vunpack.c.l.b16 %v187
    %v1968 = vunpack.c.h.b16 %v187
    %v1969 = vunpack.c.l.b16 %v188
    %v1970 = vunpack.c.l.b16 %v189
    %v1971 = vunpack.c.h.b16 %v189
    %v1972 = vunpack.c.l.b16 %v190
    %v1973 = vunpack.c.h.b16 %v190
    %v1974 = vunpack.c.l.b16 %v191
    %v1975 = vunpack.c.l.b16 %v192
    %v1976 = vunpack.c.h.b16 %v192
    %v1977 = vunpack.c.l.b16 %v193
    %v1978 = vunpack.c.h.b16 %v193
    %v1979 = vunpack.c.l.b16 %v194
    %v1980 = vunpack.c.l.b16 %v195
    %v1981 = vunpack.c.h.b16 %v195
    %v1982 = vunpack.c.l.b16 %v196
    %v1983 = vunpack.c.h.b16 %v196
    %v1984 = vunpack.c.l.b16 %v197
    %v1985 = vunpack.c.l.b16 %v198
    %v1986 = vunpack.c.h.b16 %v198
    %v1987 = vunpack.c.l.b16 %v199
    %v1988 = vunpack.c.h.b16 %v199
    %v1989 = vunpack.c.l.b16 %v200
    %v1990 = vunpack.c.l.b16 %v201
    %v1991 = vunpack.c.h.b16 %v201
    %v1992 = vunpack.c.l.b16 %v202
    %v1993 = vunpack.c.h.b16 %v202
    %v1994 = vunpack.c.l.b16 %v203
    %v1995 = vunpack.c.l.b16 %v204
    %v1996 = vunpack.c.h.b16 %v204
    %v1997 = vunpack.c.l.b16 %v205
    %v1998 = vunpack.c.h.b16 %v205
    %v1999 = vunpack.c.l.b16 %v206
    %v2000 = vunpack.c.l.b16 %v207
    %v2001 = vunpack.c.h.b16 %v207
    %v2002 = vunpack.c.l.b16 %v208
    %v2003 = vunpack.c.h.b16 %v208
    %v2004 = vunpack.c.l.b16 %v209
    %v2005 = vunpack.c.l.b16 %v210
    %v2006 = vunpack.c.h.b16 %v210
    %v2007 = vunpack.c.l.b16 %v211
    %v2008 = vunpack.c.h.b16 %v211
    %v2009 = vunpack.c.l.b16 %v212
    %v2010 = vunpack.c.l.b16 %v213
    %v2011 = vunpack.c.h.b16 %v213
    %v2012 = vunpack.c.l.b16 %v214
    %v2013 = vunpack.c.h.b16 %v214
    %v2014 = vunpack.c.l.b16 %v215
    %v2015 = vunpack.c.l.b16 %v216
    %v2016 = vunpack.c.h.b16 %v216
    %v2017 = vunpack.c.l.b16 %v217
    %v2018 = vunpack.c.h.b16 %v217
    %v2019 = vunpack.c.l.b16 %v218
    %v2020 = vunpack.c.l.b16 %v219
    %v2021 = vunpack.c.h.b16 %v219
    %v2022 = vunpack.c.l.b16 %v220
    %v2023 = vunpack.c.h.b16 %v220
    %v2024 = vunpack.c.l.b16 %v221
    %v2025 = vunpack.c.l.b16 %v222
    %v2026 = vunpack.c.h.b16 %v222
    %v2027 = vunpack.c.l.b16 %v223
    %v2028 = vunpack.c.h.b16 %v223
    %v2029 = vunpack.c.l.b16 %v224
    %v2030 = vunpack.c.l.b16 %v225
    %v2031 = vunpack.c.h.b16 %v225
    %v2032 = vunpack.c.l.b16 %v226
    %v2033 = vunpack.c.h.b16 %v226
    %v2034 = vunpack.c.l.b16 %v227
    %v2035 = vunpack.c.l.b16 %v228
    %v2036 = vunpack.c.h.b16 %v228
    %v2037 = vunpack.c.l.b16 %v229
    %v2038 = vunpack.c.h.b16 %v229
    %v2039 = vunpack.c.l.b16 %v230
    %v2040 = vunpack.c.l.b16 %v231
    %v2041 = vunpack.c.h.b16 %v231
    %v2042 = vunpack.c.l.b16 %v232
    %v2043 = vunpack.c.h.b16 %v232
    %v2044 = vunpack.c.l.b16 %v233
    %v2045 = vunpack.c.l.b16 %v234
    %v2046 = vunpack.c.h.b16 %v234
    %v2047 = vunpack.c.l.b16 %v235
    %v2048 = vunpack.c.h.b16 %v235
    %v2049 = vunpack.c.l.b16 %v236
    %v2050 = vunpack.c.l.b16 %v237
    %v2051 = vunpack.c.h.b16 %v237
    %v2052 = vunpack.c.l.b16 %v238
    %v2053 = vunpack.c.h.b16 %v238
    %v2054 = vunpack.c.l.b16 %v239
    %v2055 = vunpack.c.l.b16 %v240
    %v2056 = vunpack.c.h.b16 %v240
    %v2057 = vunpack.c.l.b16 %v241
    %v2058 = vunpack.c.h.b16 %v241
    %v2059 = vunpack.c.l.b16 %v242
    %v2060 = vunpack.c.l.b16 %v243
    %v2061 = vunpack.c.h.b16 %v243
    %v2062 = vunpack.c.l.b16 %v244
    %v2063 = vunpack.c.h.b16 %v244
    %v2064 = vunpack.c.l.b16 %v245
    %v2065 = vunpack.c.l.b16 %v246
    %v2066 = vunpack.c.h.b16 %v246
    %v2067 = vunpack.c.l.b16 %v247
    %v2068 = vunpack.c.h.b16 %v247
    %v2069 = vunpack.c.l.b16 %v248
    %v2070 = vunpack.c.l.b16 %v249
    %v2071 = vunpack.c.h.b16 %v249
    %v2072 = vunpack.c.l.b16 %v250
    %v2073 = vunpack.c.h.b16 %v250
    %v2074 = vunpack.c.l.b16 %v251
    %v2075 = vunpack.c.l.b16 %v252
    %v2076 = vunpack.c.h.b16 %v252
    %v2077 = vunpack.c.l.b16 %v253
    %v2078 = vunpack.c.h.b16 %v253
    %v2079 = vunpack.c.l.b16 %v254
    %v2080 = vunpack.c.l.b16 %v255
    %v2081 = vunpack.c.h.b16 %v255
    %v2082 = vunpack.c.l.b16 %v256
    %v2083 = vunpack.c.h.b16 %v256
    %v2084 = vunpack.c.l.b16 %v257
    %v2085 = vunpack.c.l.b16 %v258
    %v2086 = vunpack.c.h.b16 %v258
    %v2087 = vunpack.c.l.b16 %v259
    %v2088 = vunpack.c.h.b16 %v259
    %v2089 = vunpack.c.l.b16 %v260
    %v2090 = vunpack.c.l.b16 %v261
    %v2091 = vunpack.c.h.b16 %v261
    %v2092 = vunpack.c.l.b16 %v262
    %v2093 = vunpack.c.h.b16 %v262
    %v2094 = vunpack.c.l.b16 %v263
    %v2095 = vunpack.c.l.b16 %v264
    %v2096 = vunpack.c.h.b16 %v264
    %v2097 = vunpack.c.l.b16 %v265
    %v2098 = vunpack.c.h.b16 %v265
    %v2099 = vunpack.c.l.b16 %v266
    %v2100 = vunpack.c.l.b16 %v267
    %v2101 = vunpack.c.h.b16 %v267
    %v2102 = vunpack.c.l.b16 %v268
    %v2103 = vunpack.c.h.b16 %v268
    %v2104 = vunpack.c.l.b16 %v269
    %v2105 = vunpack.c.l.b16 %v270
    %v2106 = vunpack.c.h.b16 %v270
    %v2107 = vunpack.c.l.b16 %v271
    %v2108 = vunpack.c.h.b16 %v271
    %v2109 = vunpack.c.l.b16 %v272
    %v2110 = vunpack.c.l.b16 %v273
    %v2111 = vunpack.c.h.b16 %v273
    %v2112 = vunpack.c.l.b16 %v274
    %v2113 = vunpack.c.h.b16 %v274
    %v2114 = vunpack.c.l.b16 %v275
    %v2115 = vunpack.c.l.b16 %v276
    %v2116 = vunpack.c.h.b16 %v276
    %v2117 = vunpack.c.l.b16 %v277
    %v2118 = vunpack.c.h.b16 %v277
    %v2119 = vunpack.c.l.b16 %v278
    %v2120 = vunpack.c.l.b16 %v279
    %v2121 = vunpack.c.h.b16 %v279
    %v2122 = vunpack.c.l.b16 %v280
    %v2123 = vunpack.c.h.b16 %v280
    %v2124 = vunpack.c.l.b16 %v281
    %v2125 = vunpack.c.l.b16 %v282
    %v2126 = vunpack.c.h.b16 %v282
    %v2127 = vunpack.c.l.b16 %v283
    %v2128 = vunpack.c.h.b16 %v283
    %v2129 = vunpack.c.l.b16 %v284
    %v2130 = vunpack.c.l.b16 %v285
    %v2131 = vunpack.c.h.b16 %v285
    %v2132 = vunpack.c.l.b16 %v286
    %v2133 = vunpack.c.h.b16 %v286
    %v2134 = vunpack.c.l.b16 %v287
    %v2135 = vunpack.c.l.b16 %v288
    %v2136 = vunpack.c.h.b16 %v288
    %v2137 = vunpack.c.l.b16 %v289
    %v2138 = vunpack.c.h.b16 %v289
    %v2139 = vunpack.c.l.b16 %v290
    %v2140 = vunpack.c.l.b16 %v291
    %v2141 = vunpack.c.h.b16 %v291
    %v2142 = vunpack.c.l.b16 %v292
    %v2143 = vunpack.c.h.b16 %v292
    %v2144 = vunpack.c.l.b16 %v293
    %v2145 = vunpack.c.l.b16 %v294
    %v2146 = vunpack.c.h.b16 %v294
    %v2147 = vunpack.c.l.b16 %v295
    %v2148 = vunpack.c.h.b16 %v295
    %v2149 = vunpack.c.l.b16 %v296
    %v2150 = vunpack.c.l.b16 %v297
    %v2151 = vunpack.c.h.b16 %v297
    %v2152 = vunpack.c.l.b16 %v298
    %v2153 = vunpack.c.h.b16 %v298
    %v2154 = vunpack.c.l.b16 %v299
    %v2155 = vunpack.c.l.b16 %v300
    %v2156 = vunpack.c.h.b16 %v300
    %v2157 = vunpack.c.l.b16 %v301
    %v2158 = vunpack.c.h.b16 %v301
    %v2159 = vunpack.c.l.b16 %v302
    %v2160 = vunpack.c.l.b16 %v303
    %v2161 = vunpack.c.h.b16 %v303
    %v2162 = vunpack.c.l.b16 %v304
    %v2163 = vunpack.c.h.b16 %v304
    %v2164 = vunpack.c.l.b16 %v305
    %v2165 = vunpack.c.l.b16 %v306
    %v2166 = vunpack.c.h.b16 %v306
    %v2167 = vunpack.c.l.b16 %v307
    %v2168 = vunpack.c.h.b16 %v307
    %v2169 = vunpack.c.l.b16 %v308
    %v2170 = vunpack.c.l.b16 %v309
    %v2171 = vunpack.c.h.b16 %v309
    %v2172 = vunpack.c.l.b16 %v310
    %v2173 = vunpack.c.h.b16 %v310
    %v2174 = vunpack.c.l.b16 %v311
    %v2175 = vunpack.c.l.b16 %v312
    %v2176 = vunpack.c.h.b16 %v312
    %v2177 = vunpack.c.l.b16 %v313
    %v2178 = vunpack.c.h.b16 %v313
    %v2179 = vunpack.c.l.b16 %v314
    %v2180 = vunpack.c.l.b16 %v315
    %v2181 = vunpack.c.h.b16 %v315
    %v2182 = vunpack.c.l.b16 %v316
    %v2183 = vunpack.c.h.b16 %v316
    %v2184 = vunpack.c.l.b16 %v317
    %v2185 = vunpack.c.l.b16 %v318
    %v2186 = vunpack.c.h.b16 %v318
    %v2187 = vunpack.c.l.b16 %v319
    %v2188 = vunpack.c.h.b16 %v319
    %v2189 = vunpack.c.l.b16 %v320
    %v2190 = vunpack.c.l.b16 %v321
    %v2191 = vunpack.c.h.b16 %v321
    %v2192 = vunpack.c.l.b16 %v322
    %v2193 = vunpack.c.h.b16 %v322
    %v2194 = vunpack.c.l.b16 %v323
    %v2195 = vunpack.c.l.b16 %v324
    %v2196 = vunpack.c.h.b16 %v324
    %v2197 = vunpack.c.l.b16 %v325
    %v2198 = vunpack.c.h.b16 %v325
    %v2199 = vunpack.c.l.b16 %v326
    %v2200 = vunpack.c.l.b16 %v327
    %v2201 = vunpack.c.h.b16 %v327
    %v2202 = vunpack.c.l.b16 %v328
    %v2203 = vunpack.c.h.b16 %v328
    %v2204 = vunpack.c.l.b16 %v329
    %v2205 = vunpack.c.l.b16 %v330
    %v2206 = vunpack.c.h.b16 %v330
    %v2207 = vunpack.c.l.b16 %v331
    %v2208 = vunpack.c.h.b16 %v331
    %v2209 = vunpack.c.l.b16 %v332
    %v2210 = vunpack.c.l.b16 %v333
    %v2211 = vunpack.c.h.b16 %v333
    %v2212 = vunpack.c.l.b16 %v334
    %v2213 = vunpack.c.h.b16 %v334
    %v2214 = vunpack.c.l.b16 %v335
    %v2215 = vunpack.c.l.b16 %v336
    %v2216 = vunpack.c.h.b16 %v336
    %v2217 = vunpack.c.l.b16 %v337
    %v2218 = vunpack.c.h.b16 %v337
    %v2219 = vunpack.c.l.b16 %v338
    %v2220 = vunpack.c.l.b16 %v339
    %v2221 = vunpack.c.h.b16 %v339
    %v2222 = vunpack.c.l.b16 %v340
    %v2223 = vunpack.c.h.b16 %v340
    %v2224 = vunpack.c.l.b16 %v341
    %v2225 = vunpack.c.l.b16 %v342
    %v2226 = vunpack.c.h.b16 %v342
    %v2227 = vunpack.c.l.b16 %v343
    %v2228 = vunpack.c.h.b16 %v343
    %v2229 = vunpack.c.l.b16 %v344
    %v2230 = vunpack.c.l.b16 %v345
    %v2231 = vunpack.c.h.b16 %v345
    %v2232 = vunpack.c.l.b16 %v346
    %v2233 = vunpack.c.h.b16 %v346
    %v2234 = vunpack.c.l.b16 %v347
    %v2235 = vunpack.c.l.b16 %v348
    %v2236 = vunpack.c.h.b16 %v348
    %v2237 = vunpack.c.l.b16 %v349
    %v2238 = vunpack.c.h.b16 %v349
    %v2239 = vunpack.c.l.b16 %v350
    %v2240 = vunpack.c.l.b16 %v351
    %v2241 = vunpack.c.h.b16 %v351
    %v2242 = vunpack.c.l.b16 %v352
    %v2243 = vunpack.c.h.b16 %v352
    %v2244 = vunpack.c.l.b16 %v353
    %v2245 = vunpack.c.l.b16 %v354
    %v2246 = vunpack.c.h.b16 %v354
    %v2247 = vunpack.c.l.b16 %v355
    %v2248 = vunpack.c.h.b16 %v355
    %v2249 = vunpack.c.l.b16 %v356
    %v2250 = vunpack.c.l.b16 %v357
    %v2251 = vunpack.c.h.b16 %v357
    %v2252 = vunpack.c.l.b16 %v358
    %v2253 = vunpack.c.h.b16 %v358
    %v2254 = vunpack.c.l.b16 %v359
    %v2255 = vunpack.c.l.b16 %v360
    %v2256 = vunpack.c.h.b16 %v360
    %v2257 = vunpack.c.l.b16 %v361
    %v2258 = vunpack.c.h.b16 %v361
    %v2259 = vunpack.c.l.b16 %v362
    %v2260 = vunpack.c.l.b16 %v363
    %v2261 = vunpack.c.h.b16 %v363
    %v2262 = vunpack.c.l.b16 %v364
    %v2263 = vunpack.c.h.b16 %v364
    %v2264 = vunpack.c.l.b16 %v365
    %v2265 = vunpack.c.l.b16 %v366
    %v2266 = vunpack.c.h.b16 %v366
    %v2267 = vunpack.c.l.b16 %v367
    %v2268 = vunpack.c.h.b16 %v367
    %v2269 = vunpack.c.l.b16 %v368
    %v2270 = vunpack.c.l.b16 %v369
    %v2271 = vunpack.c.h.b16 %v369
    %v2272 = vunpack.c.l.b16 %v370
    %v2273 = vunpack.c.h.b16 %v370
    %v2274 = vunpack.c.l.b16 %v371
    %v2275 = vunpack.c.l.b16 %v372
    %v2276 = vunpack.c.h.b16 %v372
    %v2277 = vunpack.c.l.b16 %v373
    %v2278 = vunpack.c.h.b16 %v373
    %v2279 = vunpack.c.l.b16 %v374
    %v2280 = vunpack.c.l.b16 %v375
    %v2281 = vunpack.c.h.b16 %v375
    %v2282 = vunpack.c.l.b16 %v376
    %v2283 = vunpack.c.h.b16 %v376
    %v2284 = vunpack.c.l.b16 %v377
    %v2285 = vunpack.c.l.b16 %v378
    %v2286 = vunpack.c.h.b16 %v378
    %v2287 = vunpack.c.l.b16 %v379
    %v2288 = vunpack.c.h.b16 %v379
    %v2289 = vunpack.c.l.b16 %v380
    %v2290 = vunpack.c.l.b16 %v381
    %v2291 = vunpack.c.h.b16 %v381
    %v2292 = vunpack.c.l.b16 %v382
    %v2293 = vunpack.c.h.b16 %v382
    %v2294 = vunpack.c.l.b16 %v383
    %v2295 = vunpack.c.l.b16 %v384
    %v2296 = vunpack.c.h.b16 %v384
    %v2297 = vunpack.c.l.b16 %v385
    %v2298 = vunpack.c.h.b16 %v385
    %v2299 = vunpack.c.l.b16 %v386
    %v2300 = vunpack.c.l.b16 %v387
    %v2301 = vunpack.c.h.b16 %v387
    %v2302 = vunpack.c.l.b16 %v388
    %v2303 = vunpack.c.h.b16 %v388
    %v2304 = vunpack.c.l.b16 %v389
    %v2305 = vunpack.c.l.b16 %v390
    %v2306 = vunpack.c.h.b16 %v390
    %v2307 = vunpack.c.l.b16 %v391
    %v2308 = vunpack.c.h.b16 %v391
    %v2309 = vunpack.c.l.b16 %v392
    %v2310 = vunpack.c.l.b16 %v393
    %v2311 = vunpack.c.h.b16 %v393
    %v2312 = vunpack.c.l.b16 %v394
    %v2313 = vunpack.c.h.b16 %v394
    %v2314 = vunpack.c.l.b16 %v395
    %v2315 = vunpack.c.l.b16 %v396
    %v2316 = vunpack.c.h.b16 %v396
    %v2317 = vunpack.c.l.b16 %v397
    %v2318 = vunpack.c.h.b16 %v397
    %v2319 = vunpack.c.l.b16 %v398
    %v2320 = vunpack.c.l.b16 %v399
    %v2321 = vunpack.c.h.b16 %v399
    %v2322 = vunpack.c.l.b16 %v400
    %v2323 = vunpack.c.h.b16 %v400
    %v2324 = vunpack.c.l.b16 %v401
    %v2325 = vunpack.c.l.b16 %v402
    %v2326 = vunpack.c.h.b16 %v402
    %v2327 = vunpack.c.l.b16 %v403
    %v2328 = vunpack.c.h.b16 %v403
    %v2329 = vunpack.c.l.b16 %v404
    %v2330 = vunpack.c.l.b16 %v405
    %v2331 = vunpack.c.h.b16 %v405
    %v2332 = vunpack.c.l.b16 %v406
    %v2333 = vunpack.c.h.b16 %v406
    %v2334 = vunpack.c.l.b16 %v407
    %v2335 = vunpack.c.l.b16 %v408
    %v2336 = vunpack.c.h.b16 %v408
    %v2337 = vunpack.c.l.b16 %v409
    %v2338 = vunpack.c.h.b16 %v409
    %v2339 = vunpack.c.l.b16 %v410
    %v2340 = vunpack.c.l.b16 %v411
    %v2341 = vunpack.c.h.b16 %v411
    %v2342 = vunpack.c.l.b16 %v412
    %v2343 = vunpack.c.h.b16 %v412
    %v2344 = vunpack.c.l.b16 %v413
    %v2345 = vunpack.c.l.b16 %v414
    %v2346 = vunpack.c.h.b16 %v414
    %v2347 = vunpack.c.l.b16 %v415
    %v2348 = vunpack.c.h.b16 %v415
    %v2349 = vunpack.c.l.b16 %v416
    %v2350 = vunpack.c.l.b16 %v417
    %v2351 = vunpack.c.h.b16 %v417
    %v2352 = vunpack.c.l.b16 %v418
    %v2353 = vunpack.c.h.b16 %v418
    %v2354 = vunpack.c.l.b16 %v419
    %v2355 = vunpack.c.l.b16 %v420
    %v2356 = vunpack.c.h.b16 %v420
    %v2357 = vunpack.c.l.b16 %v421
    %v2358 = vunpack.c.h.b16 %v421
    %v2359 = vunpack.c.l.b16 %v422
    %v2360 = vunpack.c.l.b16 %v423
    %v2361 = vunpack.c.h.b16 %v423
    %v2362 = vunpack.c.l.b16 %v424
    %v2363 = vunpack.c.h.b16 %v424
    %v2364 = vunpack.c.l.b16 %v425
    %v2365 = vunpack.c.l.b16 %v426
    %v2366 = vunpack.c.h.b16 %v426
    %v2367 = vunpack.c.l.b16 %v427
    %v2368 = vunpack.c.h.b16 %v427
    %v2369 = vunpack.c.l.b16 %v428
    %v2370 = vunpack.c.l.b16 %v429
    %v2371 = vunpack.c.h.b16 %v429
    %v2372 = vunpack.c.l.b16 %v430
    %v2373 = vunpack.c.h.b16 %v430
    %v2374 = vunpack.c.l.b16 %v431
    %v2375 = vunpack.c.l.b16 %v432
    %v2376 = vunpack.c.h.b16 %v432
    %v2377 = vunpack.c.l.b16 %v433
    %v2378 = vunpack.c.h.b16 %v433
    %v2379 = vunpack.c.l.b16 %v434
    %v2380 = vunpack.c.l.b16 %v435
    %v2381 = vunpack.c.h.b16 %v435
    %v2382 = vunpack.c.l.b16 %v436
    %v2383 = vunpack.c.h.b16 %v436
    %v2384 = vunpack.c.l.b16 %v437
    %v2385 = vunpack.c.l.b16 %v438
    %v2386 = vunpack.c.h.b16 %v438
    %v2387 = vunpack.c.l.b16 %v439
    %v2388 = vunpack.c.h.b16 %v439
    %v2389 = vunpack.c.l.b16 %v440
    %v2390 = vunpack.c.l.b16 %v441
    %v2391 = vunpack.c.h.b16 %v441
    %v2392 = vunpack.c.l.b16 %v442
    %v2393 = vunpack.c.h.b16 %v442
    %v2394 = vunpack.c.l.b16 %v443
    %v2395 = vunpack.c.l.b16 %v444
    %v2396 = vunpack.c.h.b16 %v444
    %v2397 = vunpack.c.l.b16 %v445
    %v2398 = vunpack.c.h.b16 %v445
    %v2399 = vunpack.c.l.b16 %v446
    %v2400 = vunpack.c.l.b16 %v447
    %v2401 = vunpack.c.h.b16 %v447
    %v2402 = vunpack.c.l.b16 %v448
    %v2403 = vunpack.c.h.b16 %v448
    %v2404 = vunpack.c.l.b16 %v449
    %v2405 = vunpack.c.l.b16 %v450
    %v2406 = vunpack.c.h.b16 %v450
    %v2407 = vunpack.c.l.b16 %v451
    %v2408 = vunpack.c.h.b16 %v451
    %v2409 = vunpack.c.l.b16 %v452
    %v2410 = vunpack.c.l.b16 %v453
    %v2411 = vunpack.c.h.b16 %v453
    %v2412 = vunpack.c.l.b16 %v454
    %v2413 = vunpack.c.h.b16 %v454
    %v2414 = vunpack.c.l.b16 %v455
    %v2415 = vunpack.c.l.b16 %v456
    %v2416 = vunpack.c.h.b16 %v456
    %v2417 = vunpack.c.l.b16 %v457
    %v2418 = vunpack.c.h.b16 %v457
    %v2419 = vunpack.c.l.b16 %v458
    %v2420 = vunpack.c.l.b16 %v459
    %v2421 = vunpack.c.h.b16 %v459
    %v2422 = vunpack.c.l.b16 %v460
    %v2423 = vunpack.c.h.b16 %v460
    %v2424 = vunpack.c.l.b16 %v461
    %v2425 = vunpack.c.l.b16 %v462
    %v2426 = vunpack.c.h.b16 %v462
    %v2427 = vunpack.c.l.b16 %v463
    %v2428 = vunpack.c.h.b16 %v463
    %v2429 = vunpack.c.l.b16 %v464
    %v2430 = vunpack.c.l.b16 %v465
    %v2431 = vunpack.c.h.b16 %v465
    %v2432 = vunpack.c.l.b16 %v466
    %v2433 = vunpack.c.h.b16 %v466
    %v2434 = vunpack.c.l.b16 %v467
    %v2435 = vunpack.c.l.b16 %v468
    %v2436 = vunpack.c.h.b16 %v468
    %v2437 = vunpack.c.l.b16 %v469
    %v2438 = vunpack.c.h.b16 %v469
    %v2439 = vunpack.c.l.b16 %v470
    %v2440 = vunpack.c.l.b16 %v471
    %v2441 = vunpack.c.h.b16 %v471
    %v2442 = vunpack.c.l.b16 %v472
    %v2443 = vunpack.c.h.b16 %v472
    %v2444 = vunpack.c.l.b16 %v473
    %v2445 = vunpack.c.l.b16 %v474
    %v2446 = vunpack.c.h.b16 %v474
    %v2447 = vunpack.c.l.b16 %v475
    %v2448 = vunpack.c.h.b16 %v475
    %v2449 = vunpack.c.l.b16 %v476
    %v2450 = vunpack.c.l.b16 %v477
    %v2451 = vunpack.c.h.b16 %v477
    %v2452 = vunpack.c.l.b16 %v478
    %v2453 = vunpack.c.h.b16 %v478
    %v2454 = vunpack.c.l.b16 %v479
    %v2455 = vunpack.c.l.b16 %v480
    %v2456 = vunpack.c.h.b16 %v480
    %v2457 = vunpack.c.l.b16 %v481
    %v2458 = vunpack.c.h.b16 %v481
    %v2459 = vunpack.c.l.b16 %v482
    %v2460 = vunpack.c.l.b16 %v483
    %v2461 = vunpack.c.h.b16 %v483
    %v2462 = vunpack.c.l.b16 %v484
    %v2463 = vunpack.c.h.b16 %v484
    %v2464 = vunpack.c.l.b16 %v485
    %v2465 = vunpack.c.l.b16 %v486
    %v2466 = vunpack.c.h.b16 %v486
    %v2467 = vunpack.c.l.b16 %v487
    %v2468 = vunpack.c.h.b16 %v487
    %v2469 = vunpack.c.l.b16 %v488
    %v2470 = vunpack.c.l.b16 %v489
    %v2471 = vunpack.c.h.b16 %v489
    %v2472 = vunpack.c.l.b16 %v490
    %v2473 = vunpack.c.h.b16 %v490
    %v2474 = vunpack.c.l.b16 %v491
    %v2475 = vunpack.c.l.b16 %v492
    %v2476 = vunpack.c.h.b16 %v492
    %v2477 = vunpack.c.l.b16 %v493
    %v2478 = vunpack.c.h.b16 %v493
    %v2479 = vunpack.c.l.b16 %v494
    %v2480 = vunpack.c.l.b16 %v495
    %v2481 = vunpack.c.h.b16 %v495
    %v2482 = vunpack.c.l.b16 %v496
    %v2483 = vunpack.c.h.b16 %v496
    %v2484 = vunpack.c.l.b16 %v497
    %v2485 = vunpack.c.l.b16 %v498
    %v2486 = vunpack.c.h.b16 %v498
    %v2487 = vunpack.c.l.b16 %v499
    %v2488 = vunpack.c.h.b16 %v499
    %v2489 = vunpack.c.l.b16 %v500
    %v2490 = vunpack.c.l.b16 %v501
    %v2491 = vunpack.c.h.b16 %v501
    %v2492 = vunpack.c.l.b16 %v502
    %v2493 = vunpack.c.h.b16 %v502
    %v2494 = vunpack.c.l.b16 %v503
    %v2495 = vunpack.c.l.b16 %v504
    %v2496 = vunpack.c.h.b16 %v504
    %v2497 = vunpack.c.l.b16 %v505
    %v2498 = vunpack.c.h.b16 %v505
    %v2499 = vunpack.c.l.b16 %v506
    %v2500 = vunpack.c.l.b16 %v507
    %v2501 = vunpack.c.h.b16 %v507
    %v2502 = vunpack.c.l.b16 %v508
    %v2503 = vunpack.c.h.b16 %v508
    %v2504 = vunpack.c.l.b16 %v509
    %v2505 = vunpack.c.l.b16 %v510
    %v2506 = vunpack.c.h.b16 %v510
    %v2507 = vunpack.c.l.b16 %v511
    %v2508 = vunpack.c.h.b16 %v511
    %v2509 = vunpack.c.l.b16 %v512
    %v2510 = vunpack.c.l.b16 %v513
    %v2511 = vunpack.c.h.b16 %v513
    %v2512 = vunpack.c.l.b16 %v514
    %v2513 = vunpack.c.h.b16 %v514
    %v2514 = vunpack.c.l.b16 %v515
    %v2515 = vunpack.c.l.b16 %v516
    %v2516 = vunpack.c.h.b16 %v516
    %v2517 = vunpack.c.l.b16 %v517
    %v2518 = vunpack.c.h.b16 %v517
    %v2519 = vunpack.c.l.b16 %v518
    %v2520 = vunpack.c.l.b16 %v519
    %v2521 = vunpack.c.h.b16 %v519
    %v2522 = vunpack.c.l.b16 %v520
    %v2523 = vunpack.c.h.b16 %v520
    %v2524 = vunpack.c.l.b16 %v521
    %v2525 = vunpack.c.l.b16 %v522
    %v2526 = vunpack.c.h.b16 %v522
    %v2527 = vunpack.c.l.b16 %v523
    %v2528 = vunpack.c.h.b16 %v523
    %v2529 = vunpack.c.l.b16 %v524
    %v2530 = vunpack.c.l.b16 %v525
    %v2531 = vunpack.c.h.b16 %v525
    %v2532 = vunpack.c.l.b16 %v526
    %v2533 = vunpack.c.h.b16 %v526
    %v2534 = vunpack.c.l.b16 %v527
    %v2535 = vunpack.c.l.b16 %v528
    %v2536 = vunpack.c.h.b16 %v528
    %v2537 = vunpack.c.l.b16 %v529
    %v2538 = vunpack.c.h.b16 %v529
    %v2539 = vunpack.c.l.b16 %v530
    %v2540 = vunpack.c.l.b16 %v531
    %v2541 = vunpack.c.h.b16 %v531
    %v2542 = vunpack.c.l.b16 %v532
    %v2543 = vunpack.c.h.b16 %v532
    %v2544 = vunpack.c.l.b16 %v533
    %v2545 = vunpack.c.l.b16 %v534
    %v2546 = vunpack.c.h.b16 %v534
    %v2547 = vunpack.c.l.b16 %v535
    %v2548 = vunpack.c.h.b16 %v535
    %v2549 = vunpack.c.l.b16 %v536
    %v2550 = vunpack.c.l.b16 %v537
    %v2551 = vunpack.c.h.b16 %v537
    %v2552 = vunpack.c.l.b16 %v538
    %v2553 = vunpack.c.h.b16 %v538
    %v2554 = vunpack.c.l.b16 %v539
    %v2555 = vunpack.c.l.b16 %v540
    %v2556 = vunpack.c.h.b16 %v540
    %v2557 = vunpack.c.l.b16 %v541
    %v2558 = vunpack.c.h.b16 %v541
    %v2559 = vunpack.c.l.b16 %v542
    %v2560 = vunpack.c.l.b16 %v543
    %v2561 = vunpack.c.h.b16 %v543
    %v2562 = vunpack.c.l.b16 %v544
    %v2563 = vunpack.c.h.b16 %v544
    %v2564 = vunpack.c.l.b16 %v545
    %v2565 = vunpack.c.l.b16 %v546
    %v2566 = vunpack.c.h.b16 %v546
    %v2567 = vunpack.c.l.b16 %v547
    %v2568 = vunpack.c.h.b16 %v547
    %v2569 = vunpack.c.l.b16 %v548
    %v2570 = vunpack.c.l.b16 %v549
    %v2571 = vunpack.c.h.b16 %v549
    %v2572 = vunpack.c.l.b16 %v550
    %v2573 = vunpack.c.h.b16 %v550
    %v2574 = vunpack.c.l.b16 %v551
    %v2575 = vunpack.c.l.b16 %v552
    %v2576 = vunpack.c.h.b16 %v552
    %v2577 = vunpack.c.l.b16 %v553
    %v2578 = vunpack.c.h.b16 %v553
    %v2579 = vunpack.c.l.b16 %v554
    %v2580 = vunpack.c.l.b16 %v555
    %v2581 = vunpack.c.h.b16 %v555
    %v2582 = vunpack.c.l.b16 %v556
    %v2583 = vunpack.c.h.b16 %v556
    %v2584 = vunpack.c.l.b16 %v557
    %v2585 = vunpack.c.l.b16 %v558
    %v2586 = vunpack.c.h.b16 %v558
    %v2587 = vunpack.c.l.b16 %v559
    %v2588 = vunpack.c.h.b16 %v559
    %v2589 = vunpack.c.l.b16 %v560
    %v2590 = vunpack.c.l.b16 %v561
    %v2591 = vunpack.c.h.b16 %v561
    %v2592 = vunpack.c.l.b16 %v562
    %v2593 = vunpack.c.h.b16 %v562
    %v2594 = vunpack.c.l.b16 %v563
    %v2595 = vunpack.c.l.b16 %v564
    %v2596 = vunpack.c.h.b16 %v564
    %v2597 = vunpack.c.l.b16 %v565
    %v2598 = vunpack.c.h.b16 %v565
    %v2599 = vunpack.c.l.b16 %v566
    %v2600 = vunpack.c.l.b16 %v567
    %v2601 = vunpack.c.h.b16 %v567
    %v2602 = vunpack.c.l.b16 %v568
    %v2603 = vunpack.c.h.b16 %v568
    %v2604 = vunpack.c.l.b16 %v569
    %v2605 = vunpack.c.l.b16 %v570
    %v2606 = vunpack.c.h.b16 %v570
    %v2607 = vunpack.c.l.b16 %v571
    %v2608 = vunpack.c.h.b16 %v571
    %v2609 = vunpack.c.l.b16 %v572
    %v2610 = vunpack.c.l.b16 %v573
    %v2611 = vunpack.c.h.b16 %v573
    %v2612 = vunpack.c.l.b16 %v574
    %v2613 = vunpack.c.h.b16 %v574
    %v2614 = vunpack.c.l.b16 %v575
    %v2615 = vunpack.c.l.b16 %v576
    %v2616 = vunpack.c.h.b16 %v576
    %v2617 = vunpack.c.l.b16 %v577
    %v2618 = vunpack.c.h.b16 %v577
    %v2619 = vunpack.c.l.b16 %v578
    %v2620 = vunpack.c.l.b16 %v579
    %v2621 = vunpack.c.h.b16 %v579
    %v2622 = vunpack.c.l.b16 %v580
    %v2623 = vunpack.c.h.b16 %v580
    %v2624 = vunpack.c.l.b16 %v581
    %v2625 = vunpack.c.l.b16 %v582
    %v2626 = vunpack.c.h.b16 %v582
    %v2627 = vunpack.c.l.b16 %v583
    %v2628 = vunpack.c.h.b16 %v583
    %v2629 = vunpack.c.l.b16 %v584
    %v2630 = vunpack.c.l.b16 %v585
    %v2631 = vunpack.c.h.b16 %v585
    %v2632 = vunpack.c.l.b16 %v586
    %v2633 = vunpack.c.h.b16 %v586
    %v2634 = vunpack.c.l.b16 %v587
    %v2635 = vunpack.c.l.b16 %v588
    %v2636 = vunpack.c.h.b16 %v588
    %v2637 = vunpack.c.l.b16 %v589
    %v2638 = vunpack.c.h.b16 %v589
    %v2639 = vunpack.c.l.b16 %v590
    %v2640 = vunpack.c.l.b16 %v591
    %v2641 = vunpack.c.h.b16 %v591
    %v2642 = vunpack.c.l.b16 %v592
    %v2643 = vunpack.c.h.b16 %v592
    %v2644 = vunpack.c.l.b16 %v593
    %v2645 = vunpack.c.l.b16 %v594
    %v2646 = vunpack.c.h.b16 %v594
    %v2647 = vunpack.c.l.b16 %v595
    %v2648 = vunpack.c.h.b16 %v595
    %v2649 = vunpack.c.l.b16 %v596
    %v2650 = vunpack.c.l.b16 %v597
    %v2651 = vunpack.c.h.b16 %v597
    %v2652 = vunpack.c.l.b16 %v598
    %v2653 = vunpack.c.h.b16 %v598
    %v2654 = vunpack.c.l.b16 %v599
    %v2655 = vunpack.c.l.b16 %v600
    %v2656 = vunpack.c.h.b16 %v600
    %v2657 = vunpack.c.l.b16 %v601
    %v2658 = vunpack.c.h.b16 %v601
    %v2659 = vunpack.c.l.b16 %v602
    %v2660 = vunpack.c.l.b16 %v603
    %v2661 = vunpack.c.h.b16 %v603
    %v2662 = vunpack.c.l.b16 %v604
    %v2663 = vunpack.c.h.b16 %v604
    %v2664 = vunpack.c.l.b16 %v605
    %v2665 = vunpack.c.l.b16 %v606
    %v2666 = vunpack.c.h.b16 %v606
    %v2667 = vunpack.c.l.b16 %v607
    %v2668 = vunpack.c.h.b16 %v607
    %v2669 = vunpack.c.l.b16 %v608
    %v2670 = vunpack.c.l.b16 %v609
    %v2671 = vunpack.c.h.b16 %v609
    %v2672 = vunpack.c.l.b16 %v610
    %v2673 = vunpack.c.h.b16 %v610
    %v2674 = vunpack.c.l.b16 %v611
    %v2675 = vunpack.c.l.b16 %v612
    %v2676 = vunpack.c.h.b16 %v612
    %v2677 = vunpack.c.l.b16 %v613
    %v2678 = vunpack.c.h.b16 %v613
    %v2679 = vunpack.c.l.b16 %v614
    %v2680 = vunpack.c.l.b16 %v615
    %v2681 = vunpack.c.h.b16 %v615
    %v2682 = vunpack.c.l.b16 %v616
    %v2683 = vunpack.c.h.b16 %v616
    %v2684 = vunpack.c.l.b16 %v617
    %v2685 = vunpack.c.l.b16 %v618
    %v2686 = vunpack.c.h.b16 %v618
    %v2687 = vunpack.c.l.b16 %v619
    %v2688 = vunpack.c.h.b16 %v619
    %v2689 = vunpack.c.l.b16 %v620
    %v2690 = vunpack.c.l.b16 %v621
    %v2691 = vunpack.c.h.b16 %v621
    %v2692 = vunpack.c.l.b16 %v622
    %v2693 = vunpack.c.h.b16 %v622
    %v2694 = vunpack.c.l.b16 %v623
    %v2695 = vunpack.c.l.b16 %v624
    %v2696 = vunpack.c.h.b16 %v624
    %v2697 = vunpack.c.l.b16 %v625
    %v2698 = vunpack.c.h.b16 %v625
    %v2699 = vunpack.c.l.b16 %v626
    %v2700 = vunpack.c.l.b16 %v627
    %v2701 = vunpack.c.h.b16 %v627
    %v2702 = vunpack.c.l.b16 %v628
    %v2703 = vunpack.c.h.b16 %v628
    %v2704 = vunpack.c.l.b16 %v629
    %v2705 = vunpack.c.l.b16 %v630
    %v2706 = vunpack.c.h.b16 %v630
    %v2707 = vunpack.c.l.b16 %v631
    %v2708 = vunpack.c.h.b16 %v631
    %v2709 = vunpack.c.l.b16 %v632
    %v2710 = vunpack.c.l.b16 %v633
    %v2711 = vunpack.c.h.b16 %v633
    %v2712 = vunpack.c.l.b16 %v634
    %v2713 = vunpack.c.h.b16 %v634
    %v2714 = vunpack.c.l.b16 %v635
    %v2715 = vunpack.c.l.b16 %v636
    %v2716 = vunpack.c.h.b16 %v636
    %v2717 = vunpack.c.l.b16 %v637
    %v2718 = vunpack.c.h.b16 %v637
    %v2719 = vunpack.c.l.b16 %v638
    %v2720 = vunpack.c.l.b16 %v639
    %v2721 = vunpack.c.h.b16 %v639
    %v2722 = vunpack.c.l.b16 %v640
    %v2723 = vunpack.c.h.b16 %v640
    %v2724 = vunpack.c.l.b16 %v641
    %v2725 = vunpack.c.l.b16 %v642
    %v2726 = vunpack.c.h.b16 %v642
    %v2727 = vunpack.c.l.b16 %v643
    %v2728 = vunpack.c.h.b16 %v643
    %v2729 = vunpack.c.l.b16 %v644
    %v2730 = vunpack.c.l.b16 %v645
    %v2731 = vunpack.c.h.b16 %v645
    %v2732 = vunpack.c.l.b16 %v646
    %v2733 = vunpack.c.h.b16 %v646
    %v2734 = vunpack.c.l.b16 %v647
    %v2735 = vunpack.c.l.b16 %v648
    %v2736 = vunpack.c.h.b16 %v648
    %v2737 = vunpack.c.l.b16 %v649
    %v2738 = vunpack.c.h.b16 %v649
    %v2739 = vunpack.c.l.b16 %v650
    %v2740 = vunpack.c.l.b16 %v651
    %v2741 = vunpack.c.h.b16 %v651
    %v2742 = vunpack.c.l.b16 %v652
    %v2743 = vunpack.c.h.b16 %v652
    %v2744 = vunpack.c.l.b16 %v653
    %v2745 = vunpack.c.l.b16 %v654
    %v2746 = vunpack.c.h.b16 %v654
    %v2747 = vunpack.c.l.b16 %v655
    %v2748 = vunpack.c.h.b16 %v655
    %v2749 = vunpack.c.l.b16 %v656
    %v2750 = vunpack.c.l.b16 %v657
    %v2751 = vunpack.c.h.b16 %v657
    %v2752 = vunpack.c.l.b16 %v658
    %v2753 = vunpack.c.h.b16 %v658
    %v2754 = vunpack.c.l.b16 %v659
    %v2755 = vunpack.c.l.b16 %v660
    %v2756 = vunpack.c.h.b16 %v660
    %v2757 = vunpack.c.l.b16 %v661
    %v2758 = vunpack.c.h.b16 %v661
    %v2759 = vunpack.c.l.b16 %v662
    %v2760 = vunpack.c.l.b16 %v663
    %v2761 = vunpack.c.h.b16 %v663
    %v2762 = vunpack.c.l.b16 %v664
    %v2763 = vunpack.c.h.b16 %v664
    %v2764 = vunpack.c.l.b16 %v665
    %v2765 = vunpack.c.l.b16 %v666
    %v2766 = vunpack.c.h.b16 %v666
    %v2767 = vunpack.c.l.b16 %v667
    %v2768 = vunpack.c.h.b16 %v667
    %v2769 = vunpack.c.l.b16 %v668
    %v2770 = vunpack.c.l.b16 %v669
    %v2771 = vunpack.c.h.b16 %v669
    %v2772 = vunpack.c.l.b16 %v670
    %v2773 = vunpack.c.h.b16 %v670
    %v2774 = vunpack.c.l.b16 %v671
    %v2775 = vunpack.c.l.b16 %v672
    %v2776 = vunpack.c.h.b16 %v672
    %v2777 = vunpack.c.l.b16 %v673
    %v2778 = vunpack.c.h.b16 %v673
    %v2779 = vunpack.c.l.b16 %v674
    %v2780 = vunpack.c.l.b16 %v675
    %v2781 = vunpack.c.h.b16 %v675
    %v2782 = vunpack.c.l.b16 %v676
    %v2783 = vunpack.c.h.b16 %v676
    %v2784 = vunpack.c.l.b16 %v677
    %v2785 = vunpack.c.l.b16 %v678
    %v2786 = vunpack.c.h.b16 %v678
    %v2787 = vunpack.c.l.b16 %v679
    %v2788 = vunpack.c.h.b16 %v679
    %v2789 = vunpack.c.l.b16 %v680
    %v2790 = vunpack.c.l.b16 %v681
    %v2791 = vunpack.c.h.b16 %v681
    %v2792 = vunpack.c.l.b16 %v682
    %v2793 = vunpack.c.h.b16 %v682
    %v2794 = vunpack.c.l.b16 %v683
    %v2795 = vunpack.c.l.b16 %v684
    %v2796 = vunpack.c.h.b16 %v684
    %v2797 = vunpack.c.l.b16 %v685
    %v2798 = vunpack.c.h.b16 %v685
    %v2799 = vunpack.c.l.b16 %v686
    %v2800 = vunpack.c.l.b16 %v687
    %v2801 = vunpack.c.h.b16 %v687
    %v2802 = vunpack.c.l.b16 %v688
    %v2803 = vunpack.c.h.b16 %v688
    %v2804 = vunpack.c.l.b16 %v689
    %v2805 = vunpack.c.l.b16 %v690
    %v2806 = vunpack.c.h.b16 %v690
    %v2807 = vunpack.c.l.b16 %v691
    %v2808 = vunpack.c.h.b16 %v691
    %v2809 = vunpack.c.l.b16 %v692
    %v2810 = vunpack.c.l.b16 %v693
    %v2811 = vunpack.c.h.b16 %v693
    %v2812 = vunpack.c.l.b16 %v694
    %v2813 = vunpack.c.h.b16 %v694
    %v2814 = vunpack.c.l.b16 %v695
    %v2815 = vunpack.c.l.b16 %v696
    %v2816 = vunpack.c.h.b16 %v696
    %v2817 = vunpack.c.l.b16 %v697
    %v2818 = vunpack.c.h.b16 %v697
    %v2819 = vunpack.c.l.b16 %v698
    %v2820 = vunpack.c.l.b16 %v699
    %v2821 = vunpack.c.h.b16 %v699
    %v2822 = vunpack.c.l.b16 %v700
    %v2823 = vunpack.c.h.b16 %v700
    %v2824 = vunpack.c.l.b16 %v701
    %v2825 = vunpack.c.l.b16 %v702
    %v2826 = vunpack.c.h.b16 %v702
    %v2827 = vunpack.c.l.b16 %v703
    %v2828 = vunpack.c.h.b16 %v703
    %v2829 = vunpack.c.l.b16 %v704
    %v2830 = vunpack.c.l.b16 %v705
    %v2831 = vunpack.c.h.b16 %v705
    %v2832 = vunpack.c.l.b16 %v706
    %v2833 = vunpack.c.h.b16 %v706
    %v2834 = vunpack.c.l.b16 %v707
    %v2835 = vunpack.c.l.b16 %v708
    %v2836 = vunpack.c.h.b16 %v708
    %v2837 = vunpack.c.l.b16 %v709
    %v2838 = vunpack.c.h.b16 %v709
    %v2839 = vunpack.c.l.b16 %v710
    %v2840 = vunpack.c.l.b16 %v711
    %v2841 = vunpack.c.h.b16 %v711
    %v2842 = vunpack.c.l.b16 %v712
    %v2843 = vunpack.c.h.b16 %v712
    %v2844 = vunpack.c.l.b16 %v713
    %v2845 = vunpack.c.l.b16 %v714
    %v2846 = vunpack.c.h.b16 %v714
    %v2847 = vunpack.c.l.b16 %v715
    %v2848 = vunpack.c.h.b16 %v715
    %v2849 = vunpack.c.l.b16 %v716
    %v2850 = vunpack.c.l.b16 %v717
    %v2851 = vunpack.c.h.b16 %v717
    %v2852 = vunpack.c.l.b16 %v718
    %v2853 = vunpack.c.h.b16 %v718
    %v2854 = vunpack.c.l.b16 %v719
    %v2855 = vunpack.c.l.b16 %v720
    %v2856 = vunpack.c.h.b16 %v720
    %v2857 = vunpack.c.l.b16 %v721
    %v2858 = vunpack.c.h.b16 %v721
    %v2859 = vunpack.c.l.b16 %v722
    %v2860 = vunpack.c.l.b16 %v723
    %v2861 = vunpack.c.h.b16 %v723
    %v2862 = vunpack.c.l.b16 %v724
    %v2863 = vunpack.c.h.b16 %v724
    %v2864 = vunpack.c.l.b16 %v725
    %v2865 = vunpack.c.l.b16 %v726
    %v2866 = vunpack.c.h.b16 %v726
    %v2867 = vunpack.c.l.b16 %v727
    %v2868 = vunpack.c.h.b16 %v727
    %v2869 = vunpack.c.l.b16 %v728
    %v2870 = vunpack.c.l.b16 %v729
    %v2871 = vunpack.c.h.b16 %v729
    %v2872 = vunpack.c.l.b16 %v730
    %v2873 = vunpack.c.h.b16 %v730
    %v2874 = vunpack.c.l.b16 %v731
    %v2875 = vunpack.c.l.b16 %v732
    %v2876 = vunpack.c.h.b16 %v732
    %v2877 = vunpack.c.l.b16 %v733
    %v2878 = vunpack.c.h.b16 %v733
    %v2879 = vunpack.c.l.b16 %v734
    %v2880 = vunpack.c.l.b16 %v735
    %v2881 = vunpack.c.h.b16 %v735
    %v2882 = vunpack.c.l.b16 %v736
    %v2883 = vunpack.c.h.b16 %v736
    %v2884 = vunpack.c.l.b16 %v737
    %v2885 = vunpack.c.l.b16 %v738
    %v2886 = vunpack.c.h.b16 %v738
    %v2887 = vunpack.c.l.b16 %v739
    %v2888 = vunpack.c.h.b16 %v739
    %v2889 = vunpack.c.l.b16 %v740
    %v2890 = vunpack.c.l.b16 %v741
    %v2891 = vunpack.c.h.b16 %v741
    %v2892 = vunpack.c.l.b16 %v742
    %v2893 = vunpack.c.h.b16 %v742
    %v2894 = vunpack.c.l.b16 %v743
    %v2895 = vunpack.c.l.b16 %v744
    %v2896 = vunpack.c.h.b16 %v744
    %v2897 = vunpack.c.l.b16 %v745
    %v2898 = vunpack.c.h.b16 %v745
    %v2899 = vunpack.c.l.b16 %v746
    %v2900 = vunpack.c.l.b16 %v747
    %v2901 = vunpack.c.h.b16 %v747
    %v2902 = vunpack.c.l.b16 %v748
    %v2903 = vunpack.c.h.b16 %v748
    %v2904 = vunpack.c.l.b16 %v749
    %v2905 = vunpack.c.l.b16 %v750
    %v2906 = vunpack.c.h.b16 %v750
    %v2907 = vunpack.c.l.b16 %v751
    %v2908 = vunpack.c.h.b16 %v751
    %v2909 = vunpack.c.l.b16 %v752
    %v2910 = vunpack.c.l.b16 %v753
    %v2911 = vunpack.c.h.b16 %v753
    %v2912 = vunpack.c.l.b16 %v754
    %v2913 = vunpack.c.h.b16 %v754
    %v2914 = vunpack.c.l.b16 %v755
    %v2915 = vunpack.c.l.b16 %v756
    %v2916 = vunpack.c.h.b16 %v756
    %v2917 = vunpack.c.l.b16 %v757
    %v2918 = vunpack.c.h.b16 %v757
    %v2919 = vunpack.c.l.b16 %v758
    %v2920 = vunpack.c.l.b16 %v759
    %v2921 = vunpack.c.h.b16 %v759
    %v2922 = vunpack.c.l.b16 %v760
    %v2923 = vunpack.c.h.b16 %v760
    %v2924 = vunpack.c.l.b16 %v761
    %v2925 = vunpack.c.l.b16 %v762
    %v2926 = vunpack.c.h.b16 %v762
    %v2927 = vunpack.c.l.b16 %v763
    %v2928 = vunpack.c.h.b16 %v763
    %v2929 = vunpack.c.l.b16 %v764
    %v2930 = vunpack.c.l.b16 %v765
    %v2931 = vunpack.c.h.b16 %v765
    %v2932 = vunpack.c.l.b16 %v766
    %v2933 = vunpack.c.h.b16 %v766
    %v2934 = vunpack.c.l.b16 %v767
    %v2935 = vunpack.c.l.b16 %v768
    %v2936 = vunpack.c.h.b16 %v768
    %v2937 = vunpack.c.l.b16 %v769
    %v2938 = vunpack.c.h.b16 %v769
    %v2939 = vunpack.c.l.b16 %v770
    %v2940 = vunpack.c.l.b16 %v771
    %v2941 = vunpack.c.h.b16 %v771
    %v2942 = vunpack.c.l.b16 %v772
    %v2943 = vunpack.c.h.b16 %v772
    %v2944 = vunpack.c.l.b16 %v773
    %v2945 = vunpack.c.l.b16 %v774
    %v2946 = vunpack.c.h.b16 %v774
    %v2947 = vunpack.c.l.b16 %v775
    %v2948 = vunpack.c.h.b16 %v775
    %v2949 = vunpack.c.l.b16 %v776
    %v2950 = vunpack.c.l.b16 %v777
    %v2951 = vunpack.c.h.b16 %v777
    %v2952 = vunpack.c.l.b16 %v778
    %v2953 = vunpack.c.h.b16 %v778
    %v2954 = vunpack.c.l.b16 %v779
    %v2955 = vunpack.c.l.b16 %v780
    %v2956 = vunpack.c.h.b16 %v780
    %v2957 = vunpack.c.l.b16 %v781
    %v2958 = vunpack.c.h.b16 %v781
    %v2959 = vunpack.c.l.b16 %v782
    %v2960 = vunpack.c.l.b16 %v783
    %v2961 = vunpack.c.h.b16 %v783
    %v2962 = vunpack.c.l.b16 %v784
    %v2963 = vunpack.c.h.b16 %v784
    %v2964 = vunpack.c.l.b16 %v785
    %v2965 = vunpack.c.l.b16 %v786
    %v2966 = vunpack.c.h.b16 %v786
    %v2967 = vunpack.c.l.b16 %v787
    %v2968 = vunpack.c.h.b16 %v787
    %v2969 = vunpack.c.l.b16 %v788
    %v2970 = vunpack.c.l.b16 %v789
    %v2971 = vunpack.c.h.b16 %v789
    %v2972 = vunpack.c.l.b16 %v790
    %v2973 = vunpack.c.h.b16 %v790
    %v2974 = vunpack.c.l.b16 %v791
    %v2975 = vunpack.c.l.b16 %v792
    %v2976 = vunpack.c.h.b16 %v792
    %v2977 = vunpack.c.l.b16 %v793
    %v2978 = vunpack.c.h.b16 %v793
    %v2979 = vunpack.c.l.b16 %v794
    %v2980 = vunpack.c.l.b16 %v795
    %v2981 = vunpack.c.h.b16 %v795
    %v2982 = vunpack.c.l.b16 %v796
    %v2983 = vunpack.c.h.b16 %v796
    %v2984 = vunpack.c.l.b16 %v797
    %v2985 = vunpack.c.l.b16 %v798
    %v2986 = vunpack.c.h.b16 %v798
    %v2987 = vunpack.c.l.b16 %v799
    %v2988 = vunpack.c.h.b16 %v799
    %v2989 = vunpack.c.l.b16 %v800
    %v2990 = vunpack.c.l.b16 %v801
    %v2991 = vunpack.c.h.b16 %v801
    %v2992 = vunpack.c.l.b16 %v802
    %v2993 = vunpack.c.h.b16 %v802
    %v2994 = vunpack.c.l.b16 %v803
    %v2995 = vpack.c.b16 %v1720, %v1715
    %v2996 = vpack.c.b16 %v1721, %v1716
    %v2997 = vpack.c.b16 %v1722, %v1717
    %v2998 = vpack.c.b16 %v1723, %v1718
    %v2999 = vpack.c.b16 %v1724, %v1719
    %v3000 = vpack.c.b16 %v1730, %v1725
    %v3001 = vpack.c.b16 %v1731, %v1726
    %v3002 = vpack.c.b16 %v1732, %v1727
    %v3003 = vpack.c.b16 %v1733, %v1728
    %v3004 = vpack.c.b16 %v1734, %v1729
    %v3005 = vpack.c.b16 %v1740, %v1735
    %v3006 = vpack.c.b16 %v1741, %v1736
    %v3007 = vpack.c.b16 %v1742, %v1737
    %v3008 = vpack.c.b16 %v1743, %v1738
    %v3009 = vpack.c.b16 %v1744, %v1739
    %v3010 = vpack.c.b16 %v1750, %v1745
    %v3011 = vpack.c.b16 %v1751, %v1746
    %v3012 = vpack.c.b16 %v1752, %v1747
    %v3013 = vpack.c.b16 %v1753, %v1748
    %v3014 = vpack.c.b16 %v1754, %v1749
    %v3015 = vpack.c.b16 %v1760, %v1755
    %v3016 = vpack.c.b16 %v1761, %v1756
    %v3017 = vpack.c.b16 %v1762, %v1757
    %v3018 = vpack.c.b16 %v1763, %v1758
    %v3019 = vpack.c.b16 %v1764, %v1759
    %v3020 = vpack.c.b16 %v1770, %v1765
    %v3021 = vpack.c.b16 %v1771, %v1766
    %v3022 = vpack.c.b16 %v1772, %v1767
    %v3023 = vpack.c.b16 %v1773, %v1768
    %v3024 = vpack.c.b16 %v1774, %v1769
    %v3025 = vpack.c.b16 %v1780, %v1775
    %v3026 = vpack.c.b16 %v1781, %v1776
    %v3027 = vpack.c.b16 %v1782, %v1777
    %v3028 = vpack.c.b16 %v1783, %v1778
    %v3029 = vpack.c.b16 %v1784, %v1779
    %v3030 = vpack.c.b16 %v1790, %v1785
    %v3031 = vpack.c.b16 %v1791, %v1786
    %v3032 = vpack.c.b16 %v1792, %v1787
    %v3033 = vpack.c.b16 %v1793, %v1788
    %v3034 = vpack.c.b16 %v1794, %v1789
    %v3035 = vpack.c.b16 %v1800, %v1795
    %v3036 = vpack.c.b16 %v1801, %v1796
    %v3037 = vpack.c.b16 %v1802, %v1797
    %v3038 = vpack.c.b16 %v1803, %v1798
    %v3039 = vpack.c.b16 %v1804, %v1799
    %v3040 = vpack.c.b16 %v1810, %v1805
    %v3041 = vpack.c.b16 %v1811, %v1806
    %v3042 = vpack.c.b16 %v1812, %v1807
    %v3043 = vpack.c.b16 %v1813, %v1808
    %v3044 = vpack.c.b16 %v1814, %v1809
    %v3045 = vpack.c.b16 %v1820, %v1815
    %v3046 = vpack.c.b16 %v1821, %v1816
    %v3047 = vpack.c.b16 %v1822, %v1817
    %v3048 = vpack.c.b16 %v1823, %v1818
    %v3049 = vpack.c.b16 %v1824, %v1819
    %v3050 = vpack.c.b16 %v1830, %v1825
    %v3051 = vpack.c.b16 %v1831, %v1826
    %v3052 = vpack.c.b16 %v1832, %v1827
    %v3053 = vpack.c.b16 %v1833, %v1828
    %v3054 = vpack.c.b16 %v1834, %v1829
    %v3055 = vpack.c.b16 %v1840, %v1835
    %v3056 = vpack.c.b16 %v1841, %v1836
    %v3057 = vpack.c.b16 %v1842, %v1837
    %v3058 = vpack.c.b16 %v1843, %v1838
    %v3059 = vpack.c.b16 %v1844, %v1839
    %v3060 = vpack.c.b16 %v1850, %v1845
    %v3061 = vpack.c.b16 %v1851, %v1846
    %v3062 = vpack.c.b16 %v1852, %v1847
    %v3063 = vpack.c.b16 %v1853, %v1848
    %v3064 = vpack.c.b16 %v1854, %v1849
    %v3065 = vpack.c.b16 %v1860, %v1855
    %v3066 = vpack.c.b16 %v1861, %v1856
    %v3067 = vpack.c.b16 %v1862, %v1857
    %v3068 = vpack.c.b16 %v1863, %v1858
    %v3069 = vpack.c.b16 %v1864, %v1859
    %v3070 = vpack.c.b16 %v1870, %v1865
    %v3071 = vpack.c.b16 %v1871, %v1866
    %v3072 = vpack.c.b16 %v1872, %v1867
    %v3073 = vpack.c.b16 %v1873, %v1868
    %v3074 = vpack.c.b16 %v1874, %v1869
    %v3075 = vpack.c.b16 %v1880, %v1875
    %v3076 = vpack.c.b16 %v1881, %v1876
    %v3077 = vpack.c.b16 %v1882, %v1877
    %v3078 = vpack.c.b16 %v1883, %v1878
    %v3079 = vpack.c.b16 %v1884, %v1879
    %v3080 = vpack.c.b16 %v1890, %v1885
    %v3081 = vpack.c.b16 %v1891, %v1886
    %v3082 = vpack.c.b16 %v1892, %v1887
    %v3083 = vpack.c.b16 %v1893, %v1888
    %v3084 = vpack.c.b16 %v1894, %v1889
    %v3085 = vpack.c.b16 %v1900, %v1895
    %v3086 = vpack.c.b16 %v1901, %v1896
    %v3087 = vpack.c.b16 %v1902, %v1897
    %v3088 = vpack.c.b16 %v1903, %v1898
    %v3089 = vpack.c.b16 %v1904, %v1899
    %v3090 = vpack.c.b16 %v1910, %v1905
    %v3091 = vpack.c.b16 %v1911, %v1906
    %v3092 = vpack.c.b16 %v1912, %v1907
    %v3093 = vpack.c.b16 %v1913, %v1908
    %v3094 = vpack.c.b16 %v1914, %v1909
    %v3095 = vpack.c.b16 %v1920, %v1915
    %v3096 = vpack.c.b16 %v1921, %v1916
    %v3097 = vpack.c.b16 %v1922, %v1917
    %v3098 = vpack.c.b16 %v1923, %v1918
    %v3099 = vpack.c.b16 %v1924, %v1919
    %v3100 = vpack.c.b16 %v1930, %v1925
    %v3101 = vpack.c.b16 %v1931, %v1926
    %v3102 = vpack.c.b16 %v1932, %v1927
    %v3103 = vpack.c.b16 %v1933, %v1928
    %v3104 = vpack.c.b16 %v1934, %v1929
    %v3105 = vpack.c.b16 %v1940, %v1935
    %v3106 = vpack.c.b16 %v1941, %v1936
    %v3107 = vpack.c.b16 %v1942, %v1937
    %v3108 = vpack.c.b16 %v1943, %v1938
    %v3109 = vpack.c.b16 %v1944, %v1939
    %v3110 = vpack.c.b16 %v1950, %v1945
    %v3111 = vpack.c.b16 %v1951, %v1946
    %v3112 = vpack.c.b16 %v1952, %v1947
    %v3113 = vpack.c.b16 %v1953, %v1948
    %v3114 = vpack.c.b16 %v1954, %v1949
    %v3115 = vpack.c.b16 %v1960, %v1955
    %v3116 = vpack.c.b16 %v1961, %v1956
    %v3117 = vpack.c.b16 %v1962, %v1957
    %v3118 = vpack.c.b16 %v1963, %v1958
    %v3119 = vpack.c.b16 %v1964, %v1959
    %v3120 = vpack.c.b16 %v1970, %v1965
    %v3121 = vpack.c.b16 %v1971, %v1966
    %v3122 = vpack.c.b16 %v1972, %v1967
    %v3123 = vpack.c.b16 %v1973, %v1968
    %v3124 = vpack.c.b16 %v1974, %v1969
    %v3125 = vpack.c.b16 %v1980, %v1975
    %v3126 = vpack.c.b16 %v1981, %v1976
    %v3127 = vpack.c.b16 %v1982, %v1977
    %v3128 = vpack.c.b16 %v1983, %v1978
    %v3129 = vpack.c.b16 %v1984, %v1979
    %v3130 = vpack.c.b16 %v1990, %v1985
    %v3131 = vpack.c.b16 %v1991, %v1986
    %v3132 = vpack.c.b16 %v1992, %v1987
    %v3133 = vpack.c.b16 %v1993, %v1988
    %v3134 = vpack.c.b16 %v1994, %v1989
    %v3135 = vpack.c.b16 %v2000, %v1995
    %v3136 = vpack.c.b16 %v2001, %v1996
    %v3137 = vpack.c.b16 %v2002, %v1997
    %v3138 = vpack.c.b16 %v2003, %v1998
    %v3139 = vpack.c.b16 %v2004, %v1999
    %v3140 = vpack.c.b16 %v2010, %v2005
    %v3141 = vpack.c.b16 %v2011, %v2006
    %v3142 = vpack.c.b16 %v2012, %v2007
    %v3143 = vpack.c.b16 %v2013, %v2008
    %v3144 = vpack.c.b16 %v2014, %v2009
    %v3145 = vpack.c.b16 %v2020, %v2015
    %v3146 = vpack.c.b16 %v2021, %v2016
    %v3147 = vpack.c.b16 %v2022, %v2017
    %v3148 = vpack.c.b16 %v2023, %v2018
    %v3149 = vpack.c.b16 %v2024, %v2019
    %v3150 = vpack.c.b16 %v2030, %v2025
    %v3151 = vpack.c.b16 %v2031, %v2026
    %v3152 = vpack.c.b16 %v2032, %v2027
    %v3153 = vpack.c.b16 %v2033, %v2028
    %v3154 = vpack.c.b16 %v2034, %v2029
    %v3155 = vpack.c.b16 %v2040, %v2035
    %v3156 = vpack.c.b16 %v2041, %v2036
    %v3157 = vpack.c.b16 %v2042, %v2037
    %v3158 = vpack.c.b16 %v2043, %v2038
    %v3159 = vpack.c.b16 %v2044, %v2039
    %v3160 = vpack.c.b16 %v2050, %v2045
    %v3161 = vpack.c.b16 %v2051, %v2046
    %v3162 = vpack.c.b16 %v2052, %v2047
    %v3163 = vpack.c.b16 %v2053, %v2048
    %v3164 = vpack.c.b16 %v2054, %v2049
    %v3165 = vpack.c.b16 %v2060, %v2055
    %v3166 = vpack.c.b16 %v2061, %v2056
    %v3167 = vpack.c.b16 %v2062, %v2057
    %v3168 = vpack.c.b16 %v2063, %v2058
    %v3169 = vpack.c.b16 %v2064, %v2059
    %v3170 = vpack.c.b16 %v2070, %v2065
    %v3171 = vpack.c.b16 %v2071, %v2066
    %v3172 = vpack.c.b16 %v2072, %v2067
    %v3173 = vpack.c.b16 %v2073, %v2068
    %v3174 = vpack.c.b16 %v2074, %v2069
    %v3175 = vpack.c.b16 %v2080, %v2075
    %v3176 = vpack.c.b16 %v2081, %v2076
    %v3177 = vpack.c.b16 %v2082, %v2077
    %v3178 = vpack.c.b16 %v2083, %v2078
    %v3179 = vpack.c.b16 %v2084, %v2079
    %v3180 = vpack.c.b16 %v2090, %v2085
    %v3181 = vpack.c.b16 %v2091, %v2086
    %v3182 = vpack.c.b16 %v2092, %v2087
    %v3183 = vpack.c.b16 %v2093, %v2088
    %v3184 = vpack.c.b16 %v2094, %v2089
    %v3185 = vpack.c.b16 %v2100, %v2095
    %v3186 = vpack.c.b16 %v2101, %v2096
    %v3187 = vpack.c.b16 %v2102, %v2097
    %v3188 = vpack.c.b16 %v2103, %v2098
    %v3189 = vpack.c.b16 %v2104, %v2099
    %v3190 = vpack.c.b16 %v2110, %v2105
    %v3191 = vpack.c.b16 %v2111, %v2106
    %v3192 = vpack.c.b16 %v2112, %v2107
    %v3193 = vpack.c.b16 %v2113, %v2108
    %v3194 = vpack.c.b16 %v2114, %v2109
    %v3195 = vpack.c.b16 %v2120, %v2115
    %v3196 = vpack.c.b16 %v2121, %v2116
    %v3197 = vpack.c.b16 %v2122, %v2117
    %v3198 = vpack.c.b16 %v2123, %v2118
    %v3199 = vpack.c.b16 %v2124, %v2119
    %v3200 = vpack.c.b16 %v2130, %v2125
    %v3201 = vpack.c.b16 %v2131, %v2126
    %v3202 = vpack.c.b16 %v2132, %v2127
    %v3203 = vpack.c.b16 %v2133, %v2128
    %v3204 = vpack.c.b16 %v2134, %v2129
    %v3205 = vpack.c.b16 %v2140, %v2135
    %v3206 = vpack.c.b16 %v2141, %v2136
    %v3207 = vpack.c.b16 %v2142, %v2137
    %v3208 = vpack.c.b16 %v2143, %v2138
    %v3209 = vpack.c.b16 %v2144, %v2139
    %v3210 = vpack.c.b16 %v2150, %v2145
    %v3211 = vpack.c.b16 %v2151, %v2146
    %v3212 = vpack.c.b16 %v2152, %v2147
    %v3213 = vpack.c.b16 %v2153, %v2148
    %v3214 = vpack.c.b16 %v2154, %v2149
    %v3215 = vpack.c.b16 %v2160, %v2155
    %v3216 = vpack.c.b16 %v2161, %v2156
    %v3217 = vpack.c.b16 %v2162, %v2157
    %v3218 = vpack.c.b16 %v2163, %v2158
    %v3219 = vpack.c.b16 %v2164, %v2159
    %v3220 = vpack.c.b16 %v2170, %v2165
    %v3221 = vpack.c.b16 %v2171, %v2166
    %v3222 = vpack.c.b16 %v2172, %v2167
    %v3223 = vpack.c.b16 %v2173, %v2168
    %v3224 = vpack.c.b16 %v2174, %v2169
    %v3225 = vpack.c.b16 %v2180, %v2175
    %v3226 = vpack.c.b16 %v2181, %v2176
    %v3227 = vpack.c.b16 %v2182, %v2177
    %v3228 = vpack.c.b16 %v2183, %v2178
    %v3229 = vpack.c.b16 %v2184, %v2179
    %v3230 = vpack.c.b16 %v2190, %v2185
    %v3231 = vpack.c.b16 %v2191, %v2186
    %v3232 = vpack.c.b16 %v2192, %v2187
    %v3233 = vpack.c.b16 %v2193, %v2188
    %v3234 = vpack.c.b16 %v2194, %v2189
    %v3235 = vpack.c.b16 %v2200, %v2195
    %v3236 = vpack.c.b16 %v2201, %v2196
    %v3237 = vpack.c.b16 %v2202, %v2197
    %v3238 = vpack.c.b16 %v2203, %v2198
    %v3239 = vpack.c.b16 %v2204, %v2199
    %v3240 = vpack.c.b16 %v2210, %v2205
    %v3241 = vpack.c.b16 %v2211, %v2206
    %v3242 = vpack.c.b16 %v2212, %v2207
    %v3243 = vpack.c.b16 %v2213, %v2208
    %v3244 = vpack.c.b16 %v2214, %v2209
    %v3245 = vpack.c.b16 %v2220, %v2215
    %v3246 = vpack.c.b16 %v2221, %v2216
    %v3247 = vpack.c.b16 %v2222, %v2217
    %v3248 = vpack.c.b16 %v2223, %v2218
    %v3249 = vpack.c.b16 %v2224, %v2219
    %v3250 = vpack.c.b16 %v2230, %v2225
    %v3251 = vpack.c.b16 %v2231, %v2226
    %v3252 = vpack.c.b16 %v2232, %v2227
    %v3253 = vpack.c.b16 %v2233, %v2228
    %v3254 = vpack.c.b16 %v2234, %v2229
    %v3255 = vpack.c.b16 %v2240, %v2235
    %v3256 = vpack.c.b16 %v2241, %v2236
    %v3257 = vpack.c.b16 %v2242, %v2237
    %v3258 = vpack.c.b16 %v2243, %v2238
    %v3259 = vpack.c.b16 %v2244, %v2239
    %v3260 = vpack.c.b16 %v2250, %v2245
    %v3261 = vpack.c.b16 %v2251, %v2246
    %v3262 = vpack.c.b16 %v2252, %v2247
    %v3263 = vpack.c.b16 %v2253, %v2248
    %v3264 = vpack.c.b16 %v2254, %v2249
    %v3265 = vpack.c.b16 %v2260, %v2255
    %v3266 = vpack.c.b16 %v2261, %v2256
    %v3267 = vpack.c.b16 %v2262, %v2257
    %v3268 = vpack.c.b16 %v2263, %v2258
    %v3269 = vpack.c.b16 %v2264, %v2259
    %v3270 = vpack.c.b16 %v2270, %v2265
    %v3271 = vpack.c.b16 %v2271, %v2266
    %v3272 = vpack.c.b16 %v2272, %v2267
    %v3273 = vpack.c.b16 %v2273, %v2268
    %v3274 = vpack.c.b16 %v2274, %v2269
    %v3275 = vpack.c.b16 %v2280, %v2275
    %v3276 = vpack.c.b16 %v2281, %v2276
    %v3277 = vpack.c.b16 %v2282, %v2277
    %v3278 = vpack.c.b16 %v2283, %v2278
    %v3279 = vpack.c.b16 %v2284, %v2279
    %v3280 = vpack.c.b16 %v2290, %v2285
    %v3281 = vpack.c.b16 %v2291, %v2286
    %v3282 = vpack.c.b16 %v2292, %v2287
    %v3283 = vpack.c.b16 %v2293, %v2288
    %v3284 = vpack.c.b16 %v2294, %v2289
    %v3285 = vpack.c.b16 %v2300, %v2295
    %v3286 = vpack.c.b16 %v2301, %v2296
    %v3287 = vpack.c.b16 %v2302, %v2297
    %v3288 = vpack.c.b16 %v2303, %v2298
    %v3289 = vpack.c.b16 %v2304, %v2299
    %v3290 = vpack.c.b16 %v2310, %v2305
    %v3291 = vpack.c.b16 %v2311, %v2306
    %v3292 = vpack.c.b16 %v2312, %v2307
    %v3293 = vpack.c.b16 %v2313, %v2308
    %v3294 = vpack.c.b16 %v2314, %v2309
    %v3295 = vpack.c.b16 %v2320, %v2315
    %v3296 = vpack.c.b16 %v2321, %v2316
    %v3297 = vpack.c.b16 %v2322, %v2317
    %v3298 = vpack.c.b16 %v2323, %v2318
    %v3299 = vpack.c.b16 %v2324, %v2319
    %v3300 = vpack.c.b16 %v2330, %v2325
    %v3301 = vpack.c.b16 %v2331, %v2326
    %v3302 = vpack.c.b16 %v2332, %v2327
    %v3303 = vpack.c.b16 %v2333, %v2328
    %v3304 = vpack.c.b16 %v2334, %v2329
    %v3305 = vpack.c.b16 %v2340, %v2335
    %v3306 = vpack.c.b16 %v2341, %v2336
    %v3307 = vpack.c.b16 %v2342, %v2337
    %v3308 = vpack.c.b16 %v2343, %v2338
    %v3309 = vpack.c.b16 %v2344, %v2339
    %v3310 = vpack.c.b16 %v2350, %v2345
    %v3311 = vpack.c.b16 %v2351, %v2346
    %v3312 = vpack.c.b16 %v2352, %v2347
    %v3313 = vpack.c.b16 %v2353, %v2348
    %v3314 = vpack.c.b16 %v2354, %v2349
    %v3315 = vpack.c.b16 %v2360, %v2355
    %v3316 = vpack.c.b16 %v2361, %v2356
    %v3317 = vpack.c.b16 %v2362, %v2357
    %v3318 = vpack.c.b16 %v2363, %v2358
    %v3319 = vpack.c.b16 %v2364, %v2359
    %v3320 = vpack.c.b16 %v2370, %v2365
    %v3321 = vpack.c.b16 %v2371, %v2366
    %v3322 = vpack.c.b16 %v2372, %v2367
    %v3323 = vpack.c.b16 %v2373, %v2368
    %v3324 = vpack.c.b16 %v2374, %v2369
    %v3325 = vpack.c.b16 %v2380, %v2375
    %v3326 = vpack.c.b16 %v2381, %v2376
    %v3327 = vpack.c.b16 %v2382, %v2377
    %v3328 = vpack.c.b16 %v2383, %v2378
    %v3329 = vpack.c.b16 %v2384, %v2379
    %v3330 = vpack.c.b16 %v2390, %v2385
    %v3331 = vpack.c.b16 %v2391, %v2386
    %v3332 = vpack.c.b16 %v2392, %v2387
    %v3333 = vpack.c.b16 %v2393, %v2388
    %v3334 = vpack.c.b16 %v2394, %v2389
    %v3335 = vpack.c.b16 %v2400, %v2395
    %v3336 = vpack.c.b16 %v2401, %v2396
    %v3337 = vpack.c.b16 %v2402, %v2397
    %v3338 = vpack.c.b16 %v2403, %v2398
    %v3339 = vpack.c.b16 %v2404, %v2399
    %v3340 = vpack.c.b16 %v2410, %v2405
    %v3341 = vpack.c.b16 %v2411, %v2406
    %v3342 = vpack.c.b16 %v2412, %v2407
    %v3343 = vpack.c.b16 %v2413, %v2408
    %v3344 = vpack.c.b16 %v2414, %v2409
    %v3345 = vpack.c.b16 %v2420, %v2415
    %v3346 = vpack.c.b16 %v2421, %v2416
    %v3347 = vpack.c.b16 %v2422, %v2417
    %v3348 = vpack.c.b16 %v2423, %v2418
    %v3349 = vpack.c.b16 %v2424, %v2419
    %v3350 = vpack.c.b16 %v2430, %v2425
    %v3351 = vpack.c.b16 %v2431, %v2426
    %v3352 = vpack.c.b16 %v2432, %v2427
    %v3353 = vpack.c.b16 %v2433, %v2428
    %v3354 = vpack.c.b16 %v2434, %v2429
    %v3355 = vpack.c.b16 %v2440, %v2435
    %v3356 = vpack.c.b16 %v2441, %v2436
    %v3357 = vpack.c.b16 %v2442, %v2437
    %v3358 = vpack.c.b16 %v2443, %v2438
    %v3359 = vpack.c.b16 %v2444, %v2439
    %v3360 = vpack.c.b16 %v2450, %v2445
    %v3361 = vpack.c.b16 %v2451, %v2446
    %v3362 = vpack.c.b16 %v2452, %v2447
    %v3363 = vpack.c.b16 %v2453, %v2448
    %v3364 = vpack.c.b16 %v2454, %v2449
    %v3365 = vpack.c.b16 %v2460, %v2455
    %v3366 = vpack.c.b16 %v2461, %v2456
    %v3367 = vpack.c.b16 %v2462, %v2457
    %v3368 = vpack.c.b16 %v2463, %v2458
    %v3369 = vpack.c.b16 %v2464, %v2459
    %v3370 = vpack.c.b16 %v2470, %v2465
    %v3371 = vpack.c.b16 %v2471, %v2466
    %v3372 = vpack.c.b16 %v2472, %v2467
    %v3373 = vpack.c.b16 %v2473, %v2468
    %v3374 = vpack.c.b16 %v2474, %v2469
    %v3375 = vpack.c.b16 %v2480, %v2475
    %v3376 = vpack.c.b16 %v2481, %v2476
    %v3377 = vpack.c.b16 %v2482, %v2477
    %v3378 = vpack.c.b16 %v2483, %v2478
    %v3379 = vpack.c.b16 %v2484, %v2479
    %v3380 = vpack.c.b16 %v2490, %v2485
    %v3381 = vpack.c.b16 %v2491, %v2486
    %v3382 = vpack.c.b16 %v2492, %v2487
    %v3383 = vpack.c.b16 %v2493, %v2488
    %v3384 = vpack.c.b16 %v2494, %v2489
    %v3385 = vpack.c.b16 %v2500, %v2495
    %v3386 = vpack.c.b16 %v2501, %v2496
    %v3387 = vpack.c.b16 %v2502, %v2497
    %v3388 = vpack.c.b16 %v2503, %v2498
    %v3389 = vpack.c.b16 %v2504, %v2499
    %v3390 = vpack.c.b16 %v2510, %v2505
    %v3391 = vpack.c.b16 %v2511, %v2506
    %v3392 = vpack.c.b16 %v2512, %v2507
    %v3393 = vpack.c.b16 %v2513, %v2508
    %v3394 = vpack.c.b16 %v2514, %v2509
    %v3395 = vpack.c.b16 %v2520, %v2515
    %v3396 = vpack.c.b16 %v2521, %v2516
    %v3397 = vpack.c.b16 %v2522, %v2517
    %v3398 = vpack.c.b16 %v2523, %v2518
    %v3399 = vpack.c.b16 %v2524, %v2519
    %v3400 = vpack.c.b16 %v2530, %v2525
    %v3401 = vpack.c.b16 %v2531, %v2526
    %v3402 = vpack.c.b16 %v2532, %v2527
    %v3403 = vpack.c.b16 %v2533, %v2528
    %v3404 = vpack.c.b16 %v2534, %v2529
    %v3405 = vpack.c.b16 %v2540, %v2535
    %v3406 = vpack.c.b16 %v2541, %v2536
    %v3407 = vpack.c.b16 %v2542, %v2537
    %v3408 = vpack.c.b16 %v2543, %v2538
    %v3409 = vpack.c.b16 %v2544, %v2539
    %v3410 = vpack.c.b16 %v2550, %v2545
    %v3411 = vpack.c.b16 %v2551, %v2546
    %v3412 = vpack.c.b16 %v2552, %v2547
    %v3413 = vpack.c.b16 %v2553, %v2548
    %v3414 = vpack.c.b16 %v2554, %v2549
    %v3415 = vpack.c.b16 %v2560, %v2555
    %v3416 = vpack.c.b16 %v2561, %v2556
    %v3417 = vpack.c.b16 %v2562, %v2557
    %v3418 = vpack.c.b16 %v2563, %v2558
    %v3419 = vpack.c.b16 %v2564, %v2559
    %v3420 = vpack.c.b16 %v2570, %v2565
    %v3421 = vpack.c.b16 %v2571, %v2566
    %v3422 = vpack.c.b16 %v2572, %v2567
    %v3423 = vpack.c.b16 %v2573, %v2568
    %v3424 = vpack.c.b16 %v2574, %v2569
    %v3425 = vpack.c.b16 %v2580, %v2575
    %v3426 = vpack.c.b16 %v2581, %v2576
    %v3427 = vpack.c.b16 %v2582, %v2577
    %v3428 = vpack.c.b16 %v2583, %v2578
    %v3429 = vpack.c.b16 %v2584, %v2579
    %v3430 = vpack.c.b16 %v2590, %v2585
    %v3431 = vpack.c.b16 %v2591, %v2586
    %v3432 = vpack.c.b16 %v2592, %v2587
    %v3433 = vpack.c.b16 %v2593, %v2588
    %v3434 = vpack.c.b16 %v2594, %v2589
    %v3435 = vpack.c.b16 %v2600, %v2595
    %v3436 = vpack.c.b16 %v2601, %v2596
    %v3437 = vpack.c.b16 %v2602, %v2597
    %v3438 = vpack.c.b16 %v2603, %v2598
    %v3439 = vpack.c.b16 %v2604, %v2599
    %v3440 = vpack.c.b16 %v2610, %v2605
    %v3441 = vpack.c.b16 %v2611, %v2606
    %v3442 = vpack.c.b16 %v2612, %v2607
    %v3443 = vpack.c.b16 %v2613, %v2608
    %v3444 = vpack.c.b16 %v2614, %v2609
    %v3445 = vpack.c.b16 %v2620, %v2615
    %v3446 = vpack.c.b16 %v2621, %v2616
    %v3447 = vpack.c.b16 %v2622, %v2617
    %v3448 = vpack.c.b16 %v2623, %v2618
    %v3449 = vpack.c.b16 %v2624, %v2619
    %v3450 = vpack.c.b16 %v2630, %v2625
    %v3451 = vpack.c.b16 %v2631, %v2626
    %v3452 = vpack.c.b16 %v2632, %v2627
    %v3453 = vpack.c.b16 %v2633, %v2628
    %v3454 = vpack.c.b16 %v2634, %v2629
    %v3455 = vpack.c.b16 %v2640, %v2635
    %v3456 = vpack.c.b16 %v2641, %v2636
    %v3457 = vpack.c.b16 %v2642, %v2637
    %v3458 = vpack.c.b16 %v2643, %v2638
    %v3459 = vpack.c.b16 %v2644, %v2639
    %v3460 = vpack.c.b16 %v2650, %v2645
    %v3461 = vpack.c.b16 %v2651, %v2646
    %v3462 = vpack.c.b16 %v2652, %v2647
    %v3463 = vpack.c.b16 %v2653, %v2648
    %v3464 = vpack.c.b16 %v2654, %v2649
    %v3465 = vpack.c.b16 %v2660, %v2655
    %v3466 = vpack.c.b16 %v2661, %v2656
    %v3467 = vpack.c.b16 %v2662, %v2657
    %v3468 = vpack.c.b16 %v2663, %v2658
    %v3469 = vpack.c.b16 %v2664, %v2659
    %v3470 = vpack.c.b16 %v2670, %v2665
    %v3471 = vpack.c.b16 %v2671, %v2666
    %v3472 = vpack.c.b16 %v2672, %v2667
    %v3473 = vpack.c.b16 %v2673, %v2668
    %v3474 = vpack.c.b16 %v2674, %v2669
    %v3475 = vpack.c.b16 %v2680, %v2675
    %v3476 = vpack.c.b16 %v2681, %v2676
    %v3477 = vpack.c.b16 %v2682, %v2677
    %v3478 = vpack.c.b16 %v2683, %v2678
    %v3479 = vpack.c.b16 %v2684, %v2679
    %v3480 = vpack.c.b16 %v2690, %v2685
    %v3481 = vpack.c.b16 %v2691, %v2686
    %v3482 = vpack.c.b16 %v2692, %v2687
    %v3483 = vpack.c.b16 %v2693, %v2688
    %v3484 = vpack.c.b16 %v2694, %v2689
    %v3485 = vpack.c.b16 %v2700, %v2695
    %v3486 = vpack.c.b16 %v2701, %v2696
    %v3487 = vpack.c.b16 %v2702, %v2697
    %v3488 = vpack.c.b16 %v2703, %v2698
    %v3489 = vpack.c.b16 %v2704, %v2699
    %v3490 = vpack.c.b16 %v2710, %v2705
    %v3491 = vpack.c.b16 %v2711, %v2706
    %v3492 = vpack.c.b16 %v2712, %v2707
    %v3493 = vpack.c.b16 %v2713, %v2708
    %v3494 = vpack.c.b16 %v2714, %v2709
    %v3495 = vpack.c.b16 %v2720, %v2715
    %v3496 = vpack.c.b16 %v2721, %v2716
    %v3497 = vpack.c.b16 %v2722, %v2717
    %v3498 = vpack.c.b16 %v2723, %v2718
    %v3499 = vpack.c.b16 %v2724, %v2719
    %v3500 = vpack.c.b16 %v2730, %v2725
    %v3501 = vpack.c.b16 %v2731, %v2726
    %v3502 = vpack.c.b16 %v2732, %v2727
    %v3503 = vpack.c.b16 %v2733, %v2728
    %v3504 = vpack.c.b16 %v2734, %v2729
    %v3505 = vpack.c.b16 %v2740, %v2735
    %v3506 = vpack.c.b16 %v2741, %v2736
    %v3507 = vpack.c.b16 %v2742, %v2737
    %v3508 = vpack.c.b16 %v2743, %v2738
    %v3509 = vpack.c.b16 %v2744, %v2739
    %v3510 = vpack.c.b16 %v2750, %v2745
    %v3511 = vpack.c.b16 %v2751, %v2746
    %v3512 = vpack.c.b16 %v2752, %v2747
    %v3513 = vpack.c.b16 %v2753, %v2748
    %v3514 = vpack.c.b16 %v2754, %v2749
    %v3515 = vpack.c.b16 %v2760, %v2755
    %v3516 = vpack.c.b16 %v2761, %v2756
    %v3517 = vpack.c.b16 %v2762, %v2757
    %v3518 = vpack.c.b16 %v2763, %v2758
    %v3519 = vpack.c.b16 %v2764, %v2759
    %v3520 = vpack.c.b16 %v2770, %v2765
    %v3521 = vpack.c.b16 %v2771, %v2766
    %v3522 = vpack.c.b16 %v2772, %v2767
    %v3523 = vpack.c.b16 %v2773, %v2768
    %v3524 = vpack.c.b16 %v2774, %v2769
    %v3525 = vpack.c.b16 %v2780, %v2775
    %v3526 = vpack.c.b16 %v2781, %v2776
    %v3527 = vpack.c.b16 %v2782, %v2777
    %v3528 = vpack.c.b16 %v2783, %v2778
    %v3529 = vpack.c.b16 %v2784, %v2779
    %v3530 = vpack.c.b16 %v2790, %v2785
    %v3531 = vpack.c.b16 %v2791, %v2786
    %v3532 = vpack.c.b16 %v2792, %v2787
    %v3533 = vpack.c.b16 %v2793, %v2788
    %v3534 = vpack.c.b16 %v2794, %v2789
    %v3535 = vpack.c.b16 %v2800, %v2795
    %v3536 = vpack.c.b16 %v2801, %v2796
    %v3537 = vpack.c.b16 %v2802, %v2797
    %v3538 = vpack.c.b16 %v2803, %v2798
    %v3539 = vpack.c.b16 %v2804, %v2799
    %v3540 = vpack.c.b16 %v2810, %v2805
    %v3541 = vpack.c.b16 %v2811, %v2806
    %v3542 = vpack.c.b16 %v2812, %v2807
    %v3543 = vpack.c.b16 %v2813, %v2808
    %v3544 = vpack.c.b16 %v2814, %v2809
    %v3545 = vpack.c.b16 %v2820, %v2815
    %v3546 = vpack.c.b16 %v2821, %v2816
    %v3547 = vpack.c.b16 %v2822, %v2817
    %v3548 = vpack.c.b16 %v2823, %v2818
    %v3549 = vpack.c.b16 %v2824, %v2819
    %v3550 = vpack.c.b16 %v2830, %v2825
    %v3551 = vpack.c.b16 %v2831, %v2826
    %v3552 = vpack.c.b16 %v2832, %v2827
    %v3553 = vpack.c.b16 %v2833, %v2828
    %v3554 = vpack.c.b16 %v2834, %v2829
    %v3555 = vpack.c.b16 %v2840, %v2835
    %v3556 = vpack.c.b16 %v2841, %v2836
    %v3557 = vpack.c.b16 %v2842, %v2837
    %v3558 = vpack.c.b16 %v2843, %v2838
    %v3559 = vpack.c.b16 %v2844, %v2839
    %v3560 = vpack.c.b16 %v2850, %v2845
    %v3561 = vpack.c.b16 %v2851, %v2846
    %v3562 = vpack.c.b16 %v2852, %v2847
    %v3563 = vpack.c.b16 %v2853, %v2848
    %v3564 = vpack.c.b16 %v2854, %v2849
    %v3565 = vpack.c.b16 %v2860, %v2855
    %v3566 = vpack.c.b16 %v2861, %v2856
    %v3567 = vpack.c.b16 %v2862, %v2857
    %v3568 = vpack.c.b16 %v2863, %v2858
    %v3569 = vpack.c.b16 %v2864, %v2859
    %v3570 = vpack.c.b16 %v2870, %v2865
    %v3571 = vpack.c.b16 %v2871, %v2866
    %v3572 = vpack.c.b16 %v2872, %v2867
    %v3573 = vpack.c.b16 %v2873, %v2868
    %v3574 = vpack.c.b16 %v2874, %v2869
    %v3575 = vpack.c.b16 %v2880, %v2875
    %v3576 = vpack.c.b16 %v2881, %v2876
    %v3577 = vpack.c.b16 %v2882, %v2877
    %v3578 = vpack.c.b16 %v2883, %v2878
    %v3579 = vpack.c.b16 %v2884, %v2879
    %v3580 = vpack.c.b16 %v2890, %v2885
    %v3581 = vpack.c.b16 %v2891, %v2886
    %v3582 = vpack.c.b16 %v2892, %v2887
    %v3583 = vpack.c.b16 %v2893, %v2888
    %v3584 = vpack.c.b16 %v2894, %v2889
    %v3585 = vpack.c.b16 %v2900, %v2895
    %v3586 = vpack.c.b16 %v2901, %v2896
    %v3587 = vpack.c.b16 %v2902, %v2897
    %v3588 = vpack.c.b16 %v2903, %v2898
    %v3589 = vpack.c.b16 %v2904, %v2899
    %v3590 = vpack.c.b16 %v2910, %v2905
    %v3591 = vpack.c.b16 %v2911, %v2906
    %v3592 = vpack.c.b16 %v2912, %v2907
    %v3593 = vpack.c.b16 %v2913, %v2908
    %v3594 = vpack.c.b16 %v2914, %v2909
    %v3595 = vpack.c.b16 %v2920, %v2915
    %v3596 = vpack.c.b16 %v2921, %v2916
    %v3597 = vpack.c.b16 %v2922, %v2917
    %v3598 = vpack.c.b16 %v2923, %v2918
    %v3599 = vpack.c.b16 %v2924, %v2919
    %v3600 = vpack.c.b16 %v2930, %v2925
    %v3601 = vpack.c.b16 %v2931, %v2926
    %v3602 = vpack.c.b16 %v2932, %v2927
    %v3603 = vpack.c.b16 %v2933, %v2928
    %v3604 = vpack.c.b16 %v2934, %v2929
    %v3605 = vpack.c.b16 %v2940, %v2935
    %v3606 = vpack.c.b16 %v2941, %v2936
    %v3607 = vpack.c.b16 %v2942, %v2937
    %v3608 = vpack.c.b16 %v2943, %v2938
    %v3609 = vpack.c.b16 %v2944, %v2939
    %v3610 = vpack.c.b16 %v2950, %v2945
    %v3611 = vpack.c.b16 %v2951, %v2946
    %v3612 = vpack.c.b16 %v2952, %v2947
    %v3613 = vpack.c.b16 %v2953, %v2948
    %v3614 = vpack.c.b16 %v2954, %v2949
    %v3615 = vpack.c.b16 %v2960, %v2955
    %v3616 = vpack.c.b16 %v2961, %v2956
    %v3617 = vpack.c.b16 %v2962, %v2957
    %v3618 = vpack.c.b16 %v2963, %v2958
    %v3619 = vpack.c.b16 %v2964, %v2959
    %v3620 = vpack.c.b16 %v2970, %v2965
    %v3621 = vpack.c.b16 %v2971, %v2966
    %v3622 = vpack.c.b16 %v2972, %v2967
    %v3623 = vpack.c.b16 %v2973, %v2968
    %v3624 = vpack.c.b16 %v2974, %v2969
    %v3625 = vpack.c.b16 %v2980, %v2975
    %v3626 = vpack.c.b16 %v2981, %v2976
    %v3627 = vpack.c.b16 %v2982, %v2977
    %v3628 = vpack.c.b16 %v2983, %v2978
    %v3629 = vpack.c.b16 %v2984, %v2979
    %v3630 = vpack.c.b16 %v2990, %v2985
    %v3631 = vpack.c.b16 %v2991, %v2986
    %v3632 = vpack.c.b16 %v2992, %v2987
    %v3633 = vpack.c.b16 %v2993, %v2988
    %v3634 = vpack.c.b16 %v2994, %v2989
    %4275 = vmatprep.subr.bf16.mxu0 %v3031
    %4276 = vmatpush1.bf16.msra.mxu0 %v3030
    %4277 = vmatprep.subr.bf16.mxu0 %v3026
    %4278 = vmatpush1.bf16.msra.mxu0 %v3025
    %4279 = vmatprep.subr.bf16.mxu0 %v3021
    %4280 = vmatpush1.bf16.msra.mxu0 %v3020
    %4281 = vmatprep.subr.bf16.mxu0 %v3016
    %4282 = vmatpush1.bf16.msra.mxu0 %v3015
    %4283 = vmatprep.subr.bf16.mxu0 %v3011
    %4284 = vmatpush1.bf16.msra.mxu0 %v3010
    %4285 = vmatprep.subr.bf16.mxu0 %v3006
    %4286 = vmatpush1.bf16.msra.mxu0 %v3005
    %4287 = vmatprep.subr.bf16.mxu0 %v3001
    %4288 = vmatpush1.bf16.msra.mxu0 %v3000
    %4289 = vmatprep.subr.bf16.mxu0 %v2996
    %4290 = vmatpush1.bf16.msra.mxu0 %v2995
    %4291 = vmatprep.subr.bf16.mxu0 %v3071
    %4292 = vmatpush2.bf16.msra.mxu0 %v3070
    %4293 = vmatprep.subr.bf16.mxu0 %v3066
    %4294 = vmatpush2.bf16.msra.mxu0 %v3065
    %4295 = vmatprep.subr.bf16.mxu0 %v3061
    %4296 = vmatpush2.bf16.msra.mxu0 %v3060
    %4297 = vmatprep.subr.bf16.mxu0 %v3056
    %4298 = vmatpush2.bf16.msra.mxu0 %v3055
    %4299 = vmatprep.subr.bf16.mxu0 %v3051
    %4300 = vmatpush2.bf16.msra.mxu0 %v3050
    %4301 = vmatprep.subr.bf16.mxu0 %v3046
    %4302 = vmatpush2.bf16.msra.mxu0 %v3045
    %4303 = vmatprep.subr.bf16.mxu0 %v3041
    %4304 = vmatpush2.bf16.msra.mxu0 %v3040
    %4305 = vmatprep.subr.bf16.mxu0 %v3036
    %4306 = vmatpush2.bf16.msra.mxu0 %v3035
    %4307 = vmatprep.mubr.bf16.mxu0 %v870
    %4308 = vmatmul.mubr.bf16.gmra.mxu0 %v856
    %v4309 = vpop.f32.mrf.mxu0
    %v4310 = vadd.f32 %v809, %v4309
    %v4311 = vpop.f32.mrf.mxu0
    %v4312 = vadd.f32 %v813, %v4311
    %v4313 = vpop.f32.mrf.mxu0
    %v4314 = vpop.f32.mrf.mxu0
    %4315 = vdwg.mxu0
    %4316 = vmatprep.subr.bf16.mxu0 %v3111
    %4317 = vmatpush1.bf16.msra.mxu0 %v3110
    %4318 = vmatprep.subr.bf16.mxu0 %v3106
    %4319 = vmatpush1.bf16.msra.mxu0 %v3105
    %4320 = vmatprep.subr.bf16.mxu0 %v3101
    %4321 = vmatpush1.bf16.msra.mxu0 %v3100
    %4322 = vmatprep.subr.bf16.mxu0 %v3096
    %4323 = vmatpush1.bf16.msra.mxu0 %v3095
    %4324 = vmatprep.subr.bf16.mxu0 %v3091
    %4325 = vmatpush1.bf16.msra.mxu0 %v3090
    %4326 = vmatprep.subr.bf16.mxu0 %v3086
    %4327 = vmatpush1.bf16.msra.mxu0 %v3085
    %4328 = vmatprep.subr.bf16.mxu0 %v3081
    %4329 = vmatpush1.bf16.msra.mxu0 %v3080
    %4330 = vmatprep.subr.bf16.mxu0 %v3076
    %4331 = vmatpush1.bf16.msra.mxu0 %v3075
    %4332 = vmatprep.subr.bf16.mxu0 %v3151
    %4333 = vmatpush2.bf16.msra.mxu0 %v3150
    %4334 = vmatprep.subr.bf16.mxu0 %v3146
    %4335 = vmatpush2.bf16.msra.mxu0 %v3145
    %4336 = vmatprep.subr.bf16.mxu0 %v3141
    %4337 = vmatpush2.bf16.msra.mxu0 %v3140
    %4338 = vmatprep.subr.bf16.mxu0 %v3136
    %4339 = vmatpush2.bf16.msra.mxu0 %v3135
    %4340 = vmatprep.subr.bf16.mxu0 %v3131
    %4341 = vmatpush2.bf16.msra.mxu0 %v3130
    %4342 = vmatprep.subr.bf16.mxu0 %v3126
    %4343 = vmatpush2.bf16.msra.mxu0 %v3125
    %4344 = vmatprep.subr.bf16.mxu0 %v3121
    %4345 = vmatpush2.bf16.msra.mxu0 %v3120
    %4346 = vmatprep.subr.bf16.mxu0 %v3116
    %4347 = vmatpush2.bf16.msra.mxu0 %v3115
    %4348 = vmatprep.mubr.bf16.mxu0 %v880
    %4349 = vmatmul.mubr.bf16.gmra.mxu0 %v878
    %v4350 = vpop.f32.mrf.mxu0
    %v4351 = vadd.f32 %v4310, %v4350
    %v4352 = vpop.f32.mrf.mxu0
    %v4353 = vadd.f32 %v4312, %v4352
    %v4354 = vpop.f32.mrf.mxu0
    %v4355 = vpop.f32.mrf.mxu0
    %4356 = vdwg.mxu0
    %4357 = vmatprep.subr.bf16.mxu0 %v3191
    %4358 = vmatpush1.bf16.msra.mxu0 %v3190
    %4359 = vmatprep.subr.bf16.mxu0 %v3186
    %4360 = vmatpush1.bf16.msra.mxu0 %v3185
    %4361 = vmatprep.subr.bf16.mxu0 %v3181
    %4362 = vmatpush1.bf16.msra.mxu0 %v3180
    %4363 = vmatprep.subr.bf16.mxu0 %v3176
    %4364 = vmatpush1.bf16.msra.mxu0 %v3175
    %4365 = vmatprep.subr.bf16.mxu0 %v3171
    %4366 = vmatpush1.bf16.msra.mxu0 %v3170
    %4367 = vmatprep.subr.bf16.mxu0 %v3166
    %4368 = vmatpush1.bf16.msra.mxu0 %v3165
    %4369 = vmatprep.subr.bf16.mxu0 %v3161
    %4370 = vmatpush1.bf16.msra.mxu0 %v3160
    %4371 = vmatprep.subr.bf16.mxu0 %v3156
    %4372 = vmatpush1.bf16.msra.mxu0 %v3155
    %4373 = vmatprep.subr.bf16.mxu0 %v3231
    %4374 = vmatpush2.bf16.msra.mxu0 %v3230
    %4375 = vmatprep.subr.bf16.mxu0 %v3226
    %4376 = vmatpush2.bf16.msra.mxu0 %v3225
    %4377 = vmatprep.subr.bf16.mxu0 %v3221
    %4378 = vmatpush2.bf16.msra.mxu0 %v3220
    %4379 = vmatprep.subr.bf16.mxu0 %v3216
    %4380 = vmatpush2.bf16.msra.mxu0 %v3215
    %4381 = vmatprep.subr.bf16.mxu0 %v3211
    %4382 = vmatpush2.bf16.msra.mxu0 %v3210
    %4383 = vmatprep.subr.bf16.mxu0 %v3206
    %4384 = vmatpush2.bf16.msra.mxu0 %v3205
    %4385 = vmatprep.subr.bf16.mxu0 %v3201
    %4386 = vmatpush2.bf16.msra.mxu0 %v3200
    %4387 = vmatprep.subr.bf16.mxu0 %v3196
    %4388 = vmatpush2.bf16.msra.mxu0 %v3195
    %4389 = vmatprep.mubr.bf16.mxu0 %v877
    %4390 = vmatmul.mubr.bf16.gmra.mxu0 %v863
    %v4391 = vpop.f32.mrf.mxu0
    %v4392 = vadd.f32 %v4351, %v4391
    %v4393 = vpop.f32.mrf.mxu0
    %v4394 = vadd.f32 %v4353, %v4393
    %v4395 = vpop.f32.mrf.mxu0
    %v4396 = vpop.f32.mrf.mxu0
    %4397 = vdwg.mxu0
    %4398 = vmatprep.subr.bf16.mxu0 %v3271
    %4399 = vmatpush1.bf16.msra.mxu0 %v3270
    %4400 = vmatprep.subr.bf16.mxu0 %v3266
    %4401 = vmatpush1.bf16.msra.mxu0 %v3265
    %4402 = vmatprep.subr.bf16.mxu0 %v3261
    %4403 = vmatpush1.bf16.msra.mxu0 %v3260
    %4404 = vmatprep.subr.bf16.mxu0 %v3256
    %4405 = vmatpush1.bf16.msra.mxu0 %v3255
    %4406 = vmatprep.subr.bf16.mxu0 %v3251
    %4407 = vmatpush1.bf16.msra.mxu0 %v3250
    %4408 = vmatprep.subr.bf16.mxu0 %v3246
    %4409 = vmatpush1.bf16.msra.mxu0 %v3245
    %4410 = vmatprep.subr.bf16.mxu0 %v3241
    %4411 = vmatpush1.bf16.msra.mxu0 %v3240
    %4412 = vmatprep.subr.bf16.mxu0 %v3236
    %4413 = vmatpush1.bf16.msra.mxu0 %v3235
    %4414 = vmatprep.subr.bf16.mxu0 %v3311
    %4415 = vmatpush2.bf16.msra.mxu0 %v3310
    %4416 = vmatprep.subr.bf16.mxu0 %v3306
    %4417 = vmatpush2.bf16.msra.mxu0 %v3305
    %4418 = vmatprep.subr.bf16.mxu0 %v3301
    %4419 = vmatpush2.bf16.msra.mxu0 %v3300
    %4420 = vmatprep.subr.bf16.mxu0 %v3296
    %4421 = vmatpush2.bf16.msra.mxu0 %v3295
    %4422 = vmatprep.subr.bf16.mxu0 %v3291
    %4423 = vmatpush2.bf16.msra.mxu0 %v3290
    %4424 = vmatprep.subr.bf16.mxu0 %v3286
    %4425 = vmatpush2.bf16.msra.mxu0 %v3285
    %4426 = vmatprep.subr.bf16.mxu0 %v3281
    %4427 = vmatpush2.bf16.msra.mxu0 %v3280
    %4428 = vmatprep.subr.bf16.mxu0 %v3276
    %4429 = vmatpush2.bf16.msra.mxu0 %v3275
    %4430 = vmatprep.mubr.bf16.mxu0 %v881
    %4431 = vmatmul.mubr.bf16.gmra.mxu0 %v879
    %v4432 = vpop.f32.mrf.mxu0
    %v4433 = vadd.f32 %v4392, %v4432
    %v4434 = vpop.f32.mrf.mxu0
    %v4435 = vadd.f32 %v4394, %v4434
    %v4436 = vpop.f32.mrf.mxu0
    %v4437 = vpop.f32.mrf.mxu0
    %4438 = vdwg.mxu0
    %4439 = vmatprep.subr.bf16.mxu0 %v3351
    %4440 = vmatpush1.bf16.msra.mxu0 %v3350
    %4441 = vmatprep.subr.bf16.mxu0 %v3346
    %4442 = vmatpush1.bf16.msra.mxu0 %v3345
    %4443 = vmatprep.subr.bf16.mxu0 %v3341
    %4444 = vmatpush1.bf16.msra.mxu0 %v3340
    %4445 = vmatprep.subr.bf16.mxu0 %v3336
    %4446 = vmatpush1.bf16.msra.mxu0 %v3335
    %4447 = vmatprep.subr.bf16.mxu0 %v3331
    %4448 = vmatpush1.bf16.msra.mxu0 %v3330
    %4449 = vmatprep.subr.bf16.mxu0 %v3326
    %4450 = vmatpush1.bf16.msra.mxu0 %v3325
    %4451 = vmatprep.subr.bf16.mxu0 %v3321
    %4452 = vmatpush1.bf16.msra.mxu0 %v3320
    %4453 = vmatprep.subr.bf16.mxu0 %v3316
    %4454 = vmatpush1.bf16.msra.mxu0 %v3315
    %4455 = vmatprep.subr.bf16.mxu0 %v3391
    %4456 = vmatpush2.bf16.msra.mxu0 %v3390
    %4457 = vmatprep.subr.bf16.mxu0 %v3386
    %4458 = vmatpush2.bf16.msra.mxu0 %v3385
    %4459 = vmatprep.subr.bf16.mxu0 %v3381
    %4460 = vmatpush2.bf16.msra.mxu0 %v3380
    %4461 = vmatprep.subr.bf16.mxu0 %v3376
    %4462 = vmatpush2.bf16.msra.mxu0 %v3375
    %4463 = vmatprep.subr.bf16.mxu0 %v3371
    %4464 = vmatpush2.bf16.msra.mxu0 %v3370
    %4465 = vmatprep.subr.bf16.mxu0 %v3366
    %4466 = vmatpush2.bf16.msra.mxu0 %v3365
    %4467 = vmatprep.subr.bf16.mxu0 %v3361
    %4468 = vmatpush2.bf16.msra.mxu0 %v3360
    %4469 = vmatprep.subr.bf16.mxu0 %v3356
    %4470 = vmatpush2.bf16.msra.mxu0 %v3355
    %4471 = vmatprep.mubr.bf16.mxu0 %v919
    %4472 = vmatmul.mubr.bf16.gmra.mxu0 %v905
    %v4473 = vpop.f32.mrf.mxu0
    %v4474 = vadd.f32 %v4433, %v4473
    %v4475 = vpop.f32.mrf.mxu0
    %v4476 = vadd.f32 %v4435, %v4475
    %v4477 = vpop.f32.mrf.mxu0
    %v4478 = vpop.f32.mrf.mxu0
    %4479 = vdwg.mxu0
    %4480 = vmatprep.subr.bf16.mxu0 %v3431
    %4481 = vmatpush1.bf16.msra.mxu0 %v3430
    %4482 = vmatprep.subr.bf16.mxu0 %v3426
    %4483 = vmatpush1.bf16.msra.mxu0 %v3425
    %4484 = vmatprep.subr.bf16.mxu0 %v3421
    %4485 = vmatpush1.bf16.msra.mxu0 %v3420
    %4486 = vmatprep.subr.bf16.mxu0 %v3416
    %4487 = vmatpush1.bf16.msra.mxu0 %v3415
    %4488 = vmatprep.subr.bf16.mxu0 %v3411
    %4489 = vmatpush1.bf16.msra.mxu0 %v3410
    %4490 = vmatprep.subr.bf16.mxu0 %v3406
    %4491 = vmatpush1.bf16.msra.mxu0 %v3405
    %4492 = vmatprep.subr.bf16.mxu0 %v3401
    %4493 = vmatpush1.bf16.msra.mxu0 %v3400
    %4494 = vmatprep.subr.bf16.mxu0 %v3396
    %4495 = vmatpush1.bf16.msra.mxu0 %v3395
    %4496 = vmatprep.subr.bf16.mxu0 %v3471
    %4497 = vmatpush2.bf16.msra.mxu0 %v3470
    %4498 = vmatprep.subr.bf16.mxu0 %v3466
    %4499 = vmatpush2.bf16.msra.mxu0 %v3465
    %4500 = vmatprep.subr.bf16.mxu0 %v3461
    %4501 = vmatpush2.bf16.msra.mxu0 %v3460
    %4502 = vmatprep.subr.bf16.mxu0 %v3456
    %4503 = vmatpush2.bf16.msra.mxu0 %v3455
    %4504 = vmatprep.subr.bf16.mxu0 %v3451
    %4505 = vmatpush2.bf16.msra.mxu0 %v3450
    %4506 = vmatprep.subr.bf16.mxu0 %v3446
    %4507 = vmatpush2.bf16.msra.mxu0 %v3445
    %4508 = vmatprep.subr.bf16.mxu0 %v3441
    %4509 = vmatpush2.bf16.msra.mxu0 %v3440
    %4510 = vmatprep.subr.bf16.mxu0 %v3436
    %4511 = vmatpush2.bf16.msra.mxu0 %v3435
    %4512 = vmatprep.mubr.bf16.mxu0 %v929
    %4513 = vmatmul.mubr.bf16.gmra.mxu0 %v927
    %v4514 = vpop.f32.mrf.mxu0
    %v4515 = vadd.f32 %v4474, %v4514
    %v4516 = vpop.f32.mrf.mxu0
    %v4517 = vadd.f32 %v4476, %v4516
    %v4518 = vpop.f32.mrf.mxu0
    %v4519 = vpop.f32.mrf.mxu0
    %4520 = vdwg.mxu0
    %4521 = vmatprep.subr.bf16.mxu0 %v3511
    %4522 = vmatpush1.bf16.msra.mxu0 %v3510
    %4523 = vmatprep.subr.bf16.mxu0 %v3506
    %4524 = vmatpush1.bf16.msra.mxu0 %v3505
    %4525 = vmatprep.subr.bf16.mxu0 %v3501
    %4526 = vmatpush1.bf16.msra.mxu0 %v3500
    %4527 = vmatprep.subr.bf16.mxu0 %v3496
    %4528 = vmatpush1.bf16.msra.mxu0 %v3495
    %4529 = vmatprep.subr.bf16.mxu0 %v3491
    %4530 = vmatpush1.bf16.msra.mxu0 %v3490
    %4531 = vmatprep.subr.bf16.mxu0 %v3486
    %4532 = vmatpush1.bf16.msra.mxu0 %v3485
    %4533 = vmatprep.subr.bf16.mxu0 %v3481
    %4534 = vmatpush1.bf16.msra.mxu0 %v3480
    %4535 = vmatprep.subr.bf16.mxu0 %v3476
    %4536 = vmatpush1.bf16.msra.mxu0 %v3475
    %4537 = vmatprep.subr.bf16.mxu0 %v3551
    %4538 = vmatpush2.bf16.msra.mxu0 %v3550
    %4539 = vmatprep.subr.bf16.mxu0 %v3546
    %4540 = vmatpush2.bf16.msra.mxu0 %v3545
    %4541 = vmatprep.subr.bf16.mxu0 %v3541
    %4542 = vmatpush2.bf16.msra.mxu0 %v3540
    %4543 = vmatprep.subr.bf16.mxu0 %v3536
    %4544 = vmatpush2.bf16.msra.mxu0 %v3535
    %4545 = vmatprep.subr.bf16.mxu0 %v3531
    %4546 = vmatpush2.bf16.msra.mxu0 %v3530
    %4547 = vmatprep.subr.bf16.mxu0 %v3526
    %4548 = vmatpush2.bf16.msra.mxu0 %v3525
    %4549 = vmatprep.subr.bf16.mxu0 %v3521
    %4550 = vmatpush2.bf16.msra.mxu0 %v3520
    %4551 = vmatprep.subr.bf16.mxu0 %v3516
    %4552 = vmatpush2.bf16.msra.mxu0 %v3515
    %4553 = vmatprep.mubr.bf16.mxu0 %v926
    %4554 = vmatmul.mubr.bf16.gmra.mxu0 %v912
    %v4555 = vpop.f32.mrf.mxu0
    %v4556 = vadd.f32 %v4515, %v4555
    %v4557 = vpop.f32.mrf.mxu0
    %v4558 = vadd.f32 %v4517, %v4557
    %v4559 = vpop.f32.mrf.mxu0
    %v4560 = vpop.f32.mrf.mxu0
    %4561 = vdwg.mxu0
    %4562 = vmatprep.subr.bf16.mxu0 %v3591
    %4563 = vmatpush1.bf16.msra.mxu0 %v3590
    %4564 = vmatprep.subr.bf16.mxu0 %v3586
    %4565 = vmatpush1.bf16.msra.mxu0 %v3585
    %4566 = vmatprep.subr.bf16.mxu0 %v3581
    %4567 = vmatpush1.bf16.msra.mxu0 %v3580
    %4568 = vmatprep.subr.bf16.mxu0 %v3576
    %4569 = vmatpush1.bf16.msra.mxu0 %v3575
    %4570 = vmatprep.subr.bf16.mxu0 %v3571
    %4571 = vmatpush1.bf16.msra.mxu0 %v3570
    %4572 = vmatprep.subr.bf16.mxu0 %v3566
    %4573 = vmatpush1.bf16.msra.mxu0 %v3565
    %4574 = vmatprep.subr.bf16.mxu0 %v3561
    %4575 = vmatpush1.bf16.msra.mxu0 %v3560
    %4576 = vmatprep.subr.bf16.mxu0 %v3556
    %4577 = vmatpush1.bf16.msra.mxu0 %v3555
    %4578 = vmatprep.subr.bf16.mxu0 %v3631
    %4579 = vmatpush2.bf16.msra.mxu0 %v3630
    %4580 = vmatprep.subr.bf16.mxu0 %v3626
    %4581 = vmatpush2.bf16.msra.mxu0 %v3625
    %4582 = vmatprep.subr.bf16.mxu0 %v3621
    %4583 = vmatpush2.bf16.msra.mxu0 %v3620
    %4584 = vmatprep.subr.bf16.mxu0 %v3616
    %4585 = vmatpush2.bf16.msra.mxu0 %v3615
    %4586 = vmatprep.subr.bf16.mxu0 %v3611
    %4587 = vmatpush2.bf16.msra.mxu0 %v3610
    %4588 = vmatprep.subr.bf16.mxu0 %v3606
    %4589 = vmatpush2.bf16.msra.mxu0 %v3605
    %4590 = vmatprep.subr.bf16.mxu0 %v3601
    %4591 = vmatpush2.bf16.msra.mxu0 %v3600
    %4592 = vmatprep.subr.bf16.mxu0 %v3596
    %4593 = vmatpush2.bf16.msra.mxu0 %v3595
    %4594 = vmatprep.mubr.bf16.mxu0 %v930
    %4595 = vmatmul.mubr.bf16.gmra.mxu0 %v928
    %v4596 = vpop.f32.mrf.mxu0
    %v4597 = vadd.f32 %v4556, %v4596
    %v4598 = vpop.f32.mrf.mxu0
    %v4599 = vadd.f32 %v4558, %v4598
    %v4600 = vpop.f32.mrf.mxu0
    %v4601 = vpop.f32.mrf.mxu0
    %4602 = vdwg.mxu0
    %4603 = vmatprep.subr.bf16.mxu0 %v3033
    %4604 = vmatpush1.bf16.msra.mxu0 %v3032
    %4605 = vmatprep.subr.bf16.mxu0 %v3028
    %4606 = vmatpush1.bf16.msra.mxu0 %v3027
    %4607 = vmatprep.subr.bf16.mxu0 %v3023
    %4608 = vmatpush1.bf16.msra.mxu0 %v3022
    %4609 = vmatprep.subr.bf16.mxu0 %v3018
    %4610 = vmatpush1.bf16.msra.mxu0 %v3017
    %4611 = vmatprep.subr.bf16.mxu0 %v3013
    %4612 = vmatpush1.bf16.msra.mxu0 %v3012
    %4613 = vmatprep.subr.bf16.mxu0 %v3008
    %4614 = vmatpush1.bf16.msra.mxu0 %v3007
    %4615 = vmatprep.subr.bf16.mxu0 %v3003
    %4616 = vmatpush1.bf16.msra.mxu0 %v3002
    %4617 = vmatprep.subr.bf16.mxu0 %v2998
    %4618 = vmatpush1.bf16.msra.mxu0 %v2997
    %4619 = vmatprep.subr.bf16.mxu0 %v3073
    %4620 = vmatpush2.bf16.msra.mxu0 %v3072
    %4621 = vmatprep.subr.bf16.mxu0 %v3068
    %4622 = vmatpush2.bf16.msra.mxu0 %v3067
    %4623 = vmatprep.subr.bf16.mxu0 %v3063
    %4624 = vmatpush2.bf16.msra.mxu0 %v3062
    %4625 = vmatprep.subr.bf16.mxu0 %v3058
    %4626 = vmatpush2.bf16.msra.mxu0 %v3057
    %4627 = vmatprep.subr.bf16.mxu0 %v3053
    %4628 = vmatpush2.bf16.msra.mxu0 %v3052
    %4629 = vmatprep.subr.bf16.mxu0 %v3048
    %4630 = vmatpush2.bf16.msra.mxu0 %v3047
    %4631 = vmatprep.subr.bf16.mxu0 %v3043
    %4632 = vmatpush2.bf16.msra.mxu0 %v3042
    %4633 = vmatprep.subr.bf16.mxu0 %v3038
    %4634 = vmatpush2.bf16.msra.mxu0 %v3037
    %4635 = vmatprep.mubr.bf16.mxu0 %v870
    %4636 = vmatmul.mubr.bf16.gmra.mxu0 %v856
    %v4637 = vpop.f32.mrf.mxu0
    %v4638 = vadd.f32 %v817, %v4637
    %v4639 = vpop.f32.mrf.mxu0
    %v4640 = vadd.f32 %v821, %v4639
    %v4641 = vpop.f32.mrf.mxu0
    %v4642 = vpop.f32.mrf.mxu0
    %4643 = vdwg.mxu0
    %4644 = vmatprep.subr.bf16.mxu0 %v3113
    %4645 = vmatpush1.bf16.msra.mxu0 %v3112
    %4646 = vmatprep.subr.bf16.mxu0 %v3108
    %4647 = vmatpush1.bf16.msra.mxu0 %v3107
    %4648 = vmatprep.subr.bf16.mxu0 %v3103
    %4649 = vmatpush1.bf16.msra.mxu0 %v3102
    %4650 = vmatprep.subr.bf16.mxu0 %v3098
    %4651 = vmatpush1.bf16.msra.mxu0 %v3097
    %4652 = vmatprep.subr.bf16.mxu0 %v3093
    %4653 = vmatpush1.bf16.msra.mxu0 %v3092
    %4654 = vmatprep.subr.bf16.mxu0 %v3088
    %4655 = vmatpush1.bf16.msra.mxu0 %v3087
    %4656 = vmatprep.subr.bf16.mxu0 %v3083
    %4657 = vmatpush1.bf16.msra.mxu0 %v3082
    %4658 = vmatprep.subr.bf16.mxu0 %v3078
    %4659 = vmatpush1.bf16.msra.mxu0 %v3077
    %4660 = vmatprep.subr.bf16.mxu0 %v3153
    %4661 = vmatpush2.bf16.msra.mxu0 %v3152
    %4662 = vmatprep.subr.bf16.mxu0 %v3148
    %4663 = vmatpush2.bf16.msra.mxu0 %v3147
    %4664 = vmatprep.subr.bf16.mxu0 %v3143
    %4665 = vmatpush2.bf16.msra.mxu0 %v3142
    %4666 = vmatprep.subr.bf16.mxu0 %v3138
    %4667 = vmatpush2.bf16.msra.mxu0 %v3137
    %4668 = vmatprep.subr.bf16.mxu0 %v3133
    %4669 = vmatpush2.bf16.msra.mxu0 %v3132
    %4670 = vmatprep.subr.bf16.mxu0 %v3128
    %4671 = vmatpush2.bf16.msra.mxu0 %v3127
    %4672 = vmatprep.subr.bf16.mxu0 %v3123
    %4673 = vmatpush2.bf16.msra.mxu0 %v3122
    %4674 = vmatprep.subr.bf16.mxu0 %v3118
    %4675 = vmatpush2.bf16.msra.mxu0 %v3117
    %4676 = vmatprep.mubr.bf16.mxu0 %v880
    %4677 = vmatmul.mubr.bf16.gmra.mxu0 %v878
    %v4678 = vpop.f32.mrf.mxu0
    %v4679 = vadd.f32 %v4638, %v4678
    %v4680 = vpop.f32.mrf.mxu0
    %v4681 = vadd.f32 %v4640, %v4680
    %v4682 = vpop.f32.mrf.mxu0
    %v4683 = vpop.f32.mrf.mxu0
    %4684 = vdwg.mxu0
    %4685 = vmatprep.subr.bf16.mxu0 %v3193
    %4686 = vmatpush1.bf16.msra.mxu0 %v3192
    %4687 = vmatprep.subr.bf16.mxu0 %v3188
    %4688 = vmatpush1.bf16.msra.mxu0 %v3187
    %4689 = vmatprep.subr.bf16.mxu0 %v3183
    %4690 = vmatpush1.bf16.msra.mxu0 %v3182
    %4691 = vmatprep.subr.bf16.mxu0 %v3178
    %4692 = vmatpush1.bf16.msra.mxu0 %v3177
    %4693 = vmatprep.subr.bf16.mxu0 %v3173
    %4694 = vmatpush1.bf16.msra.mxu0 %v3172
    %4695 = vmatprep.subr.bf16.mxu0 %v3168
    %4696 = vmatpush1.bf16.msra.mxu0 %v3167
    %4697 = vmatprep.subr.bf16.mxu0 %v3163
    %4698 = vmatpush1.bf16.msra.mxu0 %v3162
    %4699 = vmatprep.subr.bf16.mxu0 %v3158
    %4700 = vmatpush1.bf16.msra.mxu0 %v3157
    %4701 = vmatprep.subr.bf16.mxu0 %v3233
    %4702 = vmatpush2.bf16.msra.mxu0 %v3232
    %4703 = vmatprep.subr.bf16.mxu0 %v3228
    %4704 = vmatpush2.bf16.msra.mxu0 %v3227
    %4705 = vmatprep.subr.bf16.mxu0 %v3223
    %4706 = vmatpush2.bf16.msra.mxu0 %v3222
    %4707 = vmatprep.subr.bf16.mxu0 %v3218
    %4708 = vmatpush2.bf16.msra.mxu0 %v3217
    %4709 = vmatprep.subr.bf16.mxu0 %v3213
    %4710 = vmatpush2.bf16.msra.mxu0 %v3212
    %4711 = vmatprep.subr.bf16.mxu0 %v3208
    %4712 = vmatpush2.bf16.msra.mxu0 %v3207
    %4713 = vmatprep.subr.bf16.mxu0 %v3203
    %4714 = vmatpush2.bf16.msra.mxu0 %v3202
    %4715 = vmatprep.subr.bf16.mxu0 %v3198
    %4716 = vmatpush2.bf16.msra.mxu0 %v3197
    %4717 = vmatprep.mubr.bf16.mxu0 %v877
    %4718 = vmatmul.mubr.bf16.gmra.mxu0 %v863
    %v4719 = vpop.f32.mrf.mxu0
    %v4720 = vadd.f32 %v4679, %v4719
    %v4721 = vpop.f32.mrf.mxu0
    %v4722 = vadd.f32 %v4681, %v4721
    %v4723 = vpop.f32.mrf.mxu0
    %v4724 = vpop.f32.mrf.mxu0
    %4725 = vdwg.mxu0
    %4726 = vmatprep.subr.bf16.mxu0 %v3273
    %4727 = vmatpush1.bf16.msra.mxu0 %v3272
    %4728 = vmatprep.subr.bf16.mxu0 %v3268
    %4729 = vmatpush1.bf16.msra.mxu0 %v3267
    %4730 = vmatprep.subr.bf16.mxu0 %v3263
    %4731 = vmatpush1.bf16.msra.mxu0 %v3262
    %4732 = vmatprep.subr.bf16.mxu0 %v3258
    %4733 = vmatpush1.bf16.msra.mxu0 %v3257
    %4734 = vmatprep.subr.bf16.mxu0 %v3253
    %4735 = vmatpush1.bf16.msra.mxu0 %v3252
    %4736 = vmatprep.subr.bf16.mxu0 %v3248
    %4737 = vmatpush1.bf16.msra.mxu0 %v3247
    %4738 = vmatprep.subr.bf16.mxu0 %v3243
    %4739 = vmatpush1.bf16.msra.mxu0 %v3242
    %4740 = vmatprep.subr.bf16.mxu0 %v3238
    %4741 = vmatpush1.bf16.msra.mxu0 %v3237
    %4742 = vmatprep.subr.bf16.mxu0 %v3313
    %4743 = vmatpush2.bf16.msra.mxu0 %v3312
    %4744 = vmatprep.subr.bf16.mxu0 %v3308
    %4745 = vmatpush2.bf16.msra.mxu0 %v3307
    %4746 = vmatprep.subr.bf16.mxu0 %v3303
    %4747 = vmatpush2.bf16.msra.mxu0 %v3302
    %4748 = vmatprep.subr.bf16.mxu0 %v3298
    %4749 = vmatpush2.bf16.msra.mxu0 %v3297
    %4750 = vmatprep.subr.bf16.mxu0 %v3293
    %4751 = vmatpush2.bf16.msra.mxu0 %v3292
    %4752 = vmatprep.subr.bf16.mxu0 %v3288
    %4753 = vmatpush2.bf16.msra.mxu0 %v3287
    %4754 = vmatprep.subr.bf16.mxu0 %v3283
    %4755 = vmatpush2.bf16.msra.mxu0 %v3282
    %4756 = vmatprep.subr.bf16.mxu0 %v3278
    %4757 = vmatpush2.bf16.msra.mxu0 %v3277
    %4758 = vmatprep.mubr.bf16.mxu0 %v881
    %4759 = vmatmul.mubr.bf16.gmra.mxu0 %v879
    %v4760 = vpop.f32.mrf.mxu0
    %v4761 = vadd.f32 %v4720, %v4760
    %v4762 = vpop.f32.mrf.mxu0
    %v4763 = vadd.f32 %v4722, %v4762
    %v4764 = vpop.f32.mrf.mxu0
    %v4765 = vpop.f32.mrf.mxu0
    %4766 = vdwg.mxu0
    %4767 = vmatprep.subr.bf16.mxu0 %v3353
    %4768 = vmatpush1.bf16.msra.mxu0 %v3352
    %4769 = vmatprep.subr.bf16.mxu0 %v3348
    %4770 = vmatpush1.bf16.msra.mxu0 %v3347
    %4771 = vmatprep.subr.bf16.mxu0 %v3343
    %4772 = vmatpush1.bf16.msra.mxu0 %v3342
    %4773 = vmatprep.subr.bf16.mxu0 %v3338
    %4774 = vmatpush1.bf16.msra.mxu0 %v3337
    %4775 = vmatprep.subr.bf16.mxu0 %v3333
    %4776 = vmatpush1.bf16.msra.mxu0 %v3332
    %4777 = vmatprep.subr.bf16.mxu0 %v3328
    %4778 = vmatpush1.bf16.msra.mxu0 %v3327
    %4779 = vmatprep.subr.bf16.mxu0 %v3323
    %4780 = vmatpush1.bf16.msra.mxu0 %v3322
    %4781 = vmatprep.subr.bf16.mxu0 %v3318
    %4782 = vmatpush1.bf16.msra.mxu0 %v3317
    %4783 = vmatprep.subr.bf16.mxu0 %v3393
    %4784 = vmatpush2.bf16.msra.mxu0 %v3392
    %4785 = vmatprep.subr.bf16.mxu0 %v3388
    %4786 = vmatpush2.bf16.msra.mxu0 %v3387
    %4787 = vmatprep.subr.bf16.mxu0 %v3383
    %4788 = vmatpush2.bf16.msra.mxu0 %v3382
    %4789 = vmatprep.subr.bf16.mxu0 %v3378
    %4790 = vmatpush2.bf16.msra.mxu0 %v3377
    %4791 = vmatprep.subr.bf16.mxu0 %v3373
    %4792 = vmatpush2.bf16.msra.mxu0 %v3372
    %4793 = vmatprep.subr.bf16.mxu0 %v3368
    %4794 = vmatpush2.bf16.msra.mxu0 %v3367
    %4795 = vmatprep.subr.bf16.mxu0 %v3363
    %4796 = vmatpush2.bf16.msra.mxu0 %v3362
    %4797 = vmatprep.subr.bf16.mxu0 %v3358
    %4798 = vmatpush2.bf16.msra.mxu0 %v3357
    %4799 = vmatprep.mubr.bf16.mxu0 %v919
    %4800 = vmatmul.mubr.bf16.gmra.mxu0 %v905
    %v4801 = vpop.f32.mrf.mxu0
    %v4802 = vadd.f32 %v4761, %v4801
    %v4803 = vpop.f32.mrf.mxu0
    %v4804 = vadd.f32 %v4763, %v4803
    %v4805 = vpop.f32.mrf.mxu0
    %v4806 = vpop.f32.mrf.mxu0
    %4807 = vdwg.mxu0
    %4808 = vmatprep.subr.bf16.mxu0 %v3433
    %4809 = vmatpush1.bf16.msra.mxu0 %v3432
    %4810 = vmatprep.subr.bf16.mxu0 %v3428
    %4811 = vmatpush1.bf16.msra.mxu0 %v3427
    %4812 = vmatprep.subr.bf16.mxu0 %v3423
    %4813 = vmatpush1.bf16.msra.mxu0 %v3422
    %4814 = vmatprep.subr.bf16.mxu0 %v3418
    %4815 = vmatpush1.bf16.msra.mxu0 %v3417
    %4816 = vmatprep.subr.bf16.mxu0 %v3413
    %4817 = vmatpush1.bf16.msra.mxu0 %v3412
    %4818 = vmatprep.subr.bf16.mxu0 %v3408
    %4819 = vmatpush1.bf16.msra.mxu0 %v3407
    %4820 = vmatprep.subr.bf16.mxu0 %v3403
    %4821 = vmatpush1.bf16.msra.mxu0 %v3402
    %4822 = vmatprep.subr.bf16.mxu0 %v3398
    %4823 = vmatpush1.bf16.msra.mxu0 %v3397
    %4824 = vmatprep.subr.bf16.mxu0 %v3473
    %4825 = vmatpush2.bf16.msra.mxu0 %v3472
    %4826 = vmatprep.subr.bf16.mxu0 %v3468
    %4827 = vmatpush2.bf16.msra.mxu0 %v3467
    %4828 = vmatprep.subr.bf16.mxu0 %v3463
    %4829 = vmatpush2.bf16.msra.mxu0 %v3462
    %4830 = vmatprep.subr.bf16.mxu0 %v3458
    %4831 = vmatpush2.bf16.msra.mxu0 %v3457
    %4832 = vmatprep.subr.bf16.mxu0 %v3453
    %4833 = vmatpush2.bf16.msra.mxu0 %v3452
    %4834 = vmatprep.subr.bf16.mxu0 %v3448
    %4835 = vmatpush2.bf16.msra.mxu0 %v3447
    %4836 = vmatprep.subr.bf16.mxu0 %v3443
    %4837 = vmatpush2.bf16.msra.mxu0 %v3442
    %4838 = vmatprep.subr.bf16.mxu0 %v3438
    %4839 = vmatpush2.bf16.msra.mxu0 %v3437
    %4840 = vmatprep.mubr.bf16.mxu0 %v929
    %4841 = vmatmul.mubr.bf16.gmra.mxu0 %v927
    %v4842 = vpop.f32.mrf.mxu0
    %v4843 = vadd.f32 %v4802, %v4842
    %v4844 = vpop.f32.mrf.mxu0
    %v4845 = vadd.f32 %v4804, %v4844
    %v4846 = vpop.f32.mrf.mxu0
    %v4847 = vpop.f32.mrf.mxu0
    %4848 = vdwg.mxu0
    %4849 = vmatprep.subr.bf16.mxu0 %v3513
    %4850 = vmatpush1.bf16.msra.mxu0 %v3512
    %4851 = vmatprep.subr.bf16.mxu0 %v3508
    %4852 = vmatpush1.bf16.msra.mxu0 %v3507
    %4853 = vmatprep.subr.bf16.mxu0 %v3503
    %4854 = vmatpush1.bf16.msra.mxu0 %v3502
    %4855 = vmatprep.subr.bf16.mxu0 %v3498
    %4856 = vmatpush1.bf16.msra.mxu0 %v3497
    %4857 = vmatprep.subr.bf16.mxu0 %v3493
    %4858 = vmatpush1.bf16.msra.mxu0 %v3492
    %4859 = vmatprep.subr.bf16.mxu0 %v3488
    %4860 = vmatpush1.bf16.msra.mxu0 %v3487
    %4861 = vmatprep.subr.bf16.mxu0 %v3483
    %4862 = vmatpush1.bf16.msra.mxu0 %v3482
    %4863 = vmatprep.subr.bf16.mxu0 %v3478
    %4864 = vmatpush1.bf16.msra.mxu0 %v3477
    %4865 = vmatprep.subr.bf16.mxu0 %v3553
    %4866 = vmatpush2.bf16.msra.mxu0 %v3552
    %4867 = vmatprep.subr.bf16.mxu0 %v3548
    %4868 = vmatpush2.bf16.msra.mxu0 %v3547
    %4869 = vmatprep.subr.bf16.mxu0 %v3543
    %4870 = vmatpush2.bf16.msra.mxu0 %v3542
    %4871 = vmatprep.subr.bf16.mxu0 %v3538
    %4872 = vmatpush2.bf16.msra.mxu0 %v3537
    %4873 = vmatprep.subr.bf16.mxu0 %v3533
    %4874 = vmatpush2.bf16.msra.mxu0 %v3532
    %4875 = vmatprep.subr.bf16.mxu0 %v3528
    %4876 = vmatpush2.bf16.msra.mxu0 %v3527
    %4877 = vmatprep.subr.bf16.mxu0 %v3523
    %4878 = vmatpush2.bf16.msra.mxu0 %v3522
    %4879 = vmatprep.subr.bf16.mxu0 %v3518
    %4880 = vmatpush2.bf16.msra.mxu0 %v3517
    %4881 = vmatprep.mubr.bf16.mxu0 %v926
    %4882 = vmatmul.mubr.bf16.gmra.mxu0 %v912
    %v4883 = vpop.f32.mrf.mxu0
    %v4884 = vadd.f32 %v4843, %v4883
    %v4885 = vpop.f32.mrf.mxu0
    %v4886 = vadd.f32 %v4845, %v4885
    %v4887 = vpop.f32.mrf.mxu0
    %v4888 = vpop.f32.mrf.mxu0
    %4889 = vdwg.mxu0
    %4890 = vmatprep.subr.bf16.mxu0 %v3593
    %4891 = vmatpush1.bf16.msra.mxu0 %v3592
    %4892 = vmatprep.subr.bf16.mxu0 %v3588
    %4893 = vmatpush1.bf16.msra.mxu0 %v3587
    %4894 = vmatprep.subr.bf16.mxu0 %v3583
    %4895 = vmatpush1.bf16.msra.mxu0 %v3582
    %4896 = vmatprep.subr.bf16.mxu0 %v3578
    %4897 = vmatpush1.bf16.msra.mxu0 %v3577
    %4898 = vmatprep.subr.bf16.mxu0 %v3573
    %4899 = vmatpush1.bf16.msra.mxu0 %v3572
    %4900 = vmatprep.subr.bf16.mxu0 %v3568
    %4901 = vmatpush1.bf16.msra.mxu0 %v3567
    %4902 = vmatprep.subr.bf16.mxu0 %v3563
    %4903 = vmatpush1.bf16.msra.mxu0 %v3562
    %4904 = vmatprep.subr.bf16.mxu0 %v3558
    %4905 = vmatpush1.bf16.msra.mxu0 %v3557
    %4906 = vmatprep.subr.bf16.mxu0 %v3633
    %4907 = vmatpush2.bf16.msra.mxu0 %v3632
    %4908 = vmatprep.subr.bf16.mxu0 %v3628
    %4909 = vmatpush2.bf16.msra.mxu0 %v3627
    %4910 = vmatprep.subr.bf16.mxu0 %v3623
    %4911 = vmatpush2.bf16.msra.mxu0 %v3622
    %4912 = vmatprep.subr.bf16.mxu0 %v3618
    %4913 = vmatpush2.bf16.msra.mxu0 %v3617
    %4914 = vmatprep.subr.bf16.mxu0 %v3613
    %4915 = vmatpush2.bf16.msra.mxu0 %v3612
    %4916 = vmatprep.subr.bf16.mxu0 %v3608
    %4917 = vmatpush2.bf16.msra.mxu0 %v3607
    %4918 = vmatprep.subr.bf16.mxu0 %v3603
    %4919 = vmatpush2.bf16.msra.mxu0 %v3602
    %4920 = vmatprep.subr.bf16.mxu0 %v3598
    %4921 = vmatpush2.bf16.msra.mxu0 %v3597
    %4922 = vmatprep.mubr.bf16.mxu0 %v930
    %4923 = vmatmul.mubr.bf16.gmra.mxu0 %v928
    %v4924 = vpop.f32.mrf.mxu0
    %v4925 = vadd.f32 %v4884, %v4924
    %v4926 = vpop.f32.mrf.mxu0
    %v4927 = vadd.f32 %v4886, %v4926
    %v4928 = vpop.f32.mrf.mxu0
    %v4929 = vpop.f32.mrf.mxu0
    %4930 = vdwg.mxu0
    %4931 = vmatprep.subr.bf16.mxu0 0
    %4932 = vmatpush1.bf16.msra.mxu0 %v3034
    %4933 = vmatprep.subr.bf16.mxu0 0
    %4934 = vmatpush1.bf16.msra.mxu0 %v3029
    %4935 = vmatprep.subr.bf16.mxu0 0
    %4936 = vmatpush1.bf16.msra.mxu0 %v3024
    %4937 = vmatprep.subr.bf16.mxu0 0
    %4938 = vmatpush1.bf16.msra.mxu0 %v3019
    %4939 = vmatprep.subr.bf16.mxu0 0
    %4940 = vmatpush1.bf16.msra.mxu0 %v3014
    %4941 = vmatprep.subr.bf16.mxu0 0
    %4942 = vmatpush1.bf16.msra.mxu0 %v3009
    %4943 = vmatprep.subr.bf16.mxu0 0
    %4944 = vmatpush1.bf16.msra.mxu0 %v3004
    %4945 = vmatprep.subr.bf16.mxu0 0
    %4946 = vmatpush1.bf16.msra.mxu0 %v2999
    %4947 = vmatprep.subr.bf16.mxu0 0
    %4948 = vmatpush2.bf16.msra.mxu0 %v3074
    %4949 = vmatprep.subr.bf16.mxu0 0
    %4950 = vmatpush2.bf16.msra.mxu0 %v3069
    %4951 = vmatprep.subr.bf16.mxu0 0
    %4952 = vmatpush2.bf16.msra.mxu0 %v3064
    %4953 = vmatprep.subr.bf16.mxu0 0
    %4954 = vmatpush2.bf16.msra.mxu0 %v3059
    %4955 = vmatprep.subr.bf16.mxu0 0
    %4956 = vmatpush2.bf16.msra.mxu0 %v3054
    %4957 = vmatprep.subr.bf16.mxu0 0
    %4958 = vmatpush2.bf16.msra.mxu0 %v3049
    %4959 = vmatprep.subr.bf16.mxu0 0
    %4960 = vmatpush2.bf16.msra.mxu0 %v3044
    %4961 = vmatprep.subr.bf16.mxu0 0
    %4962 = vmatpush2.bf16.msra.mxu0 %v3039
    %4963 = vmatprep.mubr.bf16.mxu0 %v870
    %4964 = vmatmul.mubr.bf16.gmra.mxu0 %v856
    %v4965 = vpop.f32.mrf.mxu0
    %v4966 = vadd.f32 %v825, %v4965
    %v4967 = vpop.f32.mrf.mxu0
    %v4968 = vpop.f32.mrf.mxu0
    %v4969 = vpop.f32.mrf.mxu0
    %4970 = vdwg.mxu0
    %4971 = vmatprep.subr.bf16.mxu0 0
    %4972 = vmatpush1.bf16.msra.mxu0 %v3114
    %4973 = vmatprep.subr.bf16.mxu0 0
    %4974 = vmatpush1.bf16.msra.mxu0 %v3109
    %4975 = vmatprep.subr.bf16.mxu0 0
    %4976 = vmatpush1.bf16.msra.mxu0 %v3104
    %4977 = vmatprep.subr.bf16.mxu0 0
    %4978 = vmatpush1.bf16.msra.mxu0 %v3099
    %4979 = vmatprep.subr.bf16.mxu0 0
    %4980 = vmatpush1.bf16.msra.mxu0 %v3094
    %4981 = vmatprep.subr.bf16.mxu0 0
    %4982 = vmatpush1.bf16.msra.mxu0 %v3089
    %4983 = vmatprep.subr.bf16.mxu0 0
    %4984 = vmatpush1.bf16.msra.mxu0 %v3084
    %4985 = vmatprep.subr.bf16.mxu0 0
    %4986 = vmatpush1.bf16.msra.mxu0 %v3079
    %4987 = vmatprep.subr.bf16.mxu0 0
    %4988 = vmatpush2.bf16.msra.mxu0 %v3154
    %4989 = vmatprep.subr.bf16.mxu0 0
    %4990 = vmatpush2.bf16.msra.mxu0 %v3149
    %4991 = vmatprep.subr.bf16.mxu0 0
    %4992 = vmatpush2.bf16.msra.mxu0 %v3144
    %4993 = vmatprep.subr.bf16.mxu0 0
    %4994 = vmatpush2.bf16.msra.mxu0 %v3139
    %4995 = vmatprep.subr.bf16.mxu0 0
    %4996 = vmatpush2.bf16.msra.mxu0 %v3134
    %4997 = vmatprep.subr.bf16.mxu0 0
    %4998 = vmatpush2.bf16.msra.mxu0 %v3129
    %4999 = vmatprep.subr.bf16.mxu0 0
    %5000 = vmatpush2.bf16.msra.mxu0 %v3124
    %5001 = vmatprep.subr.bf16.mxu0 0
    %5002 = vmatpush2.bf16.msra.mxu0 %v3119
    %5003 = vmatprep.mubr.bf16.mxu0 %v880
    %5004 = vmatmul.mubr.bf16.gmra.mxu0 %v878
    %v5005 = vpop.f32.mrf.mxu0
    %v5006 = vadd.f32 %v4966, %v5005
    %v5007 = vpop.f32.mrf.mxu0
    %v5008 = vpop.f32.mrf.mxu0
    %v5009 = vpop.f32.mrf.mxu0
    %5010 = vdwg.mxu0
    %5011 = vmatprep.subr.bf16.mxu0 0
    %5012 = vmatpush1.bf16.msra.mxu0 %v3194
    %5013 = vmatprep.subr.bf16.mxu0 0
    %5014 = vmatpush1.bf16.msra.mxu0 %v3189
    %5015 = vmatprep.subr.bf16.mxu0 0
    %5016 = vmatpush1.bf16.msra.mxu0 %v3184
    %5017 = vmatprep.subr.bf16.mxu0 0
    %5018 = vmatpush1.bf16.msra.mxu0 %v3179
    %5019 = vmatprep.subr.bf16.mxu0 0
    %5020 = vmatpush1.bf16.msra.mxu0 %v3174
    %5021 = vmatprep.subr.bf16.mxu0 0
    %5022 = vmatpush1.bf16.msra.mxu0 %v3169
    %5023 = vmatprep.subr.bf16.mxu0 0
    %5024 = vmatpush1.bf16.msra.mxu0 %v3164
    %5025 = vmatprep.subr.bf16.mxu0 0
    %5026 = vmatpush1.bf16.msra.mxu0 %v3159
    %5027 = vmatprep.subr.bf16.mxu0 0
    %5028 = vmatpush2.bf16.msra.mxu0 %v3234
    %5029 = vmatprep.subr.bf16.mxu0 0
    %5030 = vmatpush2.bf16.msra.mxu0 %v3229
    %5031 = vmatprep.subr.bf16.mxu0 0
    %5032 = vmatpush2.bf16.msra.mxu0 %v3224
    %5033 = vmatprep.subr.bf16.mxu0 0
    %5034 = vmatpush2.bf16.msra.mxu0 %v3219
    %5035 = vmatprep.subr.bf16.mxu0 0
    %5036 = vmatpush2.bf16.msra.mxu0 %v3214
    %5037 = vmatprep.subr.bf16.mxu0 0
    %5038 = vmatpush2.bf16.msra.mxu0 %v3209
    %5039 = vmatprep.subr.bf16.mxu0 0
    %5040 = vmatpush2.bf16.msra.mxu0 %v3204
    %5041 = vmatprep.subr.bf16.mxu0 0
    %5042 = vmatpush2.bf16.msra.mxu0 %v3199
    %5043 = vmatprep.mubr.bf16.mxu0 %v877
    %5044 = vmatmul.mubr.bf16.gmra.mxu0 %v863
    %v5045 = vpop.f32.mrf.mxu0
    %v5046 = vadd.f32 %v5006, %v5045
    %v5047 = vpop.f32.mrf.mxu0
    %v5048 = vpop.f32.mrf.mxu0
    %v5049 = vpop.f32.mrf.mxu0
    %5050 = vdwg.mxu0
    %5051 = vmatprep.subr.bf16.mxu0 0
    %5052 = vmatpush1.bf16.msra.mxu0 %v3274
    %5053 = vmatprep.subr.bf16.mxu0 0
    %5054 = vmatpush1.bf16.msra.mxu0 %v3269
    %5055 = vmatprep.subr.bf16.mxu0 0
    %5056 = vmatpush1.bf16.msra.mxu0 %v3264
    %5057 = vmatprep.subr.bf16.mxu0 0
    %5058 = vmatpush1.bf16.msra.mxu0 %v3259
    %5059 = vmatprep.subr.bf16.mxu0 0
    %5060 = vmatpush1.bf16.msra.mxu0 %v3254
    %5061 = vmatprep.subr.bf16.mxu0 0
    %5062 = vmatpush1.bf16.msra.mxu0 %v3249
    %5063 = vmatprep.subr.bf16.mxu0 0
    %5064 = vmatpush1.bf16.msra.mxu0 %v3244
    %5065 = vmatprep.subr.bf16.mxu0 0
    %5066 = vmatpush1.bf16.msra.mxu0 %v3239
    %5067 = vmatprep.subr.bf16.mxu0 0
    %5068 = vmatpush2.bf16.msra.mxu0 %v3314
    %5069 = vmatprep.subr.bf16.mxu0 0
    %5070 = vmatpush2.bf16.msra.mxu0 %v3309
    %5071 = vmatprep.subr.bf16.mxu0 0
    %5072 = vmatpush2.bf16.msra.mxu0 %v3304
    %5073 = vmatprep.subr.bf16.mxu0 0
    %5074 = vmatpush2.bf16.msra.mxu0 %v3299
    %5075 = vmatprep.subr.bf16.mxu0 0
    %5076 = vmatpush2.bf16.msra.mxu0 %v3294
    %5077 = vmatprep.subr.bf16.mxu0 0
    %5078 = vmatpush2.bf16.msra.mxu0 %v3289
    %5079 = vmatprep.subr.bf16.mxu0 0
    %5080 = vmatpush2.bf16.msra.mxu0 %v3284
    %5081 = vmatprep.subr.bf16.mxu0 0
    %5082 = vmatpush2.bf16.msra.mxu0 %v3279
    %5083 = vmatprep.mubr.bf16.mxu0 %v881
    %5084 = vmatmul.mubr.bf16.gmra.mxu0 %v879
    %v5085 = vpop.f32.mrf.mxu0
    %v5086 = vadd.f32 %v5046, %v5085
    %v5087 = vpop.f32.mrf.mxu0
    %v5088 = vpop.f32.mrf.mxu0
    %v5089 = vpop.f32.mrf.mxu0
    %5090 = vdwg.mxu0
    %5091 = vmatprep.subr.bf16.mxu0 0
    %5092 = vmatpush1.bf16.msra.mxu0 %v3354
    %5093 = vmatprep.subr.bf16.mxu0 0
    %5094 = vmatpush1.bf16.msra.mxu0 %v3349
    %5095 = vmatprep.subr.bf16.mxu0 0
    %5096 = vmatpush1.bf16.msra.mxu0 %v3344
    %5097 = vmatprep.subr.bf16.mxu0 0
    %5098 = vmatpush1.bf16.msra.mxu0 %v3339
    %5099 = vmatprep.subr.bf16.mxu0 0
    %5100 = vmatpush1.bf16.msra.mxu0 %v3334
    %5101 = vmatprep.subr.bf16.mxu0 0
    %5102 = vmatpush1.bf16.msra.mxu0 %v3329
    %5103 = vmatprep.subr.bf16.mxu0 0
    %5104 = vmatpush1.bf16.msra.mxu0 %v3324
    %5105 = vmatprep.subr.bf16.mxu0 0
    %5106 = vmatpush1.bf16.msra.mxu0 %v3319
    %5107 = vmatprep.subr.bf16.mxu0 0
    %5108 = vmatpush2.bf16.msra.mxu0 %v3394
    %5109 = vmatprep.subr.bf16.mxu0 0
    %5110 = vmatpush2.bf16.msra.mxu0 %v3389
    %5111 = vmatprep.subr.bf16.mxu0 0
    %5112 = vmatpush2.bf16.msra.mxu0 %v3384
    %5113 = vmatprep.subr.bf16.mxu0 0
    %5114 = vmatpush2.bf16.msra.mxu0 %v3379
    %5115 = vmatprep.subr.bf16.mxu0 0
    %5116 = vmatpush2.bf16.msra.mxu0 %v3374
    %5117 = vmatprep.subr.bf16.mxu0 0
    %5118 = vmatpush2.bf16.msra.mxu0 %v3369
    %5119 = vmatprep.subr.bf16.mxu0 0
    %5120 = vmatpush2.bf16.msra.mxu0 %v3364
    %5121 = vmatprep.subr.bf16.mxu0 0
    %5122 = vmatpush2.bf16.msra.mxu0 %v3359
    %5123 = vmatprep.mubr.bf16.mxu0 %v919
    %5124 = vmatmul.mubr.bf16.gmra.mxu0 %v905
    %v5125 = vpop.f32.mrf.mxu0
    %v5126 = vadd.f32 %v5086, %v5125
    %v5127 = vpop.f32.mrf.mxu0
    %v5128 = vpop.f32.mrf.mxu0
    %v5129 = vpop.f32.mrf.mxu0
    %5130 = vdwg.mxu0
    %5131 = vmatprep.subr.bf16.mxu0 0
    %5132 = vmatpush1.bf16.msra.mxu0 %v3434
    %5133 = vmatprep.subr.bf16.mxu0 0
    %5134 = vmatpush1.bf16.msra.mxu0 %v3429
    %5135 = vmatprep.subr.bf16.mxu0 0
    %5136 = vmatpush1.bf16.msra.mxu0 %v3424
    %5137 = vmatprep.subr.bf16.mxu0 0
    %5138 = vmatpush1.bf16.msra.mxu0 %v3419
    %5139 = vmatprep.subr.bf16.mxu0 0
    %5140 = vmatpush1.bf16.msra.mxu0 %v3414
    %5141 = vmatprep.subr.bf16.mxu0 0
    %5142 = vmatpush1.bf16.msra.mxu0 %v3409
    %5143 = vmatprep.subr.bf16.mxu0 0
    %5144 = vmatpush1.bf16.msra.mxu0 %v3404
    %5145 = vmatprep.subr.bf16.mxu0 0
    %5146 = vmatpush1.bf16.msra.mxu0 %v3399
    %5147 = vmatprep.subr.bf16.mxu0 0
    %5148 = vmatpush2.bf16.msra.mxu0 %v3474
    %5149 = vmatprep.subr.bf16.mxu0 0
    %5150 = vmatpush2.bf16.msra.mxu0 %v3469
    %5151 = vmatprep.subr.bf16.mxu0 0
    %5152 = vmatpush2.bf16.msra.mxu0 %v3464
    %5153 = vmatprep.subr.bf16.mxu0 0
    %5154 = vmatpush2.bf16.msra.mxu0 %v3459
    %5155 = vmatprep.subr.bf16.mxu0 0
    %5156 = vmatpush2.bf16.msra.mxu0 %v3454
    %5157 = vmatprep.subr.bf16.mxu0 0
    %5158 = vmatpush2.bf16.msra.mxu0 %v3449
    %5159 = vmatprep.subr.bf16.mxu0 0
    %5160 = vmatpush2.bf16.msra.mxu0 %v3444
    %5161 = vmatprep.subr.bf16.mxu0 0
    %5162 = vmatpush2.bf16.msra.mxu0 %v3439
    %5163 = vmatprep.mubr.bf16.mxu0 %v929
    %5164 = vmatmul.mubr.bf16.gmra.mxu0 %v927
    %v5165 = vpop.f32.mrf.mxu0
    %v5166 = vadd.f32 %v5126, %v5165
    %v5167 = vpop.f32.mrf.mxu0
    %v5168 = vpop.f32.mrf.mxu0
    %v5169 = vpop.f32.mrf.mxu0
    %5170 = vdwg.mxu0
    %5171 = vmatprep.subr.bf16.mxu0 0
    %5172 = vmatpush1.bf16.msra.mxu0 %v3514
    %5173 = vmatprep.subr.bf16.mxu0 0
    %5174 = vmatpush1.bf16.msra.mxu0 %v3509
    %5175 = vmatprep.subr.bf16.mxu0 0
    %5176 = vmatpush1.bf16.msra.mxu0 %v3504
    %5177 = vmatprep.subr.bf16.mxu0 0
    %5178 = vmatpush1.bf16.msra.mxu0 %v3499
    %5179 = vmatprep.subr.bf16.mxu0 0
    %5180 = vmatpush1.bf16.msra.mxu0 %v3494
    %5181 = vmatprep.subr.bf16.mxu0 0
    %5182 = vmatpush1.bf16.msra.mxu0 %v3489
    %5183 = vmatprep.subr.bf16.mxu0 0
    %5184 = vmatpush1.bf16.msra.mxu0 %v3484
    %5185 = vmatprep.subr.bf16.mxu0 0
    %5186 = vmatpush1.bf16.msra.mxu0 %v3479
    %5187 = vmatprep.subr.bf16.mxu0 0
    %5188 = vmatpush2.bf16.msra.mxu0 %v3554
    %5189 = vmatprep.subr.bf16.mxu0 0
    %5190 = vmatpush2.bf16.msra.mxu0 %v3549
    %5191 = vmatprep.subr.bf16.mxu0 0
    %5192 = vmatpush2.bf16.msra.mxu0 %v3544
    %5193 = vmatprep.subr.bf16.mxu0 0
    %5194 = vmatpush2.bf16.msra.mxu0 %v3539
    %5195 = vmatprep.subr.bf16.mxu0 0
    %5196 = vmatpush2.bf16.msra.mxu0 %v3534
    %5197 = vmatprep.subr.bf16.mxu0 0
    %5198 = vmatpush2.bf16.msra.mxu0 %v3529
    %5199 = vmatprep.subr.bf16.mxu0 0
    %5200 = vmatpush2.bf16.msra.mxu0 %v3524
    %5201 = vmatprep.subr.bf16.mxu0 0
    %5202 = vmatpush2.bf16.msra.mxu0 %v3519
    %5203 = vmatprep.mubr.bf16.mxu0 %v926
    %5204 = vmatmul.mubr.bf16.gmra.mxu0 %v912
    %v5205 = vpop.f32.mrf.mxu0
    %v5206 = vadd.f32 %v5166, %v5205
    %v5207 = vpop.f32.mrf.mxu0
    %v5208 = vpop.f32.mrf.mxu0
    %v5209 = vpop.f32.mrf.mxu0
    %5210 = vdwg.mxu0
    %5211 = vmatprep.subr.bf16.mxu0 0
    %5212 = vmatpush1.bf16.msra.mxu0 %v3594
    %5213 = vmatprep.subr.bf16.mxu0 0
    %5214 = vmatpush1.bf16.msra.mxu0 %v3589
    %5215 = vmatprep.subr.bf16.mxu0 0
    %5216 = vmatpush1.bf16.msra.mxu0 %v3584
    %5217 = vmatprep.subr.bf16.mxu0 0
    %5218 = vmatpush1.bf16.msra.mxu0 %v3579
    %5219 = vmatprep.subr.bf16.mxu0 0
    %5220 = vmatpush1.bf16.msra.mxu0 %v3574
    %5221 = vmatprep.subr.bf16.mxu0 0
    %5222 = vmatpush1.bf16.msra.mxu0 %v3569
    %5223 = vmatprep.subr.bf16.mxu0 0
    %5224 = vmatpush1.bf16.msra.mxu0 %v3564
    %5225 = vmatprep.subr.bf16.mxu0 0
    %5226 = vmatpush1.bf16.msra.mxu0 %v3559
    %5227 = vmatprep.subr.bf16.mxu0 0
    %5228 = vmatpush2.bf16.msra.mxu0 %v3634
    %5229 = vmatprep.subr.bf16.mxu0 0
    %5230 = vmatpush2.bf16.msra.mxu0 %v3629
    %5231 = vmatprep.subr.bf16.mxu0 0
    %5232 = vmatpush2.bf16.msra.mxu0 %v3624
    %5233 = vmatprep.subr.bf16.mxu0 0
    %5234 = vmatpush2.bf16.msra.mxu0 %v3619
    %5235 = vmatprep.subr.bf16.mxu0 0
    %5236 = vmatpush2.bf16.msra.mxu0 %v3614
    %5237 = vmatprep.subr.bf16.mxu0 0
    %5238 = vmatpush2.bf16.msra.mxu0 %v3609
    %5239 = vmatprep.subr.bf16.mxu0 0
    %5240 = vmatpush2.bf16.msra.mxu0 %v3604
    %5241 = vmatprep.subr.bf16.mxu0 0
    %5242 = vmatpush2.bf16.msra.mxu0 %v3599
    %5243 = vmatprep.mubr.bf16.mxu0 %v930
    %5244 = vmatmul.mubr.bf16.gmra.mxu0 %v928
    %v5245 = vpop.f32.mrf.mxu0
    %v5246 = vadd.f32 %v5206, %v5245
    %v5247 = vpop.f32.mrf.mxu0
    %v5248 = vpop.f32.mrf.mxu0
    %v5249 = vpop.f32.mrf.mxu0
    %5250 = vdwg.mxu0
    %v5251 = vmax.f32 %v4597, 0.0
    %v5252 = vmax.f32 %v4599, 0.0
    %v5253 = vmax.f32 %v4925, 0.0
    %v5254 = vmax.f32 %v4927, 0.0
    %v5255 = vmax.f32 %v5246, 0.0
    %v5256 = vpack.c.bf16 %v5251, %v5251
    %v5257 = vpack.c.bf16 %v5252, %v5252
    %v5258 = vpack.c.bf16 %v5253, %v5253
    %v5259 = vpack.c.bf16 %v5254, %v5254
    %v5260 = vpack.c.bf16 %v5255, %v5255
    %v5261 = vld [vmem:[%s3] sm:$0xf]
    %v5262 = vld [vmem:[%s3 + $0x4] sm:$0xf]
    %v5263 = vld [vmem:[%s3 + $0x8] sm:$0xf]
    %v5264 = vld [vmem:[%s3 + $0xc] sm:$0xf]
    %v5265 = vld [vmem:[%s3 + $0x10] sm:$0xf]
    %v5266 = vld [vmem:[%s3 + $0x14] sm:$0xf]
    %v5267 = vld [vmem:[%s3 + $0x18] sm:$0xf]
    %v5268 = vld [vmem:[%s3 + $0x1c] sm:$0xf]
    %v5269 = vld [vmem:[%s3 + $0x20] sm:$0xf]
    %v5270 = vld [vmem:[%s3 + $0x24] sm:$0xf]
    %v5271 = vld [vmem:[%s3 + $0x28] sm:$0xf]
    %v5272 = vld [vmem:[%s3 + $0x2c] sm:$0xf]
    %v5273 = vld [vmem:[%s3 + $0x30] sm:$0xf]
    %v5274 = vld [vmem:[%s3 + $0x34] sm:$0xf]
    %v5275 = vld [vmem:[%s3 + $0x38] sm:$0xf]
    %v5276 = vld [vmem:[%s3 + $0x3c] sm:$0xf]
    %v5277 = vld [vmem:[%s3 + $0x40] sm:$0xf]
    %v5278 = vld [vmem:[%s3 + $0x44] sm:$0xf]
    %v5279 = vld [vmem:[%s3 + $0x48] sm:$0xf]
    %v5280 = vld [vmem:[%s3 + $0x4c] sm:$0xf]
    %v5281 = vld [vmem:[%s3 + $0x50] sm:$0xf]
    %v5282 = vld [vmem:[%s3 + $0x54] sm:$0xf]
    %v5283 = vld [vmem:[%s3 + $0x58] sm:$0xf]
    %v5284 = vld [vmem:[%s3 + $0x5c] sm:$0xf]
    %v5285 = vld [vmem:[%s3 + $0x60] sm:$0xf]
    %v5286 = vld [vmem:[%s3 + $0x64] sm:$0xf]
    %v5287 = vld [vmem:[%s3 + $0x68] sm:$0xf]
    %v5288 = vld [vmem:[%s3 + $0x6c] sm:$0xf]
    %v5289 = vld [vmem:[%s3 + $0x70] sm:$0xf]
    %v5290 = vld [vmem:[%s3 + $0x74] sm:$0xf]
    %v5291 = vld [vmem:[%s3 + $0x78] sm:$0xf]
    %v5292 = vld [vmem:[%s3 + $0x7c] sm:$0xf]
    %v5293 = vld [vmem:[%s3 + $0x80] sm:$0xf]
    %v5294 = vld [vmem:[%s3 + $0x84] sm:$0xf]
    %v5295 = vld [vmem:[%s3 + $0x88] sm:$0xf]
    %v5296 = vld [vmem:[%s3 + $0x8c] sm:$0xf]
    %v5297 = vld [vmem:[%s3 + $0x90] sm:$0xf]
    %v5298 = vld [vmem:[%s3 + $0x94] sm:$0xf]
    %v5299 = vld [vmem:[%s3 + $0x98] sm:$0xf]
    %v5300 = vld [vmem:[%s3 + $0x9c] sm:$0xf]
    %v5301 = vld [vmem:[%s3 + $0xa0] sm:$0xf]
    %v5302 = vld [vmem:[%s3 + $0xa4] sm:$0xf]
    %v5303 = vld [vmem:[%s3 + $0xa8] sm:$0xf]
    %v5304 = vld [vmem:[%s3 + $0xac] sm:$0xf]
    %v5305 = vld [vmem:[%s3 + $0xb0] sm:$0xf]
    %v5306 = vld [vmem:[%s3 + $0xb4] sm:$0xf]
    %v5307 = vld [vmem:[%s3 + $0xb8] sm:$0xf]
    %v5308 = vld [vmem:[%s3 + $0xbc] sm:$0xf]
    %v5309 = vld [vmem:[%s3 + $0xc0] sm:$0xf]
    %v5310 = vld [vmem:[%s3 + $0xc4] sm:$0xf]
    %v5311 = vld [vmem:[%s3 + $0xc8] sm:$0xf]
    %v5312 = vld [vmem:[%s3 + $0xcc] sm:$0xf]
    %v5313 = vld [vmem:[%s3 + $0xd0] sm:$0xf]
    %v5314 = vld [vmem:[%s3 + $0xd4] sm:$0xf]
    %v5315 = vld [vmem:[%s3 + $0xd8] sm:$0xf]
    %v5316 = vld [vmem:[%s3 + $0xdc] sm:$0xf]
    %v5317 = vld [vmem:[%s3 + $0xe0] sm:$0xf]
    %v5318 = vld [vmem:[%s3 + $0xe4] sm:$0xf]
    %v5319 = vld [vmem:[%s3 + $0xe8] sm:$0xf]
    %v5320 = vld [vmem:[%s3 + $0xec] sm:$0xf]
    %v5321 = vld [vmem:[%s3 + $0xf0] sm:$0xf]
    %v5322 = vld [vmem:[%s3 + $0xf4] sm:$0xf]
    %v5323 = vld [vmem:[%s3 + $0xf8] sm:$0xf]
    %v5324 = vld [vmem:[%s3 + $0xfc] sm:$0xf]
    %v5325 = vld [vmem:[%s3 + $0x100] sm:$0xf]
    %v5326 = vld [vmem:[%s3 + $0x104] sm:$0xf]
    %v5327 = vld [vmem:[%s3 + $0x108] sm:$0xf]
    %v5328 = vld [vmem:[%s3 + $0x10c] sm:$0xf]
    %v5329 = vld [vmem:[%s3 + $0x110] sm:$0xf]
    %v5330 = vld [vmem:[%s3 + $0x114] sm:$0xf]
    %v5331 = vld [vmem:[%s3 + $0x118] sm:$0xf]
    %v5332 = vld [vmem:[%s3 + $0x11c] sm:$0xf]
    %v5333 = vld [vmem:[%s4] sm:$0x1]
    %v5335 = vlaneseq
    %v5336 = vshrl.u32 %v5335, 7
    %v5337 = vsub.s32 0, %v5336
    %v5338 = vrot.slane %v5333, %v5337
    %v5412 = vunpack.c.l.b16 %v5261
    %v5413 = vunpack.c.l.b16 %v5262
    %v5414 = vunpack.c.l.b16 %v5263
    %v5415 = vunpack.c.l.b16 %v5264
    %v5416 = vunpack.c.l.b16 %v5265
    %v5417 = vunpack.c.l.b16 %v5266
    %v5418 = vunpack.c.l.b16 %v5267
    %v5419 = vunpack.c.l.b16 %v5268
    %v5420 = vunpack.c.l.b16 %v5269
    %v5421 = vunpack.c.l.b16 %v5270
    %v5422 = vunpack.c.l.b16 %v5271
    %v5423 = vunpack.c.l.b16 %v5272
    %v5424 = vunpack.c.l.b16 %v5273
    %v5425 = vunpack.c.l.b16 %v5274
    %v5426 = vunpack.c.l.b16 %v5275
    %v5427 = vunpack.c.l.b16 %v5276
    %v5428 = vunpack.c.l.b16 %v5277
    %v5429 = vunpack.c.l.b16 %v5278
    %v5430 = vunpack.c.l.b16 %v5279
    %v5431 = vunpack.c.l.b16 %v5280
    %v5432 = vunpack.c.l.b16 %v5281
    %v5433 = vunpack.c.l.b16 %v5282
    %v5434 = vunpack.c.l.b16 %v5283
    %v5435 = vunpack.c.l.b16 %v5284
    %v5436 = vunpack.c.l.b16 %v5285
    %v5437 = vunpack.c.l.b16 %v5286
    %v5438 = vunpack.c.l.b16 %v5287
    %v5439 = vunpack.c.l.b16 %v5288
    %v5440 = vunpack.c.l.b16 %v5289
    %v5441 = vunpack.c.l.b16 %v5290
    %v5442 = vunpack.c.l.b16 %v5291
    %v5443 = vunpack.c.l.b16 %v5292
    %v5444 = vunpack.c.l.b16 %v5293
    %v5445 = vunpack.c.l.b16 %v5294
    %v5446 = vunpack.c.l.b16 %v5295
    %v5447 = vunpack.c.l.b16 %v5296
    %v5448 = vunpack.c.l.b16 %v5297
    %v5449 = vunpack.c.l.b16 %v5298
    %v5450 = vunpack.c.l.b16 %v5299
    %v5451 = vunpack.c.l.b16 %v5300
    %v5452 = vunpack.c.l.b16 %v5301
    %v5453 = vunpack.c.l.b16 %v5302
    %v5454 = vunpack.c.l.b16 %v5303
    %v5455 = vunpack.c.l.b16 %v5304
    %v5456 = vunpack.c.l.b16 %v5305
    %v5457 = vunpack.c.l.b16 %v5306
    %v5458 = vunpack.c.l.b16 %v5307
    %v5459 = vunpack.c.l.b16 %v5308
    %v5460 = vunpack.c.l.b16 %v5309
    %v5461 = vunpack.c.l.b16 %v5310
    %v5462 = vunpack.c.l.b16 %v5311
    %v5463 = vunpack.c.l.b16 %v5312
    %v5464 = vunpack.c.l.b16 %v5313
    %v5465 = vunpack.c.l.b16 %v5314
    %v5466 = vunpack.c.l.b16 %v5315
    %v5467 = vunpack.c.l.b16 %v5316
    %v5468 = vunpack.c.l.b16 %v5317
    %v5469 = vunpack.c.l.b16 %v5318
    %v5470 = vunpack.c.l.b16 %v5319
    %v5471 = vunpack.c.l.b16 %v5320
    %v5472 = vunpack.c.l.b16 %v5321
    %v5473 = vunpack.c.l.b16 %v5322
    %v5474 = vunpack.c.l.b16 %v5323
    %v5475 = vunpack.c.l.b16 %v5324
    %v5476 = vunpack.c.l.b16 %v5325
    %v5477 = vunpack.c.l.b16 %v5326
    %v5478 = vunpack.c.l.b16 %v5327
    %v5479 = vunpack.c.l.b16 %v5328
    %v5480 = vunpack.c.l.b16 %v5329
    %v5481 = vunpack.c.l.b16 %v5330
    %v5482 = vunpack.c.l.b16 %v5331
    %v5483 = vunpack.c.l.b16 %v5332
    %v5484 = vpack.c.b16 %v5413, %v5412
    %v5485 = vpack.c.b16 %v5415, %v5414
    %v5486 = vpack.c.b16 %v5417, %v5416
    %v5487 = vpack.c.b16 %v5419, %v5418
    %v5488 = vpack.c.b16 %v5421, %v5420
    %v5489 = vpack.c.b16 %v5423, %v5422
    %v5490 = vpack.c.b16 %v5425, %v5424
    %v5491 = vpack.c.b16 %v5427, %v5426
    %v5492 = vpack.c.b16 %v5429, %v5428
    %v5493 = vpack.c.b16 %v5431, %v5430
    %v5494 = vpack.c.b16 %v5433, %v5432
    %v5495 = vpack.c.b16 %v5435, %v5434
    %v5496 = vpack.c.b16 %v5437, %v5436
    %v5497 = vpack.c.b16 %v5439, %v5438
    %v5498 = vpack.c.b16 %v5441, %v5440
    %v5499 = vpack.c.b16 %v5443, %v5442
    %v5500 = vpack.c.b16 %v5445, %v5444
    %v5501 = vpack.c.b16 %v5447, %v5446
    %v5502 = vpack.c.b16 %v5449, %v5448
    %v5503 = vpack.c.b16 %v5451, %v5450
    %v5504 = vpack.c.b16 %v5453, %v5452
    %v5505 = vpack.c.b16 %v5455, %v5454
    %v5506 = vpack.c.b16 %v5457, %v5456
    %v5507 = vpack.c.b16 %v5459, %v5458
    %v5508 = vpack.c.b16 %v5461, %v5460
    %v5509 = vpack.c.b16 %v5463, %v5462
    %v5510 = vpack.c.b16 %v5465, %v5464
    %v5511 = vpack.c.b16 %v5467, %v5466
    %v5512 = vpack.c.b16 %v5469, %v5468
    %v5513 = vpack.c.b16 %v5471, %v5470
    %v5514 = vpack.c.b16 %v5473, %v5472
    %v5515 = vpack.c.b16 %v5475, %v5474
    %v5516 = vpack.c.b16 %v5477, %v5476
    %v5517 = vpack.c.b16 %v5479, %v5478
    %v5518 = vpack.c.b16 %v5481, %v5480
    %v5519 = vpack.c.b16 %v5483, %v5482
    %vm5556 = vcmask 523264
    %v5558 = vsel %vm5556, %v5260, 0
    %5560 = vmatprep.subr.bf16.mxu0 0
    %5561 = vmatpush1.bf16.msra.mxu0 %v5491
    %5562 = vmatprep.subr.bf16.mxu0 0
    %5563 = vmatpush1.bf16.msra.mxu0 %v5490
    %5564 = vmatprep.subr.bf16.mxu0 0
    %5565 = vmatpush1.bf16.msra.mxu0 %v5489
    %5566 = vmatprep.subr.bf16.mxu0 0
    %5567 = vmatpush1.bf16.msra.mxu0 %v5488
    %5568 = vmatprep.subr.bf16.mxu0 0
    %5569 = vmatpush1.bf16.msra.mxu0 %v5487
    %5570 = vmatprep.subr.bf16.mxu0 0
    %5571 = vmatpush1.bf16.msra.mxu0 %v5486
    %5572 = vmatprep.subr.bf16.mxu0 0
    %5573 = vmatpush1.bf16.msra.mxu0 %v5485
    %5574 = vmatprep.subr.bf16.mxu0 0
    %5575 = vmatpush1.bf16.msra.mxu0 %v5484
    %5576 = vmatprep.subr.bf16.mxu0 0
    %5577 = vmatpush2.bf16.msra.mxu0 %v5499
    %5578 = vmatprep.subr.bf16.mxu0 0
    %5579 = vmatpush2.bf16.msra.mxu0 %v5498
    %5580 = vmatprep.subr.bf16.mxu0 0
    %5581 = vmatpush2.bf16.msra.mxu0 %v5497
    %5582 = vmatprep.subr.bf16.mxu0 0
    %5583 = vmatpush2.bf16.msra.mxu0 %v5496
    %5584 = vmatprep.subr.bf16.mxu0 0
    %5585 = vmatpush2.bf16.msra.mxu0 %v5495
    %5586 = vmatprep.subr.bf16.mxu0 0
    %5587 = vmatpush2.bf16.msra.mxu0 %v5494
    %5588 = vmatprep.subr.bf16.mxu0 0
    %5589 = vmatpush2.bf16.msra.mxu0 %v5493
    %5590 = vmatprep.subr.bf16.mxu0 0
    %5591 = vmatpush2.bf16.msra.mxu0 %v5492
    %5592 = vmatprep.mubr.bf16.mxu0 %v5257
    %5593 = vmatmul.mubr.bf16.gmra.mxu0 %v5256
    %v5594 = vpop.f32.mrf.mxu0
    %v5595 = vadd.f32 %v5338, %v5594
    %v5596 = vpop.f32.mrf.mxu0
    %v5597 = vpop.f32.mrf.mxu0
    %v5598 = vpop.f32.mrf.mxu0
    %5599 = vdwg.mxu0
    %5600 = vmatprep.subr.bf16.mxu0 0
    %5601 = vmatpush1.bf16.msra.mxu0 %v5507
    %5602 = vmatprep.subr.bf16.mxu0 0
    %5603 = vmatpush1.bf16.msra.mxu0 %v5506
    %5604 = vmatprep.subr.bf16.mxu0 0
    %5605 = vmatpush1.bf16.msra.mxu0 %v5505
    %5606 = vmatprep.subr.bf16.mxu0 0
    %5607 = vmatpush1.bf16.msra.mxu0 %v5504
    %5608 = vmatprep.subr.bf16.mxu0 0
    %5609 = vmatpush1.bf16.msra.mxu0 %v5503
    %5610 = vmatprep.subr.bf16.mxu0 0
    %5611 = vmatpush1.bf16.msra.mxu0 %v5502
    %5612 = vmatprep.subr.bf16.mxu0 0
    %5613 = vmatpush1.bf16.msra.mxu0 %v5501
    %5614 = vmatprep.subr.bf16.mxu0 0
    %5615 = vmatpush1.bf16.msra.mxu0 %v5500
    %5616 = vmatprep.subr.bf16.mxu0 0
    %5617 = vmatpush2.bf16.msra.mxu0 %v5515
    %5618 = vmatprep.subr.bf16.mxu0 0
    %5619 = vmatpush2.bf16.msra.mxu0 %v5514
    %5620 = vmatprep.subr.bf16.mxu0 0
    %5621 = vmatpush2.bf16.msra.mxu0 %v5513
    %5622 = vmatprep.subr.bf16.mxu0 0
    %5623 = vmatpush2.bf16.msra.mxu0 %v5512
    %5624 = vmatprep.subr.bf16.mxu0 0
    %5625 = vmatpush2.bf16.msra.mxu0 %v5511
    %5626 = vmatprep.subr.bf16.mxu0 0
    %5627 = vmatpush2.bf16.msra.mxu0 %v5510
    %5628 = vmatprep.subr.bf16.mxu0 0
    %5629 = vmatpush2.bf16.msra.mxu0 %v5509
    %5630 = vmatprep.subr.bf16.mxu0 0
    %5631 = vmatpush2.bf16.msra.mxu0 %v5508
    %5632 = vmatprep.mubr.bf16.mxu0 %v5259
    %5633 = vmatmul.mubr.bf16.gmra.mxu0 %v5258
    %v5634 = vpop.f32.mrf.mxu0
    %v5635 = vadd.f32 %v5595, %v5634
    %v5636 = vpop.f32.mrf.mxu0
    %v5637 = vpop.f32.mrf.mxu0
    %v5638 = vpop.f32.mrf.mxu0
    %5639 = vdwg.mxu0
    %5640 = vmatprep.subr.bf16.mxu0 0
    %5641 = vmatpush1.bf16.msra.mxu0 0
    %5642 = vmatprep.subr.bf16.mxu0 0
    %5643 = vmatpush1.bf16.msra.mxu0 0
    %5644 = vmatprep.subr.bf16.mxu0 0
    %5645 = vmatpush1.bf16.msra.mxu0 0
    %5646 = vmatprep.subr.bf16.mxu0 0
    %5647 = vmatpush1.bf16.msra.mxu0 0
    %5648 = vmatprep.subr.bf16.mxu0 0
    %5649 = vmatpush1.bf16.msra.mxu0 %v5519
    %5650 = vmatprep.subr.bf16.mxu0 0
    %5651 = vmatpush1.bf16.msra.mxu0 %v5518
    %5652 = vmatprep.subr.bf16.mxu0 0
    %5653 = vmatpush1.bf16.msra.mxu0 %v5517
    %5654 = vmatprep.subr.bf16.mxu0 0
    %5655 = vmatpush1.bf16.msra.mxu0 %v5516
    %5656 = vmatprep.subr.bf16.mxu0 0
    %5657 = vmatpush2.bf16.msra.mxu0 0
    %5658 = vmatprep.subr.bf16.mxu0 0
    %5659 = vmatpush2.bf16.msra.mxu0 0
    %5660 = vmatprep.subr.bf16.mxu0 0
    %5661 = vmatpush2.bf16.msra.mxu0 0
    %5662 = vmatprep.subr.bf16.mxu0 0
    %5663 = vmatpush2.bf16.msra.mxu0 0
    %5664 = vmatprep.subr.bf16.mxu0 0
    %5665 = vmatpush2.bf16.msra.mxu0 0
    %5666 = vmatprep.subr.bf16.mxu0 0
    %5667 = vmatpush2.bf16.msra.mxu0 0
    %5668 = vmatprep.subr.bf16.mxu0 0
    %5669 = vmatpush2.bf16.msra.mxu0 0
    %5670 = vmatprep.subr.bf16.mxu0 0
    %5671 = vmatpush2.bf16.msra.mxu0 0
    %5672 = vmatprep.mubr.bf16.mxu0 0
    %5673 = vmatmul.mubr.bf16.gmra.mxu0 %v5558
    %v5674 = vpop.f32.mrf.mxu0
    %v5675 = vadd.f32 %v5635, %v5674
    %v5676 = vpop.f32.mrf.mxu0
    %v5677 = vpop.f32.mrf.mxu0
    %v5678 = vpop.f32.mrf.mxu0
    %5679 = vdwg.mxu0
    %v5680 = vmax.f32 %v5675, 0.0
    %v5681 = vpack.c.bf16 %v5680, %v5680
    %v5682 = vld [vmem:[%s5] sm:$0xff]
    %v5683 = vld [vmem:[%s5 + $0x8] sm:$0xff]
    %v5684 = vld [vmem:[%s5 + $0x10] sm:$0xff]
    %v5685 = vld [vmem:[%s5 + $0x18] sm:$0xff]
    %v5686 = vld [vmem:[%s5 + $0x20] sm:$0xff]
    %v5687 = vld [vmem:[%s5 + $0x28] sm:$0xff]
    %v5688 = vld [vmem:[%s5 + $0x30] sm:$0xff]
    %v5689 = vld [vmem:[%s5 + $0x38] sm:$0xff]
    %v5690 = vld [vmem:[%s6] sm:$0x3]
    %v5692 = vlaneseq
    %v5693 = vshrl.u32 %v5692, 7
    %v5694 = vsub.s32 0, %v5693
    %v5695 = vrot.slane %v5690, %v5694
    %v5696 = vlaneseq
    %v5697 = vshrl.u32 %v5696, 7
    %v5698 = vsub.s32 1, %v5697
    %v5699 = vrot.slane %v5690, %v5698
    %v5710 = vunpack.c.l.b16 %v5682
    %v5711 = vunpack.c.h.b16 %v5682
    %v5712 = vunpack.c.l.b16 %v5683
    %v5713 = vunpack.c.h.b16 %v5683
    %v5714 = vunpack.c.l.b16 %v5684
    %v5715 = vunpack.c.h.b16 %v5684
    %v5716 = vunpack.c.l.b16 %v5685
    %v5717 = vunpack.c.h.b16 %v5685
    %v5718 = vunpack.c.l.b16 %v5686
    %v5719 = vunpack.c.h.b16 %v5686
    %v5720 = vunpack.c.l.b16 %v5687
    %v5721 = vunpack.c.h.b16 %v5687
    %v5722 = vunpack.c.l.b16 %v5688
    %v5723 = vunpack.c.h.b16 %v5688
    %v5724 = vunpack.c.l.b16 %v5689
    %v5725 = vunpack.c.h.b16 %v5689
    %v5726 = vpack.c.b16 %v5712, %v5710
    %v5727 = vpack.c.b16 %v5713, %v5711
    %v5728 = vpack.c.b16 %v5716, %v5714
    %v5729 = vpack.c.b16 %v5717, %v5715
    %v5730 = vpack.c.b16 %v5720, %v5718
    %v5731 = vpack.c.b16 %v5721, %v5719
    %v5732 = vpack.c.b16 %v5724, %v5722
    %v5733 = vpack.c.b16 %v5725, %v5723
    %v5743 = vsel %vm5556, %v5681, 0
    %5745 = vmatprep.subr.bf16.mxu0 0
    %5746 = vmatpush1.bf16.msra.mxu0 0
    %5747 = vmatprep.subr.bf16.mxu0 0
    %5748 = vmatpush1.bf16.msra.mxu0 0
    %5749 = vmatprep.subr.bf16.mxu0 0
    %5750 = vmatpush1.bf16.msra.mxu0 0
    %5751 = vmatprep.subr.bf16.mxu0 0
    %5752 = vmatpush1.bf16.msra.mxu0 0
    %5753 = vmatprep.subr.bf16.mxu0 %v5733
    %5754 = vmatpush1.bf16.msra.mxu0 %v5732
    %5755 = vmatprep.subr.bf16.mxu0 %v5731
    %5756 = vmatpush1.bf16.msra.mxu0 %v5730
    %5757 = vmatprep.subr.bf16.mxu0 %v5729
    %5758 = vmatpush1.bf16.msra.mxu0 %v5728
    %5759 = vmatprep.subr.bf16.mxu0 %v5727
    %5760 = vmatpush1.bf16.msra.mxu0 %v5726
    %5761 = vmatprep.subr.bf16.mxu0 0
    %5762 = vmatpush2.bf16.msra.mxu0 0
    %5763 = vmatprep.subr.bf16.mxu0 0
    %5764 = vmatpush2.bf16.msra.mxu0 0
    %5765 = vmatprep.subr.bf16.mxu0 0
    %5766 = vmatpush2.bf16.msra.mxu0 0
    %5767 = vmatprep.subr.bf16.mxu0 0
    %5768 = vmatpush2.bf16.msra.mxu0 0
    %5769 = vmatprep.subr.bf16.mxu0 0
    %5770 = vmatpush2.bf16.msra.mxu0 0
    %5771 = vmatprep.subr.bf16.mxu0 0
    %5772 = vmatpush2.bf16.msra.mxu0 0
    %5773 = vmatprep.subr.bf16.mxu0 0
    %5774 = vmatpush2.bf16.msra.mxu0 0
    %5775 = vmatprep.subr.bf16.mxu0 0
    %5776 = vmatpush2.bf16.msra.mxu0 0
    %5777 = vmatprep.mubr.bf16.mxu0 0
    %5778 = vmatmul.mubr.bf16.gmra.mxu0 %v5743
    %v5779 = vpop.f32.mrf.mxu0
    %v5780 = vadd.f32 %v5695, %v5779
    %v5781 = vpop.f32.mrf.mxu0
    %v5782 = vadd.f32 %v5699, %v5781
    %v5783 = vpop.f32.mrf.mxu0
    %v5784 = vpop.f32.mrf.mxu0
    %5785 = vdwg.mxu0
    %v5786 = vmax.f32 %v5780, 0.0
    %v5787 = vmax.f32 %v5782, 0.0
    %v5788 = vld [vmem:[%s7] sm:$0xff]
    %v5789 = vld [vmem:[%s7 + $0x8] sm:$0xff]
    %v5790 = vld [vmem:[%s7 + $0x10] sm:$0xff]
    %v5791 = vld [vmem:[%s7 + $0x18] sm:$0xff]
    %v5792 = vld [vmem:[%s7 + $0x20] sm:$0xff]
    %v5793 = vld [vmem:[%s7 + $0x28] sm:$0xff]
    %v5794 = vld [vmem:[%s7 + $0x30] sm:$0xff]
    %v5795 = vld [vmem:[%s7 + $0x38] sm:$0xff]
    %v5796 = vld [vmem:[%s7 + $0x40] sm:$0xff]
    %v5797 = vld [vmem:[%s7 + $0x48] sm:$0xff]
    %v5798 = vld [vmem:[%s7 + $0x50] sm:$0xff]
    %v5799 = vld [vmem:[%s7 + $0x58] sm:$0xff]
    %v5800 = vld [vmem:[%s7 + $0x60] sm:$0xff]
    %v5801 = vld [vmem:[%s7 + $0x68] sm:$0xff]
    %v5802 = vld [vmem:[%s7 + $0x70] sm:$0xff]
    %v5803 = vld [vmem:[%s7 + $0x78] sm:$0xff]
    %v5804 = vld [vmem:[%s7 + $0x80] sm:$0xff]
    %v5805 = vld [vmem:[%s7 + $0x88] sm:$0xff]
    %v5806 = vld [vmem:[%s7 + $0x90] sm:$0xff]
    %v5807 = vld [vmem:[%s7 + $0x98] sm:$0xff]
    %v5808 = vld [vmem:[%s7 + $0xa0] sm:$0xff]
    %v5809 = vld [vmem:[%s7 + $0xa8] sm:$0xff]
    %v5810 = vld [vmem:[%s7 + $0xb0] sm:$0xff]
    %v5811 = vld [vmem:[%s7 + $0xb8] sm:$0xff]
    %v5812 = vld [vmem:[%s7 + $0xc0] sm:$0xff]
    %v5813 = vld [vmem:[%s7 + $0xc8] sm:$0xff]
    %v5814 = vld [vmem:[%s7 + $0xd0] sm:$0xff]
    %v5815 = vld [vmem:[%s7 + $0xd8] sm:$0xff]
    %v5816 = vld [vmem:[%s7 + $0xe0] sm:$0xff]
    %v5817 = vld [vmem:[%s7 + $0xe8] sm:$0xff]
    %v5818 = vld [vmem:[%s7 + $0xf0] sm:$0xff]
    %v5819 = vld [vmem:[%s7 + $0xf8] sm:$0xff]
    %v5820 = vld [vmem:[%s8] sm:$0x1]
    %v5822 = vlaneseq
    %v5823 = vshrl.u32 %v5822, 7
    %v5824 = vsub.s32 0, %v5823
    %v5825 = vrot.slane %v5820, %v5824
    %5827 = vmatprep.subr.mxu0 0.0
    %5828 = vmatpush1.msra.mxu0 %v5803
    %5829 = vmatprep.subr.mxu0 0.0
    %5830 = vmatpush1.msra.mxu0 %v5802
    %5831 = vmatprep.subr.mxu0 0.0
    %5832 = vmatpush1.msra.mxu0 %v5801
    %5833 = vmatprep.subr.mxu0 0.0
    %5834 = vmatpush1.msra.mxu0 %v5800
    %5835 = vmatprep.subr.mxu0 0.0
    %5836 = vmatpush1.msra.mxu0 %v5799
    %5837 = vmatprep.subr.mxu0 0.0
    %5838 = vmatpush1.msra.mxu0 %v5798
    %5839 = vmatprep.subr.mxu0 0.0
    %5840 = vmatpush1.msra.mxu0 %v5797
    %5841 = vmatprep.subr.mxu0 0.0
    %5842 = vmatpush1.msra.mxu0 %v5796
    %5843 = vmatprep.subr.mxu0 0.0
    %5844 = vmatpush1.msra.mxu0 %v5795
    %5845 = vmatprep.subr.mxu0 0.0
    %5846 = vmatpush1.msra.mxu0 %v5794
    %5847 = vmatprep.subr.mxu0 0.0
    %5848 = vmatpush1.msra.mxu0 %v5793
    %5849 = vmatprep.subr.mxu0 0.0
    %5850 = vmatpush1.msra.mxu0 %v5792
    %5851 = vmatprep.subr.mxu0 0.0
    %5852 = vmatpush1.msra.mxu0 %v5791
    %5853 = vmatprep.subr.mxu0 0.0
    %5854 = vmatpush1.msra.mxu0 %v5790
    %5855 = vmatprep.subr.mxu0 0.0
    %5856 = vmatpush1.msra.mxu0 %v5789
    %5857 = vmatprep.subr.mxu0 0.0
    %5858 = vmatpush1.msra.mxu0 %v5788
    %5859 = vmatprep.subr.mxu0 0.0
    %5860 = vmatpush2.msra.mxu0 %v5819
    %5861 = vmatprep.subr.mxu0 0.0
    %5862 = vmatpush2.msra.mxu0 %v5818
    %5863 = vmatprep.subr.mxu0 0.0
    %5864 = vmatpush2.msra.mxu0 %v5817
    %5865 = vmatprep.subr.mxu0 0.0
    %5866 = vmatpush2.msra.mxu0 %v5816
    %5867 = vmatprep.subr.mxu0 0.0
    %5868 = vmatpush2.msra.mxu0 %v5815
    %5869 = vmatprep.subr.mxu0 0.0
    %5870 = vmatpush2.msra.mxu0 %v5814
    %5871 = vmatprep.subr.mxu0 0.0
    %5872 = vmatpush2.msra.mxu0 %v5813
    %5873 = vmatprep.subr.mxu0 0.0
    %5874 = vmatpush2.msra.mxu0 %v5812
    %5875 = vmatprep.subr.mxu0 0.0
    %5876 = vmatpush2.msra.mxu0 %v5811
    %5877 = vmatprep.subr.mxu0 0.0
    %5878 = vmatpush2.msra.mxu0 %v5810
    %5879 = vmatprep.subr.mxu0 0.0
    %5880 = vmatpush2.msra.mxu0 %v5809
    %5881 = vmatprep.subr.mxu0 0.0
    %5882 = vmatpush2.msra.mxu0 %v5808
    %5883 = vmatprep.subr.mxu0 0.0
    %5884 = vmatpush2.msra.mxu0 %v5807
    %5885 = vmatprep.subr.mxu0 0.0
    %5886 = vmatpush2.msra.mxu0 %v5806
    %5887 = vmatprep.subr.mxu0 0.0
    %5888 = vmatpush2.msra.mxu0 %v5805
    %5889 = vmatprep.subr.mxu0 0.0
    %5890 = vmatpush2.msra.mxu0 %v5804
    %5891 = vmatprep.mubr.f32.mxu0 %v5787
    %5892 = vmatmul.mubr.f32.gmra.mxu0 %v5786
    %v5893 = vpop.f32.mrf.mxu0
    %v5894 = vadd.f32 %v5825, %v5893
    %v5895 = vpop.f32.mrf.mxu0
    %5896 = vdwg.mxu0
    %vm5897 = vcmask 1041408
    %v5898 = vsel %vm5897, %v5894, -inf
    %5899 = vmax.xlane.f32.xlu0 %v5898
    %v5900 = vpop.xlane.xlu0 %5899
    %v5901 = vsub.f32 %v5894, %v5900
    %v5902 = vmul.f32 %v5901, 1.442695
    %v5903 = vpow.pop %v5902
    %v5904 = vsel %vm5897, %v5903, 0.0
    %5905 = vadd.xlane.f32.xlu0 %v5904
    %v5906 = vpop.xlane.xlu0 %5905
    %v5907 = vrcp.pop %v5906
    %v5908 = vmul.f32 %v5903, %v5907
    %5909 = vst [vmem:[#allocation2] sm:$0x3] %v5908
    // Predicated region
    $region38: #{convolutional_actor_forward.1} parent=1 // pred_check
      _
    $region39: #{convolutional_actor_forward.1} parent=1 // pred_check_branch
      %5911 = sbr.rel (0) target = $region41
    $region40: #{convolutional_actor_forward.1} parent=1 // pred_region
      %s5913 = ssub.s32 32, 32
      %5914 = vsyncadd [#allocation3], %s5913
      %s5916 = sshll.u32 [#allocation2], 4
      %s5917 = int_to_ptr.vmem [resolvable:$true] %s5916
      %5919 = dma.vmem_to_hbm [thread:$0]  %s5917, 32, %s9, [#allocation3]
    $region41: #{convolutional_actor_forward.1} parent=1 // pred_fallthru
      _
    // Predicated region
    $region42: #{convolutional_actor_forward.1} parent=1 // pred_check
      _
    $region43: #{convolutional_actor_forward.1} parent=1 // pred_check_branch
      %5921 = sbr.rel (0) target = $region45
    $region44: #{convolutional_actor_forward.1} parent=1 // pred_region
      %5922 = dma.done [#allocation3], 32
    $region45: #{convolutional_actor_forward.1} parent=1 // pred_fallthru
      _
    %5923 = vsyncpa [#allocation3], 1

</llo_original>
